<compile_context>
chip_gen: v5e
topology: v5e:2x2
jax: 0.10.0
libtpu: 0.0.40
codegen_flags: <defaults>
</compile_context>

<pallas_src>
import functools

import jax
import jax.numpy as jnp
from jax.experimental import pallas as pl
from jax.experimental.pallas import tpu as pltpu

EPS = 1e-5            # nn.BatchNorm2d default
LANES = 128
MAX_CHUNK = 128       # rows of f32 acc live per inner matmul step (<=16 vregs @ Ct=128)
MAX_COUT_TILE = 256   # feed the 256-wide MXU (v6e/v7x) when Cout allows


# ------------------------------ small helpers ------------------------------

def _cdiv(a, b):
    return -(-a // b)


def _round_up(x, m):
    return _cdiv(x, m) * m


def _pad_to(a, shape):
    return jnp.pad(a, [(0, s - d) for d, s in zip(a.shape, shape)])


def _m_chunking(m):
    """(chunk, Mp): Mp = n*chunk, chunk <= 128, chunk % 16 == 0 (bf16 sublane tile)."""
    chunk = min(MAX_CHUNK, _round_up(m, 16))
    return chunk, _round_up(m, chunk)


# ----------------------------- Pallas kernels ------------------------------

def fused_conv_bn_relu_kernel(p_ref, w_ref, g_ref, b_ref, o_ref, acc_ref,
                              *, inv_m, n_chunks, chunk):
    """One Cout tile: conv matmul (M-chunked), batch stats, BN+ReLU epilogue.

    p_ref:   (Mp, Kp) bf16 im2col patches (rows >= M_true are zero padding)
    w_ref:   (Kp, Ct) bf16 weight tile
    g_ref/b_ref: (1, Ct) f32 gamma / beta
    o_ref:   (Mp, Ct) bf16 output
    acc_ref: (Mp, Ct) f32 VMEM scratch holding the conv result between passes
    """
    ct = o_ref.shape[1]
    ssum = jnp.zeros((1, ct), jnp.float32)
    ssq = jnp.zeros((1, ct), jnp.float32)

    # Pass 1: chunked MXU matmul into VMEM scratch + per-channel sum / sum-sq.
    for i in range(n_chunks):
        lo, hi = i * chunk, (i + 1) * chunk
        a = jnp.dot(p_ref[lo:hi, :], w_ref[...],
                    preferred_element_type=jnp.float32)
        acc_ref[lo:hi, :] = a
        ssum = ssum + jnp.sum(a, axis=0, keepdims=True)
        ssq = ssq + jnp.sum(a * a, axis=0, keepdims=True)

    # Training-mode BatchNorm (biased variance, single pass E[x^2] - mean^2).
    # Zero-padded rows contribute 0 to both sums; inv_m uses the true M.
    mean = ssum * inv_m
    var = jnp.maximum(ssq * inv_m - mean * mean, 0.0)
    scale = g_ref[...] * jax.lax.rsqrt(var + EPS)
    shift = b_ref[...] - mean * scale

    # Pass 2: fused FMA + ReLU epilogue from VMEM scratch, lane-dense bf16 store.
    for i in range(n_chunks):
        lo, hi = i * chunk, (i + 1) * chunk
        o_ref[lo:hi, :] = jnp.maximum(
            acc_ref[lo:hi, :] * scale + shift, 0.0).astype(o_ref.dtype)


def final_conv_sigmoid_kernel(p_ref, w_ref, b_ref, o_ref, *, n_kc, kc):
    """Conv(K -> 1) + Sigmoid as a K-chunked VPU dot (no 128x-padded MXU weight).

    p_ref: (Mp, Kp) bf16, w_ref: (1, Kp) bf16, b_ref: (1, 1) f32, o_ref: (Mp, 1) f32
    """
    mp = o_ref.shape[0]
    acc = jnp.zeros((mp, 1), jnp.float32)
    for i in range(n_kc):
        lo, hi = i * kc, (i + 1) * kc
        pc = p_ref[:, lo:hi].astype(jnp.float32)
        wc = w_ref[:, lo:hi].astype(jnp.float32)
        acc = acc + jnp.sum(pc * wc, axis=1, keepdims=True)
    o_ref[...] = jax.nn.sigmoid(acc + b_ref[...])


# --------------------------- pallas_call wrappers ---------------------------

def fused_conv_bn_relu_call(patches, w_mat, gamma, beta, *, chunk, m_true):
    Mp, Kp = patches.shape
    Cp = w_mat.shape[1]
    ct = min(Cp, MAX_COUT_TILE)
    nc = Cp // ct
    n_chunks = Mp // chunk
    kern = functools.partial(fused_conv_bn_relu_kernel,
                             inv_m=1.0 / float(m_true),
                             n_chunks=n_chunks, chunk=chunk)
    cost = pl.CostEstimate(
        flops=2 * Mp * Kp * Cp + 4 * Mp * Cp,
        transcendentals=Cp,
        bytes_accessed=(Mp * Kp + Kp * Cp + Mp * Cp) * 2 + 2 * Cp * 4)
    return pl.pallas_call(
        kern,
        out_shape=jax.ShapeDtypeStruct((Mp, Cp), jnp.bfloat16),
        grid_spec=pltpu.PrefetchScalarGridSpec(
            num_scalar_prefetch=0,
            grid=(nc,),
            in_specs=[pl.BlockSpec((Mp, Kp), lambda j: (0, 0)),
                      pl.BlockSpec((Kp, ct), lambda j: (0, j)),
                      pl.BlockSpec((1, ct), lambda j: (0, j)),
                      pl.BlockSpec((1, ct), lambda j: (0, j))],
            out_specs=pl.BlockSpec((Mp, ct), lambda j: (0, j)),
            scratch_shapes=[pltpu.VMEM((Mp, ct), jnp.float32)]),
        compiler_params=pltpu.CompilerParams(
            dimension_semantics=("parallel",)),
        cost_estimate=cost,
    )(patches, w_mat, gamma, beta)


def final_conv_sigmoid_call(patches, w_row, bias):
    Mp, Kp = patches.shape
    kc = 512 if Kp % 512 == 0 else LANES
    kern = functools.partial(final_conv_sigmoid_kernel, n_kc=Kp // kc, kc=kc)
    cost = pl.CostEstimate(flops=2 * Mp * Kp, transcendentals=Mp,
                           bytes_accessed=(Mp * Kp + Kp) * 2 + Mp * 4)
    return pl.pallas_call(
        kern,
        out_shape=jax.ShapeDtypeStruct((Mp, 1), jnp.float32),
        grid_spec=pltpu.PrefetchScalarGridSpec(
            num_scalar_prefetch=0,
            grid=(1,),
            in_specs=[pl.BlockSpec((Mp, Kp), lambda i: (0, 0)),
                      pl.BlockSpec((1, Kp), lambda i: (0, 0)),
                      pl.BlockSpec((1, 1), lambda i: (0, 0))],
            out_specs=pl.BlockSpec((Mp, 1), lambda i: (0, 0))),
        compiler_params=pltpu.CompilerParams(
            dimension_semantics=("arbitrary",)),
        cost_estimate=cost,
    )(patches, w_row, bias)


# ------------------------------- JAX glue ----------------------------------

def im2col_nhwc(x, kh, kw, stride, pad):
    """x: (N, H, W, C) -> (N*Ho*Wo, kh*kw*C), feature order (kh, kw, C)."""
    if pad > 0:
        x = jnp.pad(x, ((0, 0), (pad, pad), (pad, pad), (0, 0)))
    N, H, W, C = x.shape
    Ho = (H - kh) // stride + 1
    Wo = (W - kw) // stride + 1
    cols = []
    for i in range(kh):
        for j in range(kw):
            cols.append(x[:, i:i + stride * Ho:stride, j:j + stride * Wo:stride, :])
    p = jnp.stack(cols, axis=3)                       # (N, Ho, Wo, kh*kw, C)
    return p.reshape(N * Ho * Wo, kh * kw * C), Ho, Wo


def _weight_matrix(w, c_act):
    """(Cout, Cin, kh, kw) torch-layout weight -> (kh*kw*c_act, Cout) f32,
    with Cin zero-padded to the (lane-padded) activation channel count."""
    cout, cin, kh, kw = w.shape
    wm = jnp.transpose(w, (2, 3, 1, 0))               # (kh, kw, Cin, Cout)
    wm = jnp.pad(wm, ((0, 0), (0, 0), (0, c_act - cin), (0, 0)))
    return wm.reshape(kh * kw * c_act, cout)


def conv_bn_relu_layer(x, w, gamma, beta, kh, kw, stride, pad):
    """x: NHWC bf16 (channels possibly zero-padded) -> NHWC bf16, channels padded
    to a multiple of 128 (padded channels are exact zeros)."""
    N, c_act, cout = x.shape[0], x.shape[-1], w.shape[0]
    patches, Ho, Wo = im2col_nhwc(x, kh, kw, stride, pad)
    M, K = patches.shape
    Kp, Cp = _round_up(K, LANES), _round_up(cout, LANES)
    chunk, Mp = _m_chunking(M)

    patches = _pad_to(patches, (Mp, Kp)).astype(jnp.bfloat16)
    wm = _pad_to(_weight_matrix(w, c_act), (Kp, Cp)).astype(jnp.bfloat16)
    # Conv bias omitted: exactly cancelled by training-mode BatchNorm mean subtraction.
    g = _pad_to(gamma.reshape(1, cout).astype(jnp.float32), (1, Cp))
    b = _pad_to(beta.reshape(1, cout).astype(jnp.float32), (1, Cp))

    out = fused_conv_bn_relu_call(patches, wm, g, b, chunk=chunk, m_true=M)
    return out[:M].reshape(N, Ho, Wo, Cp)


def conv_sigmoid_layer(x, w, bias, kh, kw, stride):
    N, c_act = x.shape[0], x.shape[-1]
    patches, Ho, Wo = im2col_nhwc(x, kh, kw, stride, 0)
    M, K = patches.shape
    Kp, Mp = _round_up(K, LANES), _round_up(M, 16)

    patches = _pad_to(patches, (Mp, Kp)).astype(jnp.bfloat16)
    w_row = _pad_to(_weight_matrix(w, c_act).T, (1, Kp)).astype(jnp.bfloat16)
    b = bias.reshape(1, 1).astype(jnp.float32)

    y = final_conv_sigmoid_call(patches, w_row, b)    # (Mp, 1) f32
    return y[:M].reshape(N, Ho, Wo, 1)


def init_params(key):
    """Deterministic synthetic params matching the module's layer shapes."""
    layer_cfg = [
        dict(cin=3,   cout=64,  k=4),
        dict(cin=64,  cout=128, k=3),
        dict(cin=128, cout=256, k=2),
        dict(cin=256, cout=1,   k=4),
    ]
    params = []
    for cfg in layer_cfg:
        key, kw_, kb_ = jax.random.split(key, 3)
        w = 0.02 * jax.random.normal(
            kw_, (cfg["cout"], cfg["cin"], cfg["k"], cfg["k"]), dtype=jnp.float32)
        b = 0.01 * jax.random.normal(kb_, (cfg["cout"],), dtype=jnp.float32)
        p = {"w": w, "b": b}
        if cfg["cout"] != 1:  # BN layers (PyTorch default init: gamma=1, beta=0)
            p["gamma"] = jnp.ones((cfg["cout"],), dtype=jnp.float32)
            p["beta"] = jnp.zeros((cfg["cout"],), dtype=jnp.float32)
        params.append(p)
    return params


@jax.jit
def discriminator_forward(x, params):
    # NCHW f32 -> NHWC bf16 once; stay NHWC / bf16 between layers.
    x = jnp.transpose(x, (0, 2, 3, 1)).astype(jnp.bfloat16)
    p0, p1, p2, p3 = params
    # Conv(3->64, 4x4, s2, p2) + BN + ReLU
    x = conv_bn_relu_layer(x, p0["w"], p0["gamma"], p0["beta"], 4, 4, 2, 2)
    # Conv(64->128, 3x3, s2, p0) + BN + ReLU
    x = conv_bn_relu_layer(x, p1["w"], p1["gamma"], p1["beta"], 3, 3, 2, 0)
    # Conv(128->256, 2x2, s2, p0) + BN + ReLU
    x = conv_bn_relu_layer(x, p2["w"], p2["gamma"], p2["beta"], 2, 2, 2, 0)
    # Conv(256->1, 4x4, s1, p0) + Sigmoid
    y = conv_sigmoid_layer(x, p3["w"], p3["b"], 4, 4, 1)      # (N, 1, 1, 1) NHWC
    return jnp.transpose(y, (0, 3, 1, 2))                     # back to NCHW


if __name__ == "__main__":
    key = jax.random.PRNGKey(0)
    key, kx = jax.random.split(key)
    # 3-channel 32x32 input -> (N, 1, 1, 1) output, matching the module's conv chain.
    x = jax.random.normal(kx, (2, 3, 32, 32), dtype=jnp.float32)
    params = init_params(key)

    out = discriminator_forward(x, params)
    out = jax.block_until_ready(out)
    assert out.shape == (2, 1, 1, 1), out.shape
    assert bool(jnp.all((out >= 0.0) & (out <= 1.0)))
    assert bool(jnp.all(jnp.isfinite(out)))
    print("KERNEL_OK")
</pallas_src>

<mosaic_0001>
module attributes {stable_mosaic.version = 11 : i64} {
  func.func @fused_conv_bn_relu_kernel(%arg0: i32, %arg1: memref<640x128xbf16, #tpu.memory_space<vmem>>, %arg2: memref<128x128xbf16, #tpu.memory_space<vmem>>, %arg3: memref<1x128xf32, #tpu.memory_space<vmem>>, %arg4: memref<1x128xf32, #tpu.memory_space<vmem>>, %arg5: memref<640x128xbf16, #tpu.memory_space<vmem>>, %arg6: memref<640x128xf32, #tpu.memory_space<vmem>>) attributes {dimension_semantics = [#tpu.dimension_semantics<parallel>], iteration_bounds = array<i64: 1>, scalar_prefetch = 0 : i64, scratch_operands = 1 : i64, tpu.core_type = #tpu.core_type<tc>, window_params = [{pipeline_mode = #tpu.pipeline_mode<synchronous>, transform_indices = @transform_0, window_bounds = array<i64: 640, 128>}, {transform_indices = @transform_1, window_bounds = array<i64: 128, 128>}, {transform_indices = @transform_2, window_bounds = array<i64: 1, 128>}, {transform_indices = @transform_3, window_bounds = array<i64: 1, 128>}, {transform_indices = @transform_4, window_bounds = array<i64: 640, 128>}]} {
    %cst = arith.constant 0.000000e+00 : f32
    %0 = vector.broadcast %cst : f32 to vector<1x128xf32>
    %cst_0 = arith.constant 0.000000e+00 : f32
    %1 = vector.broadcast %cst_0 : f32 to vector<1x128xf32>
    %c0 = arith.constant 0 : index
    %c0_1 = arith.constant 0 : index
    %2 = vector.load %arg1[%c0, %c0_1] : memref<640x128xbf16, #tpu.memory_space<vmem>>, vector<128x128xbf16>
    %c0_2 = arith.constant 0 : index
    %c0_3 = arith.constant 0 : index
    %3 = vector.load %arg2[%c0_2, %c0_3] : memref<128x128xbf16, #tpu.memory_space<vmem>>, vector<128x128xbf16>
    %cst_4 = arith.constant dense<0.000000e+00> : vector<128x128xf32>
    %4 = tpu.matmul %2, %3, %cst_4 {dimension_numbers = #tpu.dot_dimension_numbers<[1], [0], [0], [1], [0, 0, 1, 1], [], []>} : vector<128x128xbf16>, vector<128x128xbf16>, vector<128x128xf32> -> vector<128x128xf32>
    %c0_5 = arith.constant 0 : index
    %c0_6 = arith.constant 0 : index
    %5 = vector.load %arg6[%c0_5, %c0_6] : memref<640x128xf32, #tpu.memory_space<vmem>>, vector<128x128xf32>
    tpu.vector_store %arg6[%c0_5, %c0_6], %4 {strides = array<i32>} : memref<640x128xf32, #tpu.memory_space<vmem>>, vector<128x128xf32>,
    %cst_7 = arith.constant dense<0.000000e+00> : vector<128xf32>
    %6 = vector.multi_reduction <add>, %4, %cst_7 [0] : vector<128x128xf32> to vector<128xf32>
    %7 = vector.shape_cast %6 : vector<128xf32> to vector<1x128xf32>
    %8 = arith.addf %0, %7 : vector<1x128xf32>
    %9 = arith.mulf %4, %4 : vector<128x128xf32>
    %cst_8 = arith.constant dense<0.000000e+00> : vector<128xf32>
    %10 = vector.multi_reduction <add>, %9, %cst_8 [0] : vector<128x128xf32> to vector<128xf32>
    %11 = vector.shape_cast %10 : vector<128xf32> to vector<1x128xf32>
    %12 = arith.addf %1, %11 : vector<1x128xf32>
    %c128 = arith.constant 128 : index
    %c0_9 = arith.constant 0 : index
    %13 = vector.load %arg1[%c128, %c0_9] : memref<640x128xbf16, #tpu.memory_space<vmem>>, vector<128x128xbf16>
    %c0_10 = arith.constant 0 : index
    %c0_11 = arith.constant 0 : index
    %14 = vector.load %arg2[%c0_10, %c0_11] : memref<128x128xbf16, #tpu.memory_space<vmem>>, vector<128x128xbf16>
    %cst_12 = arith.constant dense<0.000000e+00> : vector<128x128xf32>
    %15 = tpu.matmul %13, %14, %cst_12 {dimension_numbers = #tpu.dot_dimension_numbers<[1], [0], [0], [1], [0, 0, 1, 1], [], []>} : vector<128x128xbf16>, vector<128x128xbf16>, vector<128x128xf32> -> vector<128x128xf32>
    %c128_13 = arith.constant 128 : index
    %c0_14 = arith.constant 0 : index
    %16 = vector.load %arg6[%c128_13, %c0_14] : memref<640x128xf32, #tpu.memory_space<vmem>>, vector<128x128xf32>
    tpu.vector_store %arg6[%c128_13, %c0_14], %15 {strides = array<i32>} : memref<640x128xf32, #tpu.memory_space<vmem>>, vector<128x128xf32>,
    %cst_15 = arith.constant dense<0.000000e+00> : vector<128xf32>
    %17 = vector.multi_reduction <add>, %15, %cst_15 [0] : vector<128x128xf32> to vector<128xf32>
    %18 = vector.shape_cast %17 : vector<128xf32> to vector<1x128xf32>
    %19 = arith.addf %8, %18 : vector<1x128xf32>
    %20 = arith.mulf %15, %15 : vector<128x128xf32>
    %cst_16 = arith.constant dense<0.000000e+00> : vector<128xf32>
    %21 = vector.multi_reduction <add>, %20, %cst_16 [0] : vector<128x128xf32> to vector<128xf32>
    %22 = vector.shape_cast %21 : vector<128xf32> to vector<1x128xf32>
    %23 = arith.addf %12, %22 : vector<1x128xf32>
    %c256 = arith.constant 256 : index
    %c0_17 = arith.constant 0 : index
    %24 = vector.load %arg1[%c256, %c0_17] : memref<640x128xbf16, #tpu.memory_space<vmem>>, vector<128x128xbf16>
    %c0_18 = arith.constant 0 : index
    %c0_19 = arith.constant 0 : index
    %25 = vector.load %arg2[%c0_18, %c0_19] : memref<128x128xbf16, #tpu.memory_space<vmem>>, vector<128x128xbf16>
    %cst_20 = arith.constant dense<0.000000e+00> : vector<128x128xf32>
    %26 = tpu.matmul %24, %25, %cst_20 {dimension_numbers = #tpu.dot_dimension_numbers<[1], [0], [0], [1], [0, 0, 1, 1], [], []>} : vector<128x128xbf16>, vector<128x128xbf16>, vector<128x128xf32> -> vector<128x128xf32>
    %c256_21 = arith.constant 256 : index
    %c0_22 = arith.constant 0 : index
    %27 = vector.load %arg6[%c256_21, %c0_22] : memref<640x128xf32, #tpu.memory_space<vmem>>, vector<128x128xf32>
    tpu.vector_store %arg6[%c256_21, %c0_22], %26 {strides = array<i32>} : memref<640x128xf32, #tpu.memory_space<vmem>>, vector<128x128xf32>,
    %cst_23 = arith.constant dense<0.000000e+00> : vector<128xf32>
    %28 = vector.multi_reduction <add>, %26, %cst_23 [0] : vector<128x128xf32> to vector<128xf32>
    %29 = vector.shape_cast %28 : vector<128xf32> to vector<1x128xf32>
    %30 = arith.addf %19, %29 : vector<1x128xf32>
    %31 = arith.mulf %26, %26 : vector<128x128xf32>
    %cst_24 = arith.constant dense<0.000000e+00> : vector<128xf32>
    %32 = vector.multi_reduction <add>, %31, %cst_24 [0] : vector<128x128xf32> to vector<128xf32>
    %33 = vector.shape_cast %32 : vector<128xf32> to vector<1x128xf32>
    %34 = arith.addf %23, %33 : vector<1x128xf32>
    %c384 = arith.constant 384 : index
    %c0_25 = arith.constant 0 : index
    %35 = vector.load %arg1[%c384, %c0_25] : memref<640x128xbf16, #tpu.memory_space<vmem>>, vector<128x128xbf16>
    %c0_26 = arith.constant 0 : index
    %c0_27 = arith.constant 0 : index
    %36 = vector.load %arg2[%c0_26, %c0_27] : memref<128x128xbf16, #tpu.memory_space<vmem>>, vector<128x128xbf16>
    %cst_28 = arith.constant dense<0.000000e+00> : vector<128x128xf32>
    %37 = tpu.matmul %35, %36, %cst_28 {dimension_numbers = #tpu.dot_dimension_numbers<[1], [0], [0], [1], [0, 0, 1, 1], [], []>} : vector<128x128xbf16>, vector<128x128xbf16>, vector<128x128xf32> -> vector<128x128xf32>
    %c384_29 = arith.constant 384 : index
    %c0_30 = arith.constant 0 : index
    %38 = vector.load %arg6[%c384_29, %c0_30] : memref<640x128xf32, #tpu.memory_space<vmem>>, vector<128x128xf32>
    tpu.vector_store %arg6[%c384_29, %c0_30], %37 {strides = array<i32>} : memref<640x128xf32, #tpu.memory_space<vmem>>, vector<128x128xf32>,
    %cst_31 = arith.constant dense<0.000000e+00> : vector<128xf32>
    %39 = vector.multi_reduction <add>, %37, %cst_31 [0] : vector<128x128xf32> to vector<128xf32>
    %40 = vector.shape_cast %39 : vector<128xf32> to vector<1x128xf32>
    %41 = arith.addf %30, %40 : vector<1x128xf32>
    %42 = arith.mulf %37, %37 : vector<128x128xf32>
    %cst_32 = arith.constant dense<0.000000e+00> : vector<128xf32>
    %43 = vector.multi_reduction <add>, %42, %cst_32 [0] : vector<128x128xf32> to vector<128xf32>
    %44 = vector.shape_cast %43 : vector<128xf32> to vector<1x128xf32>
    %45 = arith.addf %34, %44 : vector<1x128xf32>
    %c512 = arith.constant 512 : index
    %c0_33 = arith.constant 0 : index
    %46 = vector.load %arg1[%c512, %c0_33] : memref<640x128xbf16, #tpu.memory_space<vmem>>, vector<128x128xbf16>
    %c0_34 = arith.constant 0 : index
    %c0_35 = arith.constant 0 : index
    %47 = vector.load %arg2[%c0_34, %c0_35] : memref<128x128xbf16, #tpu.memory_space<vmem>>, vector<128x128xbf16>
    %cst_36 = arith.constant dense<0.000000e+00> : vector<128x128xf32>
    %48 = tpu.matmul %46, %47, %cst_36 {dimension_numbers = #tpu.dot_dimension_numbers<[1], [0], [0], [1], [0, 0, 1, 1], [], []>} : vector<128x128xbf16>, vector<128x128xbf16>, vector<128x128xf32> -> vector<128x128xf32>
    %c512_37 = arith.constant 512 : index
    %c0_38 = arith.constant 0 : index
    %49 = vector.load %arg6[%c512_37, %c0_38] : memref<640x128xf32, #tpu.memory_space<vmem>>, vector<128x128xf32>
    tpu.vector_store %arg6[%c512_37, %c0_38], %48 {strides = array<i32>} : memref<640x128xf32, #tpu.memory_space<vmem>>, vector<128x128xf32>,
    %cst_39 = arith.constant dense<0.000000e+00> : vector<128xf32>
    %50 = vector.multi_reduction <add>, %48, %cst_39 [0] : vector<128x128xf32> to vector<128xf32>
    %51 = vector.shape_cast %50 : vector<128xf32> to vector<1x128xf32>
    %52 = arith.addf %41, %51 : vector<1x128xf32>
    %53 = arith.mulf %48, %48 : vector<128x128xf32>
    %cst_40 = arith.constant dense<0.000000e+00> : vector<128xf32>
    %54 = vector.multi_reduction <add>, %53, %cst_40 [0] : vector<128x128xf32> to vector<128xf32>
    %55 = vector.shape_cast %54 : vector<128xf32> to vector<1x128xf32>
    %56 = arith.addf %45, %55 : vector<1x128xf32>
    %cst_41 = arith.constant 0.00173010386 : f32
    %57 = vector.broadcast %cst_41 : f32 to vector<1x128xf32>
    %58 = arith.mulf %52, %57 : vector<1x128xf32>
    %cst_42 = arith.constant 0.00173010386 : f32
    %59 = vector.broadcast %cst_42 : f32 to vector<1x128xf32>
    %60 = arith.mulf %56, %59 : vector<1x128xf32>
    %61 = arith.mulf %58, %58 : vector<1x128xf32>
    %62 = arith.subf %60, %61 : vector<1x128xf32>
    %cst_43 = arith.constant 0.000000e+00 : f32
    %63 = vector.broadcast %cst_43 : f32 to vector<1x128xf32>
    %64 = arith.maximumf %62, %63 : vector<1x128xf32>
    %c0_44 = arith.constant 0 : index
    %c0_45 = arith.constant 0 : index
    %65 = vector.load %arg3[%c0_44, %c0_45] : memref<1x128xf32, #tpu.memory_space<vmem>>, vector<1x128xf32>
    %cst_46 = arith.constant 9.99999974E-6 : f32
    %66 = vector.broadcast %cst_46 : f32 to vector<1x128xf32>
    %67 = arith.addf %64, %66 : vector<1x128xf32>
    %68 = math.rsqrt %67 : vector<1x128xf32>
    %69 = arith.mulf %65, %68 : vector<1x128xf32>
    %c0_47 = arith.constant 0 : index
    %c0_48 = arith.constant 0 : index
    %70 = vector.load %arg4[%c0_47, %c0_48] : memref<1x128xf32, #tpu.memory_space<vmem>>, vector<1x128xf32>
    %71 = arith.mulf %58, %69 : vector<1x128xf32>
    %72 = arith.subf %70, %71 : vector<1x128xf32>
    %c0_49 = arith.constant 0 : index
    %c0_50 = arith.constant 0 : index
    %73 = vector.load %arg6[%c0_49, %c0_50] : memref<640x128xf32, #tpu.memory_space<vmem>>, vector<128x128xf32>
    %74 = vector.broadcast %69 : vector<1x128xf32> to vector<128x128xf32>
    %75 = arith.mulf %73, %74 : vector<128x128xf32>
    %76 = vector.broadcast %72 : vector<1x128xf32> to vector<128x128xf32>
    %77 = arith.addf %75, %76 : vector<128x128xf32>
    %cst_51 = arith.constant 0.000000e+00 : f32
    %78 = vector.broadcast %cst_51 : f32 to vector<128x128xf32>
    %79 = arith.maximumf %77, %78 : vector<128x128xf32>
    %80 = arith.truncf %79 : vector<128x128xf32> to vector<128x128xbf16>
    %c0_52 = arith.constant 0 : index
    %c0_53 = arith.constant 0 : index
    %81 = vector.load %arg5[%c0_52, %c0_53] : memref<640x128xbf16, #tpu.memory_space<vmem>>, vector<128x128xbf16>
    tpu.vector_store %arg5[%c0_52, %c0_53], %80 {strides = array<i32>} : memref<640x128xbf16, #tpu.memory_space<vmem>>, vector<128x128xbf16>,
    %c128_54 = arith.constant 128 : index
    %c0_55 = arith.constant 0 : index
    %82 = vector.load %arg6[%c128_54, %c0_55] : memref<640x128xf32, #tpu.memory_space<vmem>>, vector<128x128xf32>
    %83 = vector.broadcast %69 : vector<1x128xf32> to vector<128x128xf32>
    %84 = arith.mulf %82, %83 : vector<128x128xf32>
    %85 = vector.broadcast %72 : vector<1x128xf32> to vector<128x128xf32>
    %86 = arith.addf %84, %85 : vector<128x128xf32>
    %cst_56 = arith.constant 0.000000e+00 : f32
    %87 = vector.broadcast %cst_56 : f32 to vector<128x128xf32>
    %88 = arith.maximumf %86, %87 : vector<128x128xf32>
    %89 = arith.truncf %88 : vector<128x128xf32> to vector<128x128xbf16>
    %c128_57 = arith.constant 128 : index
    %c0_58 = arith.constant 0 : index
    %90 = vector.load %arg5[%c128_57, %c0_58] : memref<640x128xbf16, #tpu.memory_space<vmem>>, vector<128x128xbf16>
    tpu.vector_store %arg5[%c128_57, %c0_58], %89 {strides = array<i32>} : memref<640x128xbf16, #tpu.memory_space<vmem>>, vector<128x128xbf16>,
    %c256_59 = arith.constant 256 : index
    %c0_60 = arith.constant 0 : index
    %91 = vector.load %arg6[%c256_59, %c0_60] : memref<640x128xf32, #tpu.memory_space<vmem>>, vector<128x128xf32>
    %92 = vector.broadcast %69 : vector<1x128xf32> to vector<128x128xf32>
    %93 = arith.mulf %91, %92 : vector<128x128xf32>
    %94 = vector.broadcast %72 : vector<1x128xf32> to vector<128x128xf32>
    %95 = arith.addf %93, %94 : vector<128x128xf32>
    %cst_61 = arith.constant 0.000000e+00 : f32
    %96 = vector.broadcast %cst_61 : f32 to vector<128x128xf32>
    %97 = arith.maximumf %95, %96 : vector<128x128xf32>
    %98 = arith.truncf %97 : vector<128x128xf32> to vector<128x128xbf16>
    %c256_62 = arith.constant 256 : index
    %c0_63 = arith.constant 0 : index
    %99 = vector.load %arg5[%c256_62, %c0_63] : memref<640x128xbf16, #tpu.memory_space<vmem>>, vector<128x128xbf16>
    tpu.vector_store %arg5[%c256_62, %c0_63], %98 {strides = array<i32>} : memref<640x128xbf16, #tpu.memory_space<vmem>>, vector<128x128xbf16>,
    %c384_64 = arith.constant 384 : index
    %c0_65 = arith.constant 0 : index
    %100 = vector.load %arg6[%c384_64, %c0_65] : memref<640x128xf32, #tpu.memory_space<vmem>>, vector<128x128xf32>
    %101 = vector.broadcast %69 : vector<1x128xf32> to vector<128x128xf32>
    %102 = arith.mulf %100, %101 : vector<128x128xf32>
    %103 = vector.broadcast %72 : vector<1x128xf32> to vector<128x128xf32>
    %104 = arith.addf %102, %103 : vector<128x128xf32>
    %cst_66 = arith.constant 0.000000e+00 : f32
    %105 = vector.broadcast %cst_66 : f32 to vector<128x128xf32>
    %106 = arith.maximumf %104, %105 : vector<128x128xf32>
    %107 = arith.truncf %106 : vector<128x128xf32> to vector<128x128xbf16>
    %c384_67 = arith.constant 384 : index
    %c0_68 = arith.constant 0 : index
    %108 = vector.load %arg5[%c384_67, %c0_68] : memref<640x128xbf16, #tpu.memory_space<vmem>>, vector<128x128xbf16>
    tpu.vector_store %arg5[%c384_67, %c0_68], %107 {strides = array<i32>} : memref<640x128xbf16, #tpu.memory_space<vmem>>, vector<128x128xbf16>,
    %c512_69 = arith.constant 512 : index
    %c0_70 = arith.constant 0 : index
    %109 = vector.load %arg6[%c512_69, %c0_70] : memref<640x128xf32, #tpu.memory_space<vmem>>, vector<128x128xf32>
    %110 = vector.broadcast %69 : vector<1x128xf32> to vector<128x128xf32>
    %111 = arith.mulf %109, %110 : vector<128x128xf32>
    %112 = vector.broadcast %72 : vector<1x128xf32> to vector<128x128xf32>
    %113 = arith.addf %111, %112 : vector<128x128xf32>
    %cst_71 = arith.constant 0.000000e+00 : f32
    %114 = vector.broadcast %cst_71 : f32 to vector<128x128xf32>
    %115 = arith.maximumf %113, %114 : vector<128x128xf32>
    %116 = arith.truncf %115 : vector<128x128xf32> to vector<128x128xbf16>
    %c512_72 = arith.constant 512 : index
    %c0_73 = arith.constant 0 : index
    %117 = vector.load %arg5[%c512_72, %c0_73] : memref<640x128xbf16, #tpu.memory_space<vmem>>, vector<128x128xbf16>
    tpu.vector_store %arg5[%c512_72, %c0_73], %116 {strides = array<i32>} : memref<640x128xbf16, #tpu.memory_space<vmem>>, vector<128x128xbf16>,
    return
  }
  func.func @transform_0(%arg0: i32) -> (i32, i32) {
    %c0_i32 = arith.constant 0 : i32
    %c0_i32_0 = arith.constant 0 : i32
    %c0_i32_1 = arith.constant 0 : i32
    return %c0_i32, %c0_i32_0 : i32, i32
  }
  func.func @transform_1(%arg0: i32) -> (i32, i32) {
    %c0_i32 = arith.constant 0 : i32
    %c0_i32_0 = arith.constant 0 : i32
    return %c0_i32, %arg0 : i32, i32
  }
  func.func @transform_2(%arg0: i32) -> (i32, i32) {
    %c0_i32 = arith.constant 0 : i32
    %c0_i32_0 = arith.constant 0 : i32
    return %c0_i32, %arg0 : i32, i32
  }
  func.func @transform_3(%arg0: i32) -> (i32, i32) {
    %c0_i32 = arith.constant 0 : i32
    %c0_i32_0 = arith.constant 0 : i32
    return %c0_i32, %arg0 : i32, i32
  }
  func.func @transform_4(%arg0: i32) -> (i32, i32) {
    %c0_i32 = arith.constant 0 : i32
    %c0_i32_0 = arith.constant 0 : i32
    return %c0_i32, %arg0 : i32, i32
  }
}

module attributes {stable_mosaic.version = 11 : i64} {
  func.func @fused_conv_bn_relu_kernel(%arg0: i32, %arg1: memref<128x1152xbf16, #tpu.memory_space<vmem>>, %arg2: memref<1152x128xbf16, #tpu.memory_space<vmem>>, %arg3: memref<1x128xf32, #tpu.memory_space<vmem>>, %arg4: memref<1x128xf32, #tpu.memory_space<vmem>>, %arg5: memref<128x128xbf16, #tpu.memory_space<vmem>>, %arg6: memref<128x128xf32, #tpu.memory_space<vmem>>) attributes {dimension_semantics = [#tpu.dimension_semantics<parallel>], iteration_bounds = array<i64: 1>, scalar_prefetch = 0 : i64, scratch_operands = 1 : i64, tpu.core_type = #tpu.core_type<tc>, window_params = [{pipeline_mode = #tpu.pipeline_mode<synchronous>, transform_indices = @transform_0, window_bounds = array<i64: 128, 1152>}, {transform_indices = @transform_1, window_bounds = array<i64: 1152, 128>}, {transform_indices = @transform_2, window_bounds = array<i64: 1, 128>}, {transform_indices = @transform_3, window_bounds = array<i64: 1, 128>}, {transform_indices = @transform_4, window_bounds = array<i64: 128, 128>}]} {
    %cst = arith.constant 0.000000e+00 : f32
    %0 = vector.broadcast %cst : f32 to vector<1x128xf32>
    %cst_0 = arith.constant 0.000000e+00 : f32
    %1 = vector.broadcast %cst_0 : f32 to vector<1x128xf32>
    %c0 = arith.constant 0 : index
    %c0_1 = arith.constant 0 : index
    %2 = vector.load %arg1[%c0, %c0_1] : memref<128x1152xbf16, #tpu.memory_space<vmem>>, vector<128x1152xbf16>
    %c0_2 = arith.constant 0 : index
    %c0_3 = arith.constant 0 : index
    %3 = vector.load %arg2[%c0_2, %c0_3] : memref<1152x128xbf16, #tpu.memory_space<vmem>>, vector<1152x128xbf16>
    %cst_4 = arith.constant dense<0.000000e+00> : vector<128x128xf32>
    %4 = tpu.matmul %2, %3, %cst_4 {dimension_numbers = #tpu.dot_dimension_numbers<[1], [0], [0], [1], [0, 0, 1, 1], [], []>} : vector<128x1152xbf16>, vector<1152x128xbf16>, vector<128x128xf32> -> vector<128x128xf32>
    %c0_5 = arith.constant 0 : index
    %c0_6 = arith.constant 0 : index
    %5 = vector.load %arg6[%c0_5, %c0_6] : memref<128x128xf32, #tpu.memory_space<vmem>>, vector<128x128xf32>
    tpu.vector_store %arg6[%c0_5, %c0_6], %4 {strides = array<i32>} : memref<128x128xf32, #tpu.memory_space<vmem>>, vector<128x128xf32>,
    %cst_7 = arith.constant dense<0.000000e+00> : vector<128xf32>
    %6 = vector.multi_reduction <add>, %4, %cst_7 [0] : vector<128x128xf32> to vector<128xf32>
    %7 = vector.shape_cast %6 : vector<128xf32> to vector<1x128xf32>
    %8 = arith.addf %0, %7 : vector<1x128xf32>
    %9 = arith.mulf %4, %4 : vector<128x128xf32>
    %cst_8 = arith.constant dense<0.000000e+00> : vector<128xf32>
    %10 = vector.multi_reduction <add>, %9, %cst_8 [0] : vector<128x128xf32> to vector<128xf32>
    %11 = vector.shape_cast %10 : vector<128xf32> to vector<1x128xf32>
    %12 = arith.addf %1, %11 : vector<1x128xf32>
    %cst_9 = arith.constant 7.812500e-03 : f32
    %13 = vector.broadcast %cst_9 : f32 to vector<1x128xf32>
    %14 = arith.mulf %8, %13 : vector<1x128xf32>
    %cst_10 = arith.constant 7.812500e-03 : f32
    %15 = vector.broadcast %cst_10 : f32 to vector<1x128xf32>
    %16 = arith.mulf %12, %15 : vector<1x128xf32>
    %17 = arith.mulf %14, %14 : vector<1x128xf32>
    %18 = arith.subf %16, %17 : vector<1x128xf32>
    %cst_11 = arith.constant 0.000000e+00 : f32
    %19 = vector.broadcast %cst_11 : f32 to vector<1x128xf32>
    %20 = arith.maximumf %18, %19 : vector<1x128xf32>
    %c0_12 = arith.constant 0 : index
    %c0_13 = arith.constant 0 : index
    %21 = vector.load %arg3[%c0_12, %c0_13] : memref<1x128xf32, #tpu.memory_space<vmem>>, vector<1x128xf32>
    %cst_14 = arith.constant 9.99999974E-6 : f32
    %22 = vector.broadcast %cst_14 : f32 to vector<1x128xf32>
    %23 = arith.addf %20, %22 : vector<1x128xf32>
    %24 = math.rsqrt %23 : vector<1x128xf32>
    %25 = arith.mulf %21, %24 : vector<1x128xf32>
    %c0_15 = arith.constant 0 : index
    %c0_16 = arith.constant 0 : index
    %26 = vector.load %arg4[%c0_15, %c0_16] : memref<1x128xf32, #tpu.memory_space<vmem>>, vector<1x128xf32>
    %27 = arith.mulf %14, %25 : vector<1x128xf32>
    %28 = arith.subf %26, %27 : vector<1x128xf32>
    %c0_17 = arith.constant 0 : index
    %c0_18 = arith.constant 0 : index
    %29 = vector.load %arg6[%c0_17, %c0_18] : memref<128x128xf32, #tpu.memory_space<vmem>>, vector<128x128xf32>
    %30 = vector.broadcast %25 : vector<1x128xf32> to vector<128x128xf32>
    %31 = arith.mulf %29, %30 : vector<128x128xf32>
    %32 = vector.broadcast %28 : vector<1x128xf32> to vector<128x128xf32>
    %33 = arith.addf %31, %32 : vector<128x128xf32>
    %cst_19 = arith.constant 0.000000e+00 : f32
    %34 = vector.broadcast %cst_19 : f32 to vector<128x128xf32>
    %35 = arith.maximumf %33, %34 : vector<128x128xf32>
    %36 = arith.truncf %35 : vector<128x128xf32> to vector<128x128xbf16>
    %c0_20 = arith.constant 0 : index
    %c0_21 = arith.constant 0 : index
    %37 = vector.load %arg5[%c0_20, %c0_21] : memref<128x128xbf16, #tpu.memory_space<vmem>>, vector<128x128xbf16>
    tpu.vector_store %arg5[%c0_20, %c0_21], %36 {strides = array<i32>} : memref<128x128xbf16, #tpu.memory_space<vmem>>, vector<128x128xbf16>,
    return
  }
  func.func @transform_0(%arg0: i32) -> (i32, i32) {
    %c0_i32 = arith.constant 0 : i32
    %c0_i32_0 = arith.constant 0 : i32
    %c0_i32_1 = arith.constant 0 : i32
    return %c0_i32, %c0_i32_0 : i32, i32
  }
  func.func @transform_1(%arg0: i32) -> (i32, i32) {
    %c0_i32 = arith.constant 0 : i32
    %c0_i32_0 = arith.constant 0 : i32
    return %c0_i32, %arg0 : i32, i32
  }
  func.func @transform_2(%arg0: i32) -> (i32, i32) {
    %c0_i32 = arith.constant 0 : i32
    %c0_i32_0 = arith.constant 0 : i32
    return %c0_i32, %arg0 : i32, i32
  }
  func.func @transform_3(%arg0: i32) -> (i32, i32) {
    %c0_i32 = arith.constant 0 : i32
    %c0_i32_0 = arith.constant 0 : i32
    return %c0_i32, %arg0 : i32, i32
  }
  func.func @transform_4(%arg0: i32) -> (i32, i32) {
    %c0_i32 = arith.constant 0 : i32
    %c0_i32_0 = arith.constant 0 : i32
    return %c0_i32, %arg0 : i32, i32
  }
}

module attributes {stable_mosaic.version = 11 : i64} {
  func.func @fused_conv_bn_relu_kernel(%arg0: i32, %arg1: memref<32x512xbf16, #tpu.memory_space<vmem>>, %arg2: memref<512x256xbf16, #tpu.memory_space<vmem>>, %arg3: memref<1x256xf32, #tpu.memory_space<vmem>>, %arg4: memref<1x256xf32, #tpu.memory_space<vmem>>, %arg5: memref<32x256xbf16, #tpu.memory_space<vmem>>, %arg6: memref<32x256xf32, #tpu.memory_space<vmem>>) attributes {dimension_semantics = [#tpu.dimension_semantics<parallel>], iteration_bounds = array<i64: 1>, scalar_prefetch = 0 : i64, scratch_operands = 1 : i64, tpu.core_type = #tpu.core_type<tc>, window_params = [{pipeline_mode = #tpu.pipeline_mode<synchronous>, transform_indices = @transform_0, window_bounds = array<i64: 32, 512>}, {transform_indices = @transform_1, window_bounds = array<i64: 512, 256>}, {transform_indices = @transform_2, window_bounds = array<i64: 1, 256>}, {transform_indices = @transform_3, window_bounds = array<i64: 1, 256>}, {transform_indices = @transform_4, window_bounds = array<i64: 32, 256>}]} {
    %cst = arith.constant 0.000000e+00 : f32
    %0 = vector.broadcast %cst : f32 to vector<1x256xf32>
    %cst_0 = arith.constant 0.000000e+00 : f32
    %1 = vector.broadcast %cst_0 : f32 to vector<1x256xf32>
    %c0 = arith.constant 0 : index
    %c0_1 = arith.constant 0 : index
    %2 = vector.load %arg1[%c0, %c0_1] : memref<32x512xbf16, #tpu.memory_space<vmem>>, vector<32x512xbf16>
    %c0_2 = arith.constant 0 : index
    %c0_3 = arith.constant 0 : index
    %3 = vector.load %arg2[%c0_2, %c0_3] : memref<512x256xbf16, #tpu.memory_space<vmem>>, vector<512x256xbf16>
    %cst_4 = arith.constant dense<0.000000e+00> : vector<32x256xf32>
    %4 = tpu.matmul %2, %3, %cst_4 {dimension_numbers = #tpu.dot_dimension_numbers<[1], [0], [0], [1], [0, 0, 1, 1], [], []>} : vector<32x512xbf16>, vector<512x256xbf16>, vector<32x256xf32> -> vector<32x256xf32>
    %c0_5 = arith.constant 0 : index
    %c0_6 = arith.constant 0 : index
    %5 = vector.load %arg6[%c0_5, %c0_6] : memref<32x256xf32, #tpu.memory_space<vmem>>, vector<32x256xf32>
    tpu.vector_store %arg6[%c0_5, %c0_6], %4 {strides = array<i32>} : memref<32x256xf32, #tpu.memory_space<vmem>>, vector<32x256xf32>,
    %cst_7 = arith.constant dense<0.000000e+00> : vector<256xf32>
    %6 = vector.multi_reduction <add>, %4, %cst_7 [0] : vector<32x256xf32> to vector<256xf32>
    %7 = vector.shape_cast %6 : vector<256xf32> to vector<1x256xf32>
    %8 = arith.addf %0, %7 : vector<1x256xf32>
    %9 = arith.mulf %4, %4 : vector<32x256xf32>
    %cst_8 = arith.constant dense<0.000000e+00> : vector<256xf32>
    %10 = vector.multi_reduction <add>, %9, %cst_8 [0] : vector<32x256xf32> to vector<256xf32>
    %11 = vector.shape_cast %10 : vector<256xf32> to vector<1x256xf32>
    %12 = arith.addf %1, %11 : vector<1x256xf32>
    %cst_9 = arith.constant 3.125000e-02 : f32
    %13 = vector.broadcast %cst_9 : f32 to vector<1x256xf32>
    %14 = arith.mulf %8, %13 : vector<1x256xf32>
    %cst_10 = arith.constant 3.125000e-02 : f32
    %15 = vector.broadcast %cst_10 : f32 to vector<1x256xf32>
    %16 = arith.mulf %12, %15 : vector<1x256xf32>
    %17 = arith.mulf %14, %14 : vector<1x256xf32>
    %18 = arith.subf %16, %17 : vector<1x256xf32>
    %cst_11 = arith.constant 0.000000e+00 : f32
    %19 = vector.broadcast %cst_11 : f32 to vector<1x256xf32>
    %20 = arith.maximumf %18, %19 : vector<1x256xf32>
    %c0_12 = arith.constant 0 : index
    %c0_13 = arith.constant 0 : index
    %21 = vector.load %arg3[%c0_12, %c0_13] : memref<1x256xf32, #tpu.memory_space<vmem>>, vector<1x256xf32>
    %cst_14 = arith.constant 9.99999974E-6 : f32
    %22 = vector.broadcast %cst_14 : f32 to vector<1x256xf32>
    %23 = arith.addf %20, %22 : vector<1x256xf32>
    %24 = math.rsqrt %23 : vector<1x256xf32>
    %25 = arith.mulf %21, %24 : vector<1x256xf32>
    %c0_15 = arith.constant 0 : index
    %c0_16 = arith.constant 0 : index
    %26 = vector.load %arg4[%c0_15, %c0_16] : memref<1x256xf32, #tpu.memory_space<vmem>>, vector<1x256xf32>
    %27 = arith.mulf %14, %25 : vector<1x256xf32>
    %28 = arith.subf %26, %27 : vector<1x256xf32>
    %c0_17 = arith.constant 0 : index
    %c0_18 = arith.constant 0 : index
    %29 = vector.load %arg6[%c0_17, %c0_18] : memref<32x256xf32, #tpu.memory_space<vmem>>, vector<32x256xf32>
    %30 = vector.broadcast %25 : vector<1x256xf32> to vector<32x256xf32>
    %31 = arith.mulf %29, %30 : vector<32x256xf32>
    %32 = vector.broadcast %28 : vector<1x256xf32> to vector<32x256xf32>
    %33 = arith.addf %31, %32 : vector<32x256xf32>
    %cst_19 = arith.constant 0.000000e+00 : f32
    %34 = vector.broadcast %cst_19 : f32 to vector<32x256xf32>
    %35 = arith.maximumf %33, %34 : vector<32x256xf32>
    %36 = arith.truncf %35 : vector<32x256xf32> to vector<32x256xbf16>
    %c0_20 = arith.constant 0 : index
    %c0_21 = arith.constant 0 : index
    %37 = vector.load %arg5[%c0_20, %c0_21] : memref<32x256xbf16, #tpu.memory_space<vmem>>, vector<32x256xbf16>
    tpu.vector_store %arg5[%c0_20, %c0_21], %36 {strides = array<i32>} : memref<32x256xbf16, #tpu.memory_space<vmem>>, vector<32x256xbf16>,
    return
  }
  func.func @transform_0(%arg0: i32) -> (i32, i32) {
    %c0_i32 = arith.constant 0 : i32
    %c0_i32_0 = arith.constant 0 : i32
    %c0_i32_1 = arith.constant 0 : i32
    return %c0_i32, %c0_i32_0 : i32, i32
  }
  func.func @transform_1(%arg0: i32) -> (i32, i32) {
    %c0_i32 = arith.constant 0 : i32
    %c0_i32_0 = arith.constant 0 : i32
    return %c0_i32, %arg0 : i32, i32
  }
  func.func @transform_2(%arg0: i32) -> (i32, i32) {
    %c0_i32 = arith.constant 0 : i32
    %c0_i32_0 = arith.constant 0 : i32
    return %c0_i32, %arg0 : i32, i32
  }
  func.func @transform_3(%arg0: i32) -> (i32, i32) {
    %c0_i32 = arith.constant 0 : i32
    %c0_i32_0 = arith.constant 0 : i32
    return %c0_i32, %arg0 : i32, i32
  }
  func.func @transform_4(%arg0: i32) -> (i32, i32) {
    %c0_i32 = arith.constant 0 : i32
    %c0_i32_0 = arith.constant 0 : i32
    return %c0_i32, %arg0 : i32, i32
  }
}

module attributes {stable_mosaic.version = 11 : i64} {
  func.func @final_conv_sigmoid_kernel(%arg0: i32, %arg1: memref<16x4096xbf16, #tpu.memory_space<vmem>>, %arg2: memref<1x4096xbf16, #tpu.memory_space<vmem>>, %arg3: memref<1x1xf32, #tpu.memory_space<vmem>>, %arg4: memref<16x1xf32, #tpu.memory_space<vmem>>) attributes {dimension_semantics = [#tpu.dimension_semantics<arbitrary>], iteration_bounds = array<i64: 1>, scalar_prefetch = 0 : i64, scratch_operands = 0 : i64, tpu.core_type = #tpu.core_type<tc>, window_params = [{pipeline_mode = #tpu.pipeline_mode<synchronous>, transform_indices = @transform_0, window_bounds = array<i64: 16, 4096>}, {pipeline_mode = #tpu.pipeline_mode<synchronous>, transform_indices = @transform_1, window_bounds = array<i64: 1, 4096>}, {pipeline_mode = #tpu.pipeline_mode<synchronous>, transform_indices = @transform_2, window_bounds = array<i64: 1, 1>}, {pipeline_mode = #tpu.pipeline_mode<synchronous>, transform_indices = @transform_3, window_bounds = array<i64: 16, 1>}]} {
    %cst = arith.constant 0.000000e+00 : f32
    %0 = vector.broadcast %cst : f32 to vector<16x1xf32>
    %c0 = arith.constant 0 : index
    %c0_0 = arith.constant 0 : index
    %1 = vector.load %arg1[%c0, %c0_0] : memref<16x4096xbf16, #tpu.memory_space<vmem>>, vector<16x512xbf16>
    %2 = arith.extf %1 : vector<16x512xbf16> to vector<16x512xf32>
    %c0_1 = arith.constant 0 : index
    %c0_2 = arith.constant 0 : index
    %3 = vector.load %arg2[%c0_1, %c0_2] : memref<1x4096xbf16, #tpu.memory_space<vmem>>, vector<1x512xbf16>
    %4 = arith.extf %3 : vector<1x512xbf16> to vector<1x512xf32>
    %5 = vector.broadcast %4 : vector<1x512xf32> to vector<16x512xf32>
    %6 = arith.mulf %2, %5 : vector<16x512xf32>
    %cst_3 = arith.constant dense<0.000000e+00> : vector<16xf32>
    %7 = vector.multi_reduction <add>, %6, %cst_3 [1] : vector<16x512xf32> to vector<16xf32>
    %8 = vector.shape_cast %7 : vector<16xf32> to vector<16x1xf32>
    %9 = arith.addf %0, %8 : vector<16x1xf32>
    %c0_4 = arith.constant 0 : index
    %c512 = arith.constant 512 : index
    %10 = vector.load %arg1[%c0_4, %c512] : memref<16x4096xbf16, #tpu.memory_space<vmem>>, vector<16x512xbf16>
    %11 = arith.extf %10 : vector<16x512xbf16> to vector<16x512xf32>
    %c0_5 = arith.constant 0 : index
    %c512_6 = arith.constant 512 : index
    %12 = vector.load %arg2[%c0_5, %c512_6] : memref<1x4096xbf16, #tpu.memory_space<vmem>>, vector<1x512xbf16>
    %13 = arith.extf %12 : vector<1x512xbf16> to vector<1x512xf32>
    %14 = vector.broadcast %13 : vector<1x512xf32> to vector<16x512xf32>
    %15 = arith.mulf %11, %14 : vector<16x512xf32>
    %cst_7 = arith.constant dense<0.000000e+00> : vector<16xf32>
    %16 = vector.multi_reduction <add>, %15, %cst_7 [1] : vector<16x512xf32> to vector<16xf32>
    %17 = vector.shape_cast %16 : vector<16xf32> to vector<16x1xf32>
    %18 = arith.addf %9, %17 : vector<16x1xf32>
    %c0_8 = arith.constant 0 : index
    %c1024 = arith.constant 1024 : index
    %19 = vector.load %arg1[%c0_8, %c1024] : memref<16x4096xbf16, #tpu.memory_space<vmem>>, vector<16x512xbf16>
    %20 = arith.extf %19 : vector<16x512xbf16> to vector<16x512xf32>
    %c0_9 = arith.constant 0 : index
    %c1024_10 = arith.constant 1024 : index
    %21 = vector.load %arg2[%c0_9, %c1024_10] : memref<1x4096xbf16, #tpu.memory_space<vmem>>, vector<1x512xbf16>
    %22 = arith.extf %21 : vector<1x512xbf16> to vector<1x512xf32>
    %23 = vector.broadcast %22 : vector<1x512xf32> to vector<16x512xf32>
    %24 = arith.mulf %20, %23 : vector<16x512xf32>
    %cst_11 = arith.constant dense<0.000000e+00> : vector<16xf32>
    %25 = vector.multi_reduction <add>, %24, %cst_11 [1] : vector<16x512xf32> to vector<16xf32>
    %26 = vector.shape_cast %25 : vector<16xf32> to vector<16x1xf32>
    %27 = arith.addf %18, %26 : vector<16x1xf32>
    %c0_12 = arith.constant 0 : index
    %c1536 = arith.constant 1536 : index
    %28 = vector.load %arg1[%c0_12, %c1536] : memref<16x4096xbf16, #tpu.memory_space<vmem>>, vector<16x512xbf16>
    %29 = arith.extf %28 : vector<16x512xbf16> to vector<16x512xf32>
    %c0_13 = arith.constant 0 : index
    %c1536_14 = arith.constant 1536 : index
    %30 = vector.load %arg2[%c0_13, %c1536_14] : memref<1x4096xbf16, #tpu.memory_space<vmem>>, vector<1x512xbf16>
    %31 = arith.extf %30 : vector<1x512xbf16> to vector<1x512xf32>
    %32 = vector.broadcast %31 : vector<1x512xf32> to vector<16x512xf32>
    %33 = arith.mulf %29, %32 : vector<16x512xf32>
    %cst_15 = arith.constant dense<0.000000e+00> : vector<16xf32>
    %34 = vector.multi_reduction <add>, %33, %cst_15 [1] : vector<16x512xf32> to vector<16xf32>
    %35 = vector.shape_cast %34 : vector<16xf32> to vector<16x1xf32>
    %36 = arith.addf %27, %35 : vector<16x1xf32>
    %c0_16 = arith.constant 0 : index
    %c2048 = arith.constant 2048 : index
    %37 = vector.load %arg1[%c0_16, %c2048] : memref<16x4096xbf16, #tpu.memory_space<vmem>>, vector<16x512xbf16>
    %38 = arith.extf %37 : vector<16x512xbf16> to vector<16x512xf32>
    %c0_17 = arith.constant 0 : index
    %c2048_18 = arith.constant 2048 : index
    %39 = vector.load %arg2[%c0_17, %c2048_18] : memref<1x4096xbf16, #tpu.memory_space<vmem>>, vector<1x512xbf16>
    %40 = arith.extf %39 : vector<1x512xbf16> to vector<1x512xf32>
    %41 = vector.broadcast %40 : vector<1x512xf32> to vector<16x512xf32>
    %42 = arith.mulf %38, %41 : vector<16x512xf32>
    %cst_19 = arith.constant dense<0.000000e+00> : vector<16xf32>
    %43 = vector.multi_reduction <add>, %42, %cst_19 [1] : vector<16x512xf32> to vector<16xf32>
    %44 = vector.shape_cast %43 : vector<16xf32> to vector<16x1xf32>
    %45 = arith.addf %36, %44 : vector<16x1xf32>
    %c0_20 = arith.constant 0 : index
    %c2560 = arith.constant 2560 : index
    %46 = vector.load %arg1[%c0_20, %c2560] : memref<16x4096xbf16, #tpu.memory_space<vmem>>, vector<16x512xbf16>
    %47 = arith.extf %46 : vector<16x512xbf16> to vector<16x512xf32>
    %c0_21 = arith.constant 0 : index
    %c2560_22 = arith.constant 2560 : index
    %48 = vector.load %arg2[%c0_21, %c2560_22] : memref<1x4096xbf16, #tpu.memory_space<vmem>>, vector<1x512xbf16>
    %49 = arith.extf %48 : vector<1x512xbf16> to vector<1x512xf32>
    %50 = vector.broadcast %49 : vector<1x512xf32> to vector<16x512xf32>
    %51 = arith.mulf %47, %50 : vector<16x512xf32>
    %cst_23 = arith.constant dense<0.000000e+00> : vector<16xf32>
    %52 = vector.multi_reduction <add>, %51, %cst_23 [1] : vector<16x512xf32> to vector<16xf32>
    %53 = vector.shape_cast %52 : vector<16xf32> to vector<16x1xf32>
    %54 = arith.addf %45, %53 : vector<16x1xf32>
    %c0_24 = arith.constant 0 : index
    %c3072 = arith.constant 3072 : index
    %55 = vector.load %arg1[%c0_24, %c3072] : memref<16x4096xbf16, #tpu.memory_space<vmem>>, vector<16x512xbf16>
    %56 = arith.extf %55 : vector<16x512xbf16> to vector<16x512xf32>
    %c0_25 = arith.constant 0 : index
    %c3072_26 = arith.constant 3072 : index
    %57 = vector.load %arg2[%c0_25, %c3072_26] : memref<1x4096xbf16, #tpu.memory_space<vmem>>, vector<1x512xbf16>
    %58 = arith.extf %57 : vector<1x512xbf16> to vector<1x512xf32>
    %59 = vector.broadcast %58 : vector<1x512xf32> to vector<16x512xf32>
    %60 = arith.mulf %56, %59 : vector<16x512xf32>
    %cst_27 = arith.constant dense<0.000000e+00> : vector<16xf32>
    %61 = vector.multi_reduction <add>, %60, %cst_27 [1] : vector<16x512xf32> to vector<16xf32>
    %62 = vector.shape_cast %61 : vector<16xf32> to vector<16x1xf32>
    %63 = arith.addf %54, %62 : vector<16x1xf32>
    %c0_28 = arith.constant 0 : index
    %c3584 = arith.constant 3584 : index
    %64 = vector.load %arg1[%c0_28, %c3584] : memref<16x4096xbf16, #tpu.memory_space<vmem>>, vector<16x512xbf16>
    %65 = arith.extf %64 : vector<16x512xbf16> to vector<16x512xf32>
    %c0_29 = arith.constant 0 : index
    %c3584_30 = arith.constant 3584 : index
    %66 = vector.load %arg2[%c0_29, %c3584_30] : memref<1x4096xbf16, #tpu.memory_space<vmem>>, vector<1x512xbf16>
    %67 = arith.extf %66 : vector<1x512xbf16> to vector<1x512xf32>
    %68 = vector.broadcast %67 : vector<1x512xf32> to vector<16x512xf32>
    %69 = arith.mulf %65, %68 : vector<16x512xf32>
    %cst_31 = arith.constant dense<0.000000e+00> : vector<16xf32>
    %70 = vector.multi_reduction <add>, %69, %cst_31 [1] : vector<16x512xf32> to vector<16xf32>
    %71 = vector.shape_cast %70 : vector<16xf32> to vector<16x1xf32>
    %72 = arith.addf %63, %71 : vector<16x1xf32>
    %c0_32 = arith.constant 0 : index
    %c0_33 = arith.constant 0 : index
    %73 = vector.load %arg3[%c0_32, %c0_33] : memref<1x1xf32, #tpu.memory_space<vmem>>, vector<1x1xf32>
    %74 = vector.broadcast %73 : vector<1x1xf32> to vector<16x1xf32>
    %75 = arith.addf %72, %74 : vector<16x1xf32>
    %76 = arith.negf %75 : vector<16x1xf32>
    %77 = math.exp %76 : vector<16x1xf32>
    %cst_34 = arith.constant 1.000000e+00 : f32
    %78 = vector.broadcast %cst_34 : f32 to vector<16x1xf32>
    %79 = arith.addf %78, %77 : vector<16x1xf32>
    %80 = arith.divf %78, %79 : vector<16x1xf32>
    %c0_35 = arith.constant 0 : index
    %c0_36 = arith.constant 0 : index
    %81 = vector.load %arg4[%c0_35, %c0_36] : memref<16x1xf32, #tpu.memory_space<vmem>>, vector<16x1xf32>
    tpu.vector_store %arg4[%c0_35, %c0_36], %80 {strides = array<i32>} : memref<16x1xf32, #tpu.memory_space<vmem>>, vector<16x1xf32>,
    return
  }
  func.func @transform_0(%arg0: i32) -> (i32, i32) {
    %c0_i32 = arith.constant 0 : i32
    %c0_i32_0 = arith.constant 0 : i32
    %c0_i32_1 = arith.constant 0 : i32
    return %c0_i32, %c0_i32_0 : i32, i32
  }
  func.func @transform_1(%arg0: i32) -> (i32, i32) {
    %c0_i32 = arith.constant 0 : i32
    %c0_i32_0 = arith.constant 0 : i32
    %c0_i32_1 = arith.constant 0 : i32
    return %c0_i32, %c0_i32_0 : i32, i32
  }
  func.func @transform_2(%arg0: i32) -> (i32, i32) {
    %c0_i32 = arith.constant 0 : i32
    %c0_i32_0 = arith.constant 0 : i32
    %c0_i32_1 = arith.constant 0 : i32
    return %c0_i32, %c0_i32_0 : i32, i32
  }
  func.func @transform_3(%arg0: i32) -> (i32, i32) {
    %c0_i32 = arith.constant 0 : i32
    %c0_i32_0 = arith.constant 0 : i32
    %c0_i32_1 = arith.constant 0 : i32
    return %c0_i32, %c0_i32_0 : i32, i32
  }
}

</mosaic_0001>

<llo_original>
// kernel: discriminator_forward.4
$region0: #{discriminator_forward.4}
  #allocation0 [shape = 'u32[]', space=smem, size = 0x4, offset = 0x4, fixed_abs, tag = 'smem constant byte address 0x4 - core index']
  #allocation1 [shape = 'u32[72,128]{1,0:T(1,128)}', space=vmem, size = 0x9000, scoped, tag = 'internal scratch']
  #allocation2 [shape = 'f32[640,128]{1,0:T(8,128)}', space=vmem, size = 0x50000, scoped, tag = 'scratch operand']
  %s0 = inlined_call_operand.vmem [shape: bf16[640,128], index: 0, kind: input, shape index: {}]
  %s1 = inlined_call_operand.vmem [shape: bf16[128,128], index: 1, kind: input, shape index: {}]
  %s2 = inlined_call_operand.vmem [shape: f32[1,128], index: 2, kind: input, shape index: {}]
  %s3 = inlined_call_operand.vmem [shape: f32[1,128], index: 3, kind: input, shape index: {}]
  %s4 = inlined_call_operand.vmem [shape: bf16[640,128], index: 4, kind: output, shape index: {}]
  %s5 = sld [smem:[#allocation0]]
  $region26: #{discriminator_forward.4} parent=0
    _
  %s7 = ssub.s32 1, %s5
  %s8 = scalar_select 0, %s7, %s5
  // Predicated region
  $region2: #{discriminator_forward.4} parent=0 // pred_check
    _
  $region3: #{discriminator_forward.4} parent=0 // pred_check_branch
    %10 = sbr.rel (0) target = $region5
  $region4: #{discriminator_forward.4} parent=0 // pred_region
    _
  $region5: #{discriminator_forward.4} parent=0 // pred_fallthru
    _
  // Predicated region
  $region6: #{discriminator_forward.4} parent=0 // pred_check
    _
  $region7: #{discriminator_forward.4} parent=0 // pred_check_branch
    %12 = sbr.rel (0) target = $region9
  $region8: #{discriminator_forward.4} parent=0 // pred_region
    _
  $region9: #{discriminator_forward.4} parent=0 // pred_fallthru
    _
  // Predicated region
  $region10: #{discriminator_forward.4} parent=0 // pred_check
    _
  $region11: #{discriminator_forward.4} parent=0 // pred_check_branch
    %14 = sbr.rel (0) target = $region13
  $region12: #{discriminator_forward.4} parent=0 // pred_region
    _
  $region13: #{discriminator_forward.4} parent=0 // pred_fallthru
    _
  // Predicated region
  $region14: #{discriminator_forward.4} parent=0 // pred_check
    _
  $region15: #{discriminator_forward.4} parent=0 // pred_check_branch
    %16 = sbr.rel (0) target = $region17
  $region16: #{discriminator_forward.4} parent=0 // pred_region
    _
  $region17: #{discriminator_forward.4} parent=0 // pred_fallthru
    _
  %v17 = vld [vmem:[%s0] sm:$0xf]
  %v18 = vld [vmem:[%s0 + $0x4] sm:$0xf]
  %v19 = vld [vmem:[%s0 + $0x8] sm:$0xf]
  %v20 = vld [vmem:[%s0 + $0xc] sm:$0xf]
  %v21 = vld [vmem:[%s0 + $0x10] sm:$0xf]
  %v22 = vld [vmem:[%s0 + $0x14] sm:$0xf]
  %v23 = vld [vmem:[%s0 + $0x18] sm:$0xf]
  %v24 = vld [vmem:[%s0 + $0x1c] sm:$0xf]
  %v25 = vld [vmem:[%s0 + $0x20] sm:$0xf]
  %v26 = vld [vmem:[%s0 + $0x24] sm:$0xf]
  %v27 = vld [vmem:[%s0 + $0x28] sm:$0xf]
  %v28 = vld [vmem:[%s0 + $0x2c] sm:$0xf]
  %v29 = vld [vmem:[%s0 + $0x30] sm:$0xf]
  %v30 = vld [vmem:[%s0 + $0x34] sm:$0xf]
  %v31 = vld [vmem:[%s0 + $0x38] sm:$0xf]
  %v32 = vld [vmem:[%s0 + $0x3c] sm:$0xf]
  %v33 = vld [vmem:[%s1] sm:$0xf]
  %v34 = vld [vmem:[%s1 + $0x4] sm:$0xf]
  %v35 = vld [vmem:[%s1 + $0x8] sm:$0xf]
  %v36 = vld [vmem:[%s1 + $0xc] sm:$0xf]
  %v37 = vld [vmem:[%s1 + $0x10] sm:$0xf]
  %v38 = vld [vmem:[%s1 + $0x14] sm:$0xf]
  %v39 = vld [vmem:[%s1 + $0x18] sm:$0xf]
  %v40 = vld [vmem:[%s1 + $0x1c] sm:$0xf]
  %v41 = vld [vmem:[%s1 + $0x20] sm:$0xf]
  %v42 = vld [vmem:[%s1 + $0x24] sm:$0xf]
  %v43 = vld [vmem:[%s1 + $0x28] sm:$0xf]
  %v44 = vld [vmem:[%s1 + $0x2c] sm:$0xf]
  %v45 = vld [vmem:[%s1 + $0x30] sm:$0xf]
  %v46 = vld [vmem:[%s1 + $0x34] sm:$0xf]
  %v47 = vld [vmem:[%s1 + $0x38] sm:$0xf]
  %v48 = vld [vmem:[%s1 + $0x3c] sm:$0xf]
  %v65 = vunpack.c.l.b16 %v17
  %v66 = vunpack.c.l.b16 %v18
  %v67 = vunpack.c.l.b16 %v19
  %v68 = vunpack.c.l.b16 %v20
  %v69 = vunpack.c.l.b16 %v21
  %v70 = vunpack.c.l.b16 %v22
  %v71 = vunpack.c.l.b16 %v23
  %v72 = vunpack.c.l.b16 %v24
  %v73 = vunpack.c.l.b16 %v25
  %v74 = vunpack.c.l.b16 %v26
  %v75 = vunpack.c.l.b16 %v27
  %v76 = vunpack.c.l.b16 %v28
  %v77 = vunpack.c.l.b16 %v29
  %v78 = vunpack.c.l.b16 %v30
  %v79 = vunpack.c.l.b16 %v31
  %v80 = vunpack.c.l.b16 %v32
  %v81 = vpack.c.b16 %v66, %v65
  %v82 = vpack.c.b16 %v68, %v67
  %v83 = vpack.c.b16 %v70, %v69
  %v84 = vpack.c.b16 %v72, %v71
  %v85 = vpack.c.b16 %v74, %v73
  %v86 = vpack.c.b16 %v76, %v75
  %v87 = vpack.c.b16 %v78, %v77
  %v88 = vpack.c.b16 %v80, %v79
  %v113 = vunpack.c.l.b16 %v33
  %v114 = vunpack.c.l.b16 %v34
  %v115 = vunpack.c.l.b16 %v35
  %v116 = vunpack.c.l.b16 %v36
  %v117 = vunpack.c.l.b16 %v37
  %v118 = vunpack.c.l.b16 %v38
  %v119 = vunpack.c.l.b16 %v39
  %v120 = vunpack.c.l.b16 %v40
  %v121 = vunpack.c.l.b16 %v41
  %v122 = vunpack.c.l.b16 %v42
  %v123 = vunpack.c.l.b16 %v43
  %v124 = vunpack.c.l.b16 %v44
  %v125 = vunpack.c.l.b16 %v45
  %v126 = vunpack.c.l.b16 %v46
  %v127 = vunpack.c.l.b16 %v47
  %v128 = vunpack.c.l.b16 %v48
  %v129 = vpack.c.b16 %v114, %v113
  %v130 = vpack.c.b16 %v116, %v115
  %v131 = vpack.c.b16 %v118, %v117
  %v132 = vpack.c.b16 %v120, %v119
  %v133 = vpack.c.b16 %v122, %v121
  %v134 = vpack.c.b16 %v124, %v123
  %v135 = vpack.c.b16 %v126, %v125
  %v136 = vpack.c.b16 %v128, %v127
  %145 = vmatpush.bf16.msra.mxu0 %v136
  %146 = vmatpush.bf16.msra.mxu0 %v135
  %147 = vmatpush.bf16.msra.mxu0 %v134
  %148 = vmatpush.bf16.msra.mxu0 %v133
  %149 = vmatpush.bf16.msra.mxu0 %v132
  %150 = vmatpush.bf16.msra.mxu0 %v131
  %151 = vmatpush.bf16.msra.mxu0 %v130
  %152 = vmatpush.bf16.msra.mxu0 %v129
  %153 = vmatmul.bf16.gmra.mxu0 %v81
  %v154 = vpop.f32.mrf.mxu0
  %v155 = vadd.f32 0.0, %v154
  %v156 = vpop.f32.mrf.mxu0
  %v157 = vadd.f32 0.0, %v156
  %158 = vmatmul.bf16.gmra.mxu0 %v82
  %v159 = vpop.f32.mrf.mxu0
  %v160 = vadd.f32 0.0, %v159
  %v161 = vpop.f32.mrf.mxu0
  %v162 = vadd.f32 0.0, %v161
  %163 = vmatmul.bf16.gmra.mxu0 %v83
  %v164 = vpop.f32.mrf.mxu0
  %v165 = vadd.f32 0.0, %v164
  %v166 = vpop.f32.mrf.mxu0
  %v167 = vadd.f32 0.0, %v166
  %168 = vmatmul.bf16.gmra.mxu0 %v84
  %v169 = vpop.f32.mrf.mxu0
  %v170 = vadd.f32 0.0, %v169
  %v171 = vpop.f32.mrf.mxu0
  %v172 = vadd.f32 0.0, %v171
  %173 = vmatmul.bf16.gmra.mxu0 %v85
  %v174 = vpop.f32.mrf.mxu0
  %v175 = vadd.f32 0.0, %v174
  %v176 = vpop.f32.mrf.mxu0
  %v177 = vadd.f32 0.0, %v176
  %178 = vmatmul.bf16.gmra.mxu0 %v86
  %v179 = vpop.f32.mrf.mxu0
  %v180 = vadd.f32 0.0, %v179
  %v181 = vpop.f32.mrf.mxu0
  %v182 = vadd.f32 0.0, %v181
  %183 = vmatmul.bf16.gmra.mxu0 %v87
  %v184 = vpop.f32.mrf.mxu0
  %v185 = vadd.f32 0.0, %v184
  %v186 = vpop.f32.mrf.mxu0
  %v187 = vadd.f32 0.0, %v186
  %188 = vmatmul.bf16.gmra.mxu0 %v88
  %v189 = vpop.f32.mrf.mxu0
  %v190 = vadd.f32 0.0, %v189
  %v191 = vpop.f32.mrf.mxu0
  %v192 = vadd.f32 0.0, %v191
  %193 = vdwg.mxu0
  %194 = vst [vmem:[#allocation2] sm:$0xff] %v155
  %195 = vst [vmem:[#allocation2 + $0x8] sm:$0xff] %v157
  %196 = vst [vmem:[#allocation2 + $0x10] sm:$0xff] %v160
  %197 = vst [vmem:[#allocation2 + $0x18] sm:$0xff] %v162
  %198 = vst [vmem:[#allocation2 + $0x20] sm:$0xff] %v165
  %199 = vst [vmem:[#allocation2 + $0x28] sm:$0xff] %v167
  %200 = vst [vmem:[#allocation2 + $0x30] sm:$0xff] %v170
  %201 = vst [vmem:[#allocation2 + $0x38] sm:$0xff] %v172
  %202 = vst [vmem:[#allocation2 + $0x40] sm:$0xff] %v175
  %203 = vst [vmem:[#allocation2 + $0x48] sm:$0xff] %v177
  %204 = vst [vmem:[#allocation2 + $0x50] sm:$0xff] %v180
  %205 = vst [vmem:[#allocation2 + $0x58] sm:$0xff] %v182
  %206 = vst [vmem:[#allocation2 + $0x60] sm:$0xff] %v185
  %207 = vst [vmem:[#allocation2 + $0x68] sm:$0xff] %v187
  %208 = vst [vmem:[#allocation2 + $0x70] sm:$0xff] %v190
  %209 = vst [vmem:[#allocation2 + $0x78] sm:$0xff] %v192
  %v210 = vadd.f32 %v155, %v157
  %v211 = vadd.f32 %v210, %v160
  %v212 = vadd.f32 %v211, %v162
  %v213 = vadd.f32 %v212, %v165
  %v214 = vadd.f32 %v213, %v167
  %v215 = vadd.f32 %v214, %v170
  %v216 = vadd.f32 %v215, %v172
  %v217 = vadd.f32 %v216, %v175
  %v218 = vadd.f32 %v217, %v177
  %v219 = vadd.f32 %v218, %v180
  %v220 = vadd.f32 %v219, %v182
  %v221 = vadd.f32 %v220, %v185
  %v222 = vadd.f32 %v221, %v187
  %v223 = vadd.f32 %v222, %v190
  %v224 = vadd.f32 %v223, %v192
  %v225 = vrot.slane %v224, 4
  %v226 = vadd.f32 %v224, %v225
  %v227 = vrot.slane %v226, 2
  %v228 = vadd.f32 %v226, %v227
  %v229 = vrot.slane %v228, 1
  %v230 = vadd.f32 %v228, %v229
  %v231 = vadd.f32 %v230, 0.0
  %v232 = vmul.f32 %v155, %v155
  %v233 = vmul.f32 %v157, %v157
  %v234 = vmul.f32 %v160, %v160
  %v235 = vmul.f32 %v162, %v162
  %v236 = vmul.f32 %v165, %v165
  %v237 = vmul.f32 %v167, %v167
  %v238 = vmul.f32 %v170, %v170
  %v239 = vmul.f32 %v172, %v172
  %v240 = vmul.f32 %v175, %v175
  %v241 = vmul.f32 %v177, %v177
  %v242 = vmul.f32 %v180, %v180
  %v243 = vmul.f32 %v182, %v182
  %v244 = vmul.f32 %v185, %v185
  %v245 = vmul.f32 %v187, %v187
  %v246 = vmul.f32 %v190, %v190
  %v247 = vmul.f32 %v192, %v192
  %v248 = vadd.f32 %v232, %v233
  %v249 = vadd.f32 %v248, %v234
  %v250 = vadd.f32 %v249, %v235
  %v251 = vadd.f32 %v250, %v236
  %v252 = vadd.f32 %v251, %v237
  %v253 = vadd.f32 %v252, %v238
  %v254 = vadd.f32 %v253, %v239
  %v255 = vadd.f32 %v254, %v240
  %v256 = vadd.f32 %v255, %v241
  %v257 = vadd.f32 %v256, %v242
  %v258 = vadd.f32 %v257, %v243
  %v259 = vadd.f32 %v258, %v244
  %v260 = vadd.f32 %v259, %v245
  %v261 = vadd.f32 %v260, %v246
  %v262 = vadd.f32 %v261, %v247
  %v263 = vrot.slane %v262, 4
  %v264 = vadd.f32 %v262, %v263
  %v265 = vrot.slane %v264, 2
  %v266 = vadd.f32 %v264, %v265
  %v267 = vrot.slane %v266, 1
  %v268 = vadd.f32 %v266, %v267
  %v269 = vadd.f32 %v268, 0.0
  %v270 = vld [vmem:[%s0 + $0x40] sm:$0xf]
  %v271 = vld [vmem:[%s0 + $0x44] sm:$0xf]
  %v272 = vld [vmem:[%s0 + $0x48] sm:$0xf]
  %v273 = vld [vmem:[%s0 + $0x4c] sm:$0xf]
  %v274 = vld [vmem:[%s0 + $0x50] sm:$0xf]
  %v275 = vld [vmem:[%s0 + $0x54] sm:$0xf]
  %v276 = vld [vmem:[%s0 + $0x58] sm:$0xf]
  %v277 = vld [vmem:[%s0 + $0x5c] sm:$0xf]
  %v278 = vld [vmem:[%s0 + $0x60] sm:$0xf]
  %v279 = vld [vmem:[%s0 + $0x64] sm:$0xf]
  %v280 = vld [vmem:[%s0 + $0x68] sm:$0xf]
  %v281 = vld [vmem:[%s0 + $0x6c] sm:$0xf]
  %v282 = vld [vmem:[%s0 + $0x70] sm:$0xf]
  %v283 = vld [vmem:[%s0 + $0x74] sm:$0xf]
  %v284 = vld [vmem:[%s0 + $0x78] sm:$0xf]
  %v285 = vld [vmem:[%s0 + $0x7c] sm:$0xf]
  %v286 = vld [vmem:[%s1] sm:$0xf]
  %v287 = vld [vmem:[%s1 + $0x4] sm:$0xf]
  %v288 = vld [vmem:[%s1 + $0x8] sm:$0xf]
  %v289 = vld [vmem:[%s1 + $0xc] sm:$0xf]
  %v290 = vld [vmem:[%s1 + $0x10] sm:$0xf]
  %v291 = vld [vmem:[%s1 + $0x14] sm:$0xf]
  %v292 = vld [vmem:[%s1 + $0x18] sm:$0xf]
  %v293 = vld [vmem:[%s1 + $0x1c] sm:$0xf]
  %v294 = vld [vmem:[%s1 + $0x20] sm:$0xf]
  %v295 = vld [vmem:[%s1 + $0x24] sm:$0xf]
  %v296 = vld [vmem:[%s1 + $0x28] sm:$0xf]
  %v297 = vld [vmem:[%s1 + $0x2c] sm:$0xf]
  %v298 = vld [vmem:[%s1 + $0x30] sm:$0xf]
  %v299 = vld [vmem:[%s1 + $0x34] sm:$0xf]
  %v300 = vld [vmem:[%s1 + $0x38] sm:$0xf]
  %v301 = vld [vmem:[%s1 + $0x3c] sm:$0xf]
  %v318 = vunpack.c.l.b16 %v270
  %v319 = vunpack.c.l.b16 %v271
  %v320 = vunpack.c.l.b16 %v272
  %v321 = vunpack.c.l.b16 %v273
  %v322 = vunpack.c.l.b16 %v274
  %v323 = vunpack.c.l.b16 %v275
  %v324 = vunpack.c.l.b16 %v276
  %v325 = vunpack.c.l.b16 %v277
  %v326 = vunpack.c.l.b16 %v278
  %v327 = vunpack.c.l.b16 %v279
  %v328 = vunpack.c.l.b16 %v280
  %v329 = vunpack.c.l.b16 %v281
  %v330 = vunpack.c.l.b16 %v282
  %v331 = vunpack.c.l.b16 %v283
  %v332 = vunpack.c.l.b16 %v284
  %v333 = vunpack.c.l.b16 %v285
  %v334 = vpack.c.b16 %v319, %v318
  %v335 = vpack.c.b16 %v321, %v320
  %v336 = vpack.c.b16 %v323, %v322
  %v337 = vpack.c.b16 %v325, %v324
  %v338 = vpack.c.b16 %v327, %v326
  %v339 = vpack.c.b16 %v329, %v328
  %v340 = vpack.c.b16 %v331, %v330
  %v341 = vpack.c.b16 %v333, %v332
  %v366 = vunpack.c.l.b16 %v286
  %v367 = vunpack.c.l.b16 %v287
  %v368 = vunpack.c.l.b16 %v288
  %v369 = vunpack.c.l.b16 %v289
  %v370 = vunpack.c.l.b16 %v290
  %v371 = vunpack.c.l.b16 %v291
  %v372 = vunpack.c.l.b16 %v292
  %v373 = vunpack.c.l.b16 %v293
  %v374 = vunpack.c.l.b16 %v294
  %v375 = vunpack.c.l.b16 %v295
  %v376 = vunpack.c.l.b16 %v296
  %v377 = vunpack.c.l.b16 %v297
  %v378 = vunpack.c.l.b16 %v298
  %v379 = vunpack.c.l.b16 %v299
  %v380 = vunpack.c.l.b16 %v300
  %v381 = vunpack.c.l.b16 %v301
  %v382 = vpack.c.b16 %v367, %v366
  %v383 = vpack.c.b16 %v369, %v368
  %v384 = vpack.c.b16 %v371, %v370
  %v385 = vpack.c.b16 %v373, %v372
  %v386 = vpack.c.b16 %v375, %v374
  %v387 = vpack.c.b16 %v377, %v376
  %v388 = vpack.c.b16 %v379, %v378
  %v389 = vpack.c.b16 %v381, %v380
  %398 = vmatpush.bf16.msra.mxu0 %v389
  %399 = vmatpush.bf16.msra.mxu0 %v388
  %400 = vmatpush.bf16.msra.mxu0 %v387
  %401 = vmatpush.bf16.msra.mxu0 %v386
  %402 = vmatpush.bf16.msra.mxu0 %v385
  %403 = vmatpush.bf16.msra.mxu0 %v384
  %404 = vmatpush.bf16.msra.mxu0 %v383
  %405 = vmatpush.bf16.msra.mxu0 %v382
  %406 = vmatmul.bf16.gmra.mxu0 %v334
  %v407 = vpop.f32.mrf.mxu0
  %v408 = vadd.f32 0.0, %v407
  %v409 = vpop.f32.mrf.mxu0
  %v410 = vadd.f32 0.0, %v409
  %411 = vmatmul.bf16.gmra.mxu0 %v335
  %v412 = vpop.f32.mrf.mxu0
  %v413 = vadd.f32 0.0, %v412
  %v414 = vpop.f32.mrf.mxu0
  %v415 = vadd.f32 0.0, %v414
  %416 = vmatmul.bf16.gmra.mxu0 %v336
  %v417 = vpop.f32.mrf.mxu0
  %v418 = vadd.f32 0.0, %v417
  %v419 = vpop.f32.mrf.mxu0
  %v420 = vadd.f32 0.0, %v419
  %421 = vmatmul.bf16.gmra.mxu0 %v337
  %v422 = vpop.f32.mrf.mxu0
  %v423 = vadd.f32 0.0, %v422
  %v424 = vpop.f32.mrf.mxu0
  %v425 = vadd.f32 0.0, %v424
  %426 = vmatmul.bf16.gmra.mxu0 %v338
  %v427 = vpop.f32.mrf.mxu0
  %v428 = vadd.f32 0.0, %v427
  %v429 = vpop.f32.mrf.mxu0
  %v430 = vadd.f32 0.0, %v429
  %431 = vmatmul.bf16.gmra.mxu0 %v339
  %v432 = vpop.f32.mrf.mxu0
  %v433 = vadd.f32 0.0, %v432
  %v434 = vpop.f32.mrf.mxu0
  %v435 = vadd.f32 0.0, %v434
  %436 = vmatmul.bf16.gmra.mxu0 %v340
  %v437 = vpop.f32.mrf.mxu0
  %v438 = vadd.f32 0.0, %v437
  %v439 = vpop.f32.mrf.mxu0
  %v440 = vadd.f32 0.0, %v439
  %441 = vmatmul.bf16.gmra.mxu0 %v341
  %v442 = vpop.f32.mrf.mxu0
  %v443 = vadd.f32 0.0, %v442
  %v444 = vpop.f32.mrf.mxu0
  %v445 = vadd.f32 0.0, %v444
  %446 = vdwg.mxu0
  %447 = vst [vmem:[#allocation2 + $0x80] sm:$0xff] %v408
  %448 = vst [vmem:[#allocation2 + $0x88] sm:$0xff] %v410
  %449 = vst [vmem:[#allocation2 + $0x90] sm:$0xff] %v413
  %450 = vst [vmem:[#allocation2 + $0x98] sm:$0xff] %v415
  %451 = vst [vmem:[#allocation2 + $0xa0] sm:$0xff] %v418
  %452 = vst [vmem:[#allocation2 + $0xa8] sm:$0xff] %v420
  %453 = vst [vmem:[#allocation2 + $0xb0] sm:$0xff] %v423
  %454 = vst [vmem:[#allocation2 + $0xb8] sm:$0xff] %v425
  %455 = vst [vmem:[#allocation2 + $0xc0] sm:$0xff] %v428
  %456 = vst [vmem:[#allocation2 + $0xc8] sm:$0xff] %v430
  %457 = vst [vmem:[#allocation2 + $0xd0] sm:$0xff] %v433
  %458 = vst [vmem:[#allocation2 + $0xd8] sm:$0xff] %v435
  %459 = vst [vmem:[#allocation2 + $0xe0] sm:$0xff] %v438
  %460 = vst [vmem:[#allocation2 + $0xe8] sm:$0xff] %v440
  %461 = vst [vmem:[#allocation2 + $0xf0] sm:$0xff] %v443
  %462 = vst [vmem:[#allocation2 + $0xf8] sm:$0xff] %v445
  %v463 = vadd.f32 %v408, %v410
  %v464 = vadd.f32 %v463, %v413
  %v465 = vadd.f32 %v464, %v415
  %v466 = vadd.f32 %v465, %v418
  %v467 = vadd.f32 %v466, %v420
  %v468 = vadd.f32 %v467, %v423
  %v469 = vadd.f32 %v468, %v425
  %v470 = vadd.f32 %v469, %v428
  %v471 = vadd.f32 %v470, %v430
  %v472 = vadd.f32 %v471, %v433
  %v473 = vadd.f32 %v472, %v435
  %v474 = vadd.f32 %v473, %v438
  %v475 = vadd.f32 %v474, %v440
  %v476 = vadd.f32 %v475, %v443
  %v477 = vadd.f32 %v476, %v445
  %v478 = vrot.slane %v477, 4
  %v479 = vadd.f32 %v477, %v478
  %v480 = vrot.slane %v479, 2
  %v481 = vadd.f32 %v479, %v480
  %v482 = vrot.slane %v481, 1
  %v483 = vadd.f32 %v481, %v482
  %v484 = vadd.f32 %v231, %v483
  %v485 = vmul.f32 %v408, %v408
  %v486 = vmul.f32 %v410, %v410
  %v487 = vmul.f32 %v413, %v413
  %v488 = vmul.f32 %v415, %v415
  %v489 = vmul.f32 %v418, %v418
  %v490 = vmul.f32 %v420, %v420
  %v491 = vmul.f32 %v423, %v423
  %v492 = vmul.f32 %v425, %v425
  %v493 = vmul.f32 %v428, %v428
  %v494 = vmul.f32 %v430, %v430
  %v495 = vmul.f32 %v433, %v433
  %v496 = vmul.f32 %v435, %v435
  %v497 = vmul.f32 %v438, %v438
  %v498 = vmul.f32 %v440, %v440
  %v499 = vmul.f32 %v443, %v443
  %v500 = vmul.f32 %v445, %v445
  %v501 = vadd.f32 %v485, %v486
  %v502 = vadd.f32 %v501, %v487
  %v503 = vadd.f32 %v502, %v488
  %v504 = vadd.f32 %v503, %v489
  %v505 = vadd.f32 %v504, %v490
  %v506 = vadd.f32 %v505, %v491
  %v507 = vadd.f32 %v506, %v492
  %v508 = vadd.f32 %v507, %v493
  %v509 = vadd.f32 %v508, %v494
  %v510 = vadd.f32 %v509, %v495
  %v511 = vadd.f32 %v510, %v496
  %v512 = vadd.f32 %v511, %v497
  %v513 = vadd.f32 %v512, %v498
  %v514 = vadd.f32 %v513, %v499
  %v515 = vadd.f32 %v514, %v500
  %v516 = vrot.slane %v515, 4
  %v517 = vadd.f32 %v515, %v516
  %v518 = vrot.slane %v517, 2
  %v519 = vadd.f32 %v517, %v518
  %v520 = vrot.slane %v519, 1
  %v521 = vadd.f32 %v519, %v520
  %v522 = vadd.f32 %v269, %v521
  %v523 = vld [vmem:[%s0 + $0x80] sm:$0xf]
  %v524 = vld [vmem:[%s0 + $0x84] sm:$0xf]
  %v525 = vld [vmem:[%s0 + $0x88] sm:$0xf]
  %v526 = vld [vmem:[%s0 + $0x8c] sm:$0xf]
  %v527 = vld [vmem:[%s0 + $0x90] sm:$0xf]
  %v528 = vld [vmem:[%s0 + $0x94] sm:$0xf]
  %v529 = vld [vmem:[%s0 + $0x98] sm:$0xf]
  %v530 = vld [vmem:[%s0 + $0x9c] sm:$0xf]
  %v531 = vld [vmem:[%s0 + $0xa0] sm:$0xf]
  %v532 = vld [vmem:[%s0 + $0xa4] sm:$0xf]
  %v533 = vld [vmem:[%s0 + $0xa8] sm:$0xf]
  %v534 = vld [vmem:[%s0 + $0xac] sm:$0xf]
  %v535 = vld [vmem:[%s0 + $0xb0] sm:$0xf]
  %v536 = vld [vmem:[%s0 + $0xb4] sm:$0xf]
  %v537 = vld [vmem:[%s0 + $0xb8] sm:$0xf]
  %v538 = vld [vmem:[%s0 + $0xbc] sm:$0xf]
  %v539 = vld [vmem:[%s1] sm:$0xf]
  %v540 = vld [vmem:[%s1 + $0x4] sm:$0xf]
  %v541 = vld [vmem:[%s1 + $0x8] sm:$0xf]
  %v542 = vld [vmem:[%s1 + $0xc] sm:$0xf]
  %v543 = vld [vmem:[%s1 + $0x10] sm:$0xf]
  %v544 = vld [vmem:[%s1 + $0x14] sm:$0xf]
  %v545 = vld [vmem:[%s1 + $0x18] sm:$0xf]
  %v546 = vld [vmem:[%s1 + $0x1c] sm:$0xf]
  %v547 = vld [vmem:[%s1 + $0x20] sm:$0xf]
  %v548 = vld [vmem:[%s1 + $0x24] sm:$0xf]
  %v549 = vld [vmem:[%s1 + $0x28] sm:$0xf]
  %v550 = vld [vmem:[%s1 + $0x2c] sm:$0xf]
  %v551 = vld [vmem:[%s1 + $0x30] sm:$0xf]
  %v552 = vld [vmem:[%s1 + $0x34] sm:$0xf]
  %v553 = vld [vmem:[%s1 + $0x38] sm:$0xf]
  %v554 = vld [vmem:[%s1 + $0x3c] sm:$0xf]
  %v571 = vunpack.c.l.b16 %v523
  %v572 = vunpack.c.l.b16 %v524
  %v573 = vunpack.c.l.b16 %v525
  %v574 = vunpack.c.l.b16 %v526
  %v575 = vunpack.c.l.b16 %v527
  %v576 = vunpack.c.l.b16 %v528
  %v577 = vunpack.c.l.b16 %v529
  %v578 = vunpack.c.l.b16 %v530
  %v579 = vunpack.c.l.b16 %v531
  %v580 = vunpack.c.l.b16 %v532
  %v581 = vunpack.c.l.b16 %v533
  %v582 = vunpack.c.l.b16 %v534
  %v583 = vunpack.c.l.b16 %v535
  %v584 = vunpack.c.l.b16 %v536
  %v585 = vunpack.c.l.b16 %v537
  %v586 = vunpack.c.l.b16 %v538
  %v587 = vpack.c.b16 %v572, %v571
  %v588 = vpack.c.b16 %v574, %v573
  %v589 = vpack.c.b16 %v576, %v575
  %v590 = vpack.c.b16 %v578, %v577
  %v591 = vpack.c.b16 %v580, %v579
  %v592 = vpack.c.b16 %v582, %v581
  %v593 = vpack.c.b16 %v584, %v583
  %v594 = vpack.c.b16 %v586, %v585
  %v619 = vunpack.c.l.b16 %v539
  %v620 = vunpack.c.l.b16 %v540
  %v621 = vunpack.c.l.b16 %v541
  %v622 = vunpack.c.l.b16 %v542
  %v623 = vunpack.c.l.b16 %v543
  %v624 = vunpack.c.l.b16 %v544
  %v625 = vunpack.c.l.b16 %v545
  %v626 = vunpack.c.l.b16 %v546
  %v627 = vunpack.c.l.b16 %v547
  %v628 = vunpack.c.l.b16 %v548
  %v629 = vunpack.c.l.b16 %v549
  %v630 = vunpack.c.l.b16 %v550
  %v631 = vunpack.c.l.b16 %v551
  %v632 = vunpack.c.l.b16 %v552
  %v633 = vunpack.c.l.b16 %v553
  %v634 = vunpack.c.l.b16 %v554
  %v635 = vpack.c.b16 %v620, %v619
  %v636 = vpack.c.b16 %v622, %v621
  %v637 = vpack.c.b16 %v624, %v623
  %v638 = vpack.c.b16 %v626, %v625
  %v639 = vpack.c.b16 %v628, %v627
  %v640 = vpack.c.b16 %v630, %v629
  %v641 = vpack.c.b16 %v632, %v631
  %v642 = vpack.c.b16 %v634, %v633
  %651 = vmatpush.bf16.msra.mxu0 %v642
  %652 = vmatpush.bf16.msra.mxu0 %v641
  %653 = vmatpush.bf16.msra.mxu0 %v640
  %654 = vmatpush.bf16.msra.mxu0 %v639
  %655 = vmatpush.bf16.msra.mxu0 %v638
  %656 = vmatpush.bf16.msra.mxu0 %v637
  %657 = vmatpush.bf16.msra.mxu0 %v636
  %658 = vmatpush.bf16.msra.mxu0 %v635
  %659 = vmatmul.bf16.gmra.mxu0 %v587
  %v660 = vpop.f32.mrf.mxu0
  %v661 = vadd.f32 0.0, %v660
  %v662 = vpop.f32.mrf.mxu0
  %v663 = vadd.f32 0.0, %v662
  %664 = vmatmul.bf16.gmra.mxu0 %v588
  %v665 = vpop.f32.mrf.mxu0
  %v666 = vadd.f32 0.0, %v665
  %v667 = vpop.f32.mrf.mxu0
  %v668 = vadd.f32 0.0, %v667
  %669 = vmatmul.bf16.gmra.mxu0 %v589
  %v670 = vpop.f32.mrf.mxu0
  %v671 = vadd.f32 0.0, %v670
  %v672 = vpop.f32.mrf.mxu0
  %v673 = vadd.f32 0.0, %v672
  %674 = vmatmul.bf16.gmra.mxu0 %v590
  %v675 = vpop.f32.mrf.mxu0
  %v676 = vadd.f32 0.0, %v675
  %v677 = vpop.f32.mrf.mxu0
  %v678 = vadd.f32 0.0, %v677
  %679 = vmatmul.bf16.gmra.mxu0 %v591
  %v680 = vpop.f32.mrf.mxu0
  %v681 = vadd.f32 0.0, %v680
  %v682 = vpop.f32.mrf.mxu0
  %v683 = vadd.f32 0.0, %v682
  %684 = vmatmul.bf16.gmra.mxu0 %v592
  %v685 = vpop.f32.mrf.mxu0
  %v686 = vadd.f32 0.0, %v685
  %v687 = vpop.f32.mrf.mxu0
  %v688 = vadd.f32 0.0, %v687
  %689 = vmatmul.bf16.gmra.mxu0 %v593
  %v690 = vpop.f32.mrf.mxu0
  %v691 = vadd.f32 0.0, %v690
  %v692 = vpop.f32.mrf.mxu0
  %v693 = vadd.f32 0.0, %v692
  %694 = vmatmul.bf16.gmra.mxu0 %v594
  %v695 = vpop.f32.mrf.mxu0
  %v696 = vadd.f32 0.0, %v695
  %v697 = vpop.f32.mrf.mxu0
  %v698 = vadd.f32 0.0, %v697
  %699 = vdwg.mxu0
  %700 = vst [vmem:[#allocation2 + $0x100] sm:$0xff] %v661
  %701 = vst [vmem:[#allocation2 + $0x108] sm:$0xff] %v663
  %702 = vst [vmem:[#allocation2 + $0x110] sm:$0xff] %v666
  %703 = vst [vmem:[#allocation2 + $0x118] sm:$0xff] %v668
  %704 = vst [vmem:[#allocation2 + $0x120] sm:$0xff] %v671
  %705 = vst [vmem:[#allocation2 + $0x128] sm:$0xff] %v673
  %706 = vst [vmem:[#allocation2 + $0x130] sm:$0xff] %v676
  %707 = vst [vmem:[#allocation2 + $0x138] sm:$0xff] %v678
  %708 = vst [vmem:[#allocation2 + $0x140] sm:$0xff] %v681
  %709 = vst [vmem:[#allocation2 + $0x148] sm:$0xff] %v683
  %710 = vst [vmem:[#allocation2 + $0x150] sm:$0xff] %v686
  %711 = vst [vmem:[#allocation2 + $0x158] sm:$0xff] %v688
  %712 = vst [vmem:[#allocation2 + $0x160] sm:$0xff] %v691
  %713 = vst [vmem:[#allocation2 + $0x168] sm:$0xff] %v693
  %714 = vst [vmem:[#allocation2 + $0x170] sm:$0xff] %v696
  %715 = vst [vmem:[#allocation2 + $0x178] sm:$0xff] %v698
  %v716 = vadd.f32 %v661, %v663
  %v717 = vadd.f32 %v716, %v666
  %v718 = vadd.f32 %v717, %v668
  %v719 = vadd.f32 %v718, %v671
  %v720 = vadd.f32 %v719, %v673
  %v721 = vadd.f32 %v720, %v676
  %v722 = vadd.f32 %v721, %v678
  %v723 = vadd.f32 %v722, %v681
  %v724 = vadd.f32 %v723, %v683
  %v725 = vadd.f32 %v724, %v686
  %v726 = vadd.f32 %v725, %v688
  %v727 = vadd.f32 %v726, %v691
  %v728 = vadd.f32 %v727, %v693
  %v729 = vadd.f32 %v728, %v696
  %v730 = vadd.f32 %v729, %v698
  %v731 = vrot.slane %v730, 4
  %v732 = vadd.f32 %v730, %v731
  %v733 = vrot.slane %v732, 2
  %v734 = vadd.f32 %v732, %v733
  %v735 = vrot.slane %v734, 1
  %v736 = vadd.f32 %v734, %v735
  %v737 = vadd.f32 %v484, %v736
  %v738 = vmul.f32 %v661, %v661
  %v739 = vmul.f32 %v663, %v663
  %v740 = vmul.f32 %v666, %v666
  %v741 = vmul.f32 %v668, %v668
  %v742 = vmul.f32 %v671, %v671
  %v743 = vmul.f32 %v673, %v673
  %v744 = vmul.f32 %v676, %v676
  %v745 = vmul.f32 %v678, %v678
  %v746 = vmul.f32 %v681, %v681
  %v747 = vmul.f32 %v683, %v683
  %v748 = vmul.f32 %v686, %v686
  %v749 = vmul.f32 %v688, %v688
  %v750 = vmul.f32 %v691, %v691
  %v751 = vmul.f32 %v693, %v693
  %v752 = vmul.f32 %v696, %v696
  %v753 = vmul.f32 %v698, %v698
  %v754 = vadd.f32 %v738, %v739
  %v755 = vadd.f32 %v754, %v740
  %v756 = vadd.f32 %v755, %v741
  %v757 = vadd.f32 %v756, %v742
  %v758 = vadd.f32 %v757, %v743
  %v759 = vadd.f32 %v758, %v744
  %v760 = vadd.f32 %v759, %v745
  %v761 = vadd.f32 %v760, %v746
  %v762 = vadd.f32 %v761, %v747
  %v763 = vadd.f32 %v762, %v748
  %v764 = vadd.f32 %v763, %v749
  %v765 = vadd.f32 %v764, %v750
  %v766 = vadd.f32 %v765, %v751
  %v767 = vadd.f32 %v766, %v752
  %v768 = vadd.f32 %v767, %v753
  %v769 = vrot.slane %v768, 4
  %v770 = vadd.f32 %v768, %v769
  %v771 = vrot.slane %v770, 2
  %v772 = vadd.f32 %v770, %v771
  %v773 = vrot.slane %v772, 1
  %v774 = vadd.f32 %v772, %v773
  %v775 = vadd.f32 %v522, %v774
  %v776 = vld [vmem:[%s0 + $0xc0] sm:$0xf]
  %v777 = vld [vmem:[%s0 + $0xc4] sm:$0xf]
  %v778 = vld [vmem:[%s0 + $0xc8] sm:$0xf]
  %v779 = vld [vmem:[%s0 + $0xcc] sm:$0xf]
  %v780 = vld [vmem:[%s0 + $0xd0] sm:$0xf]
  %v781 = vld [vmem:[%s0 + $0xd4] sm:$0xf]
  %v782 = vld [vmem:[%s0 + $0xd8] sm:$0xf]
  %v783 = vld [vmem:[%s0 + $0xdc] sm:$0xf]
  %v784 = vld [vmem:[%s0 + $0xe0] sm:$0xf]
  %v785 = vld [vmem:[%s0 + $0xe4] sm:$0xf]
  %v786 = vld [vmem:[%s0 + $0xe8] sm:$0xf]
  %v787 = vld [vmem:[%s0 + $0xec] sm:$0xf]
  %v788 = vld [vmem:[%s0 + $0xf0] sm:$0xf]
  %v789 = vld [vmem:[%s0 + $0xf4] sm:$0xf]
  %v790 = vld [vmem:[%s0 + $0xf8] sm:$0xf]
  %v791 = vld [vmem:[%s0 + $0xfc] sm:$0xf]
  %v792 = vld [vmem:[%s1] sm:$0xf]
  %v793 = vld [vmem:[%s1 + $0x4] sm:$0xf]
  %v794 = vld [vmem:[%s1 + $0x8] sm:$0xf]
  %v795 = vld [vmem:[%s1 + $0xc] sm:$0xf]
  %v796 = vld [vmem:[%s1 + $0x10] sm:$0xf]
  %v797 = vld [vmem:[%s1 + $0x14] sm:$0xf]
  %v798 = vld [vmem:[%s1 + $0x18] sm:$0xf]
  %v799 = vld [vmem:[%s1 + $0x1c] sm:$0xf]
  %v800 = vld [vmem:[%s1 + $0x20] sm:$0xf]
  %v801 = vld [vmem:[%s1 + $0x24] sm:$0xf]
  %v802 = vld [vmem:[%s1 + $0x28] sm:$0xf]
  %v803 = vld [vmem:[%s1 + $0x2c] sm:$0xf]
  %v804 = vld [vmem:[%s1 + $0x30] sm:$0xf]
  %v805 = vld [vmem:[%s1 + $0x34] sm:$0xf]
  %v806 = vld [vmem:[%s1 + $0x38] sm:$0xf]
  %v807 = vld [vmem:[%s1 + $0x3c] sm:$0xf]
  %v824 = vunpack.c.l.b16 %v776
  %v825 = vunpack.c.l.b16 %v777
  %v826 = vunpack.c.l.b16 %v778
  %v827 = vunpack.c.l.b16 %v779
  %v828 = vunpack.c.l.b16 %v780
  %v829 = vunpack.c.l.b16 %v781
  %v830 = vunpack.c.l.b16 %v782
  %v831 = vunpack.c.l.b16 %v783
  %v832 = vunpack.c.l.b16 %v784
  %v833 = vunpack.c.l.b16 %v785
  %v834 = vunpack.c.l.b16 %v786
  %v835 = vunpack.c.l.b16 %v787
  %v836 = vunpack.c.l.b16 %v788
  %v837 = vunpack.c.l.b16 %v789
  %v838 = vunpack.c.l.b16 %v790
  %v839 = vunpack.c.l.b16 %v791
  %v840 = vpack.c.b16 %v825, %v824
  %v841 = vpack.c.b16 %v827, %v826
  %v842 = vpack.c.b16 %v829, %v828
  %v843 = vpack.c.b16 %v831, %v830
  %v844 = vpack.c.b16 %v833, %v832
  %v845 = vpack.c.b16 %v835, %v834
  %v846 = vpack.c.b16 %v837, %v836
  %v847 = vpack.c.b16 %v839, %v838
  %v872 = vunpack.c.l.b16 %v792
  %v873 = vunpack.c.l.b16 %v793
  %v874 = vunpack.c.l.b16 %v794
  %v875 = vunpack.c.l.b16 %v795
  %v876 = vunpack.c.l.b16 %v796
  %v877 = vunpack.c.l.b16 %v797
  %v878 = vunpack.c.l.b16 %v798
  %v879 = vunpack.c.l.b16 %v799
  %v880 = vunpack.c.l.b16 %v800
  %v881 = vunpack.c.l.b16 %v801
  %v882 = vunpack.c.l.b16 %v802
  %v883 = vunpack.c.l.b16 %v803
  %v884 = vunpack.c.l.b16 %v804
  %v885 = vunpack.c.l.b16 %v805
  %v886 = vunpack.c.l.b16 %v806
  %v887 = vunpack.c.l.b16 %v807
  %v888 = vpack.c.b16 %v873, %v872
  %v889 = vpack.c.b16 %v875, %v874
  %v890 = vpack.c.b16 %v877, %v876
  %v891 = vpack.c.b16 %v879, %v878
  %v892 = vpack.c.b16 %v881, %v880
  %v893 = vpack.c.b16 %v883, %v882
  %v894 = vpack.c.b16 %v885, %v884
  %v895 = vpack.c.b16 %v887, %v886
  %904 = vmatpush.bf16.msra.mxu0 %v895
  %905 = vmatpush.bf16.msra.mxu0 %v894
  %906 = vmatpush.bf16.msra.mxu0 %v893
  %907 = vmatpush.bf16.msra.mxu0 %v892
  %908 = vmatpush.bf16.msra.mxu0 %v891
  %909 = vmatpush.bf16.msra.mxu0 %v890
  %910 = vmatpush.bf16.msra.mxu0 %v889
  %911 = vmatpush.bf16.msra.mxu0 %v888
  %912 = vmatmul.bf16.gmra.mxu0 %v840
  %v913 = vpop.f32.mrf.mxu0
  %v914 = vadd.f32 0.0, %v913
  %v915 = vpop.f32.mrf.mxu0
  %v916 = vadd.f32 0.0, %v915
  %917 = vmatmul.bf16.gmra.mxu0 %v841
  %v918 = vpop.f32.mrf.mxu0
  %v919 = vadd.f32 0.0, %v918
  %v920 = vpop.f32.mrf.mxu0
  %v921 = vadd.f32 0.0, %v920
  %922 = vmatmul.bf16.gmra.mxu0 %v842
  %v923 = vpop.f32.mrf.mxu0
  %v924 = vadd.f32 0.0, %v923
  %v925 = vpop.f32.mrf.mxu0
  %v926 = vadd.f32 0.0, %v925
  %927 = vmatmul.bf16.gmra.mxu0 %v843
  %v928 = vpop.f32.mrf.mxu0
  %v929 = vadd.f32 0.0, %v928
  %v930 = vpop.f32.mrf.mxu0
  %v931 = vadd.f32 0.0, %v930
  %932 = vmatmul.bf16.gmra.mxu0 %v844
  %v933 = vpop.f32.mrf.mxu0
  %v934 = vadd.f32 0.0, %v933
  %v935 = vpop.f32.mrf.mxu0
  %v936 = vadd.f32 0.0, %v935
  %937 = vmatmul.bf16.gmra.mxu0 %v845
  %v938 = vpop.f32.mrf.mxu0
  %v939 = vadd.f32 0.0, %v938
  %v940 = vpop.f32.mrf.mxu0
  %v941 = vadd.f32 0.0, %v940
  %942 = vmatmul.bf16.gmra.mxu0 %v846
  %v943 = vpop.f32.mrf.mxu0
  %v944 = vadd.f32 0.0, %v943
  %v945 = vpop.f32.mrf.mxu0
  %v946 = vadd.f32 0.0, %v945
  %947 = vmatmul.bf16.gmra.mxu0 %v847
  %v948 = vpop.f32.mrf.mxu0
  %v949 = vadd.f32 0.0, %v948
  %v950 = vpop.f32.mrf.mxu0
  %v951 = vadd.f32 0.0, %v950
  %952 = vdwg.mxu0
  %953 = vst [vmem:[#allocation2 + $0x180] sm:$0xff] %v914
  %954 = vst [vmem:[#allocation2 + $0x188] sm:$0xff] %v916
  %955 = vst [vmem:[#allocation2 + $0x190] sm:$0xff] %v919
  %956 = vst [vmem:[#allocation2 + $0x198] sm:$0xff] %v921
  %957 = vst [vmem:[#allocation2 + $0x1a0] sm:$0xff] %v924
  %958 = vst [vmem:[#allocation2 + $0x1a8] sm:$0xff] %v926
  %959 = vst [vmem:[#allocation2 + $0x1b0] sm:$0xff] %v929
  %960 = vst [vmem:[#allocation2 + $0x1b8] sm:$0xff] %v931
  %961 = vst [vmem:[#allocation2 + $0x1c0] sm:$0xff] %v934
  %962 = vst [vmem:[#allocation2 + $0x1c8] sm:$0xff] %v936
  %963 = vst [vmem:[#allocation2 + $0x1d0] sm:$0xff] %v939
  %964 = vst [vmem:[#allocation2 + $0x1d8] sm:$0xff] %v941
  %965 = vst [vmem:[#allocation2 + $0x1e0] sm:$0xff] %v944
  %966 = vst [vmem:[#allocation2 + $0x1e8] sm:$0xff] %v946
  %967 = vst [vmem:[#allocation2 + $0x1f0] sm:$0xff] %v949
  %968 = vst [vmem:[#allocation2 + $0x1f8] sm:$0xff] %v951
  %v969 = vadd.f32 %v914, %v916
  %v970 = vadd.f32 %v969, %v919
  %v971 = vadd.f32 %v970, %v921
  %v972 = vadd.f32 %v971, %v924
  %v973 = vadd.f32 %v972, %v926
  %v974 = vadd.f32 %v973, %v929
  %v975 = vadd.f32 %v974, %v931
  %v976 = vadd.f32 %v975, %v934
  %v977 = vadd.f32 %v976, %v936
  %v978 = vadd.f32 %v977, %v939
  %v979 = vadd.f32 %v978, %v941
  %v980 = vadd.f32 %v979, %v944
  %v981 = vadd.f32 %v980, %v946
  %v982 = vadd.f32 %v981, %v949
  %v983 = vadd.f32 %v982, %v951
  %v984 = vrot.slane %v983, 4
  %v985 = vadd.f32 %v983, %v984
  %v986 = vrot.slane %v985, 2
  %v987 = vadd.f32 %v985, %v986
  %v988 = vrot.slane %v987, 1
  %v989 = vadd.f32 %v987, %v988
  %v990 = vadd.f32 %v737, %v989
  %v991 = vmul.f32 %v914, %v914
  %v992 = vmul.f32 %v916, %v916
  %v993 = vmul.f32 %v919, %v919
  %v994 = vmul.f32 %v921, %v921
  %v995 = vmul.f32 %v924, %v924
  %v996 = vmul.f32 %v926, %v926
  %v997 = vmul.f32 %v929, %v929
  %v998 = vmul.f32 %v931, %v931
  %v999 = vmul.f32 %v934, %v934
  %v1000 = vmul.f32 %v936, %v936
  %v1001 = vmul.f32 %v939, %v939
  %v1002 = vmul.f32 %v941, %v941
  %v1003 = vmul.f32 %v944, %v944
  %v1004 = vmul.f32 %v946, %v946
  %v1005 = vmul.f32 %v949, %v949
  %v1006 = vmul.f32 %v951, %v951
  %v1007 = vadd.f32 %v991, %v992
  %v1008 = vadd.f32 %v1007, %v993
  %v1009 = vadd.f32 %v1008, %v994
  %v1010 = vadd.f32 %v1009, %v995
  %v1011 = vadd.f32 %v1010, %v996
  %v1012 = vadd.f32 %v1011, %v997
  %v1013 = vadd.f32 %v1012, %v998
  %v1014 = vadd.f32 %v1013, %v999
  %v1015 = vadd.f32 %v1014, %v1000
  %v1016 = vadd.f32 %v1015, %v1001
  %v1017 = vadd.f32 %v1016, %v1002
  %v1018 = vadd.f32 %v1017, %v1003
  %v1019 = vadd.f32 %v1018, %v1004
  %v1020 = vadd.f32 %v1019, %v1005
  %v1021 = vadd.f32 %v1020, %v1006
  %v1022 = vrot.slane %v1021, 4
  %v1023 = vadd.f32 %v1021, %v1022
  %v1024 = vrot.slane %v1023, 2
  %v1025 = vadd.f32 %v1023, %v1024
  %v1026 = vrot.slane %v1025, 1
  %v1027 = vadd.f32 %v1025, %v1026
  %v1028 = vadd.f32 %v775, %v1027
  %v1029 = vld [vmem:[%s0 + $0x100] sm:$0xf]
  %v1030 = vld [vmem:[%s0 + $0x104] sm:$0xf]
  %v1031 = vld [vmem:[%s0 + $0x108] sm:$0xf]
  %v1032 = vld [vmem:[%s0 + $0x10c] sm:$0xf]
  %v1033 = vld [vmem:[%s0 + $0x110] sm:$0xf]
  %v1034 = vld [vmem:[%s0 + $0x114] sm:$0xf]
  %v1035 = vld [vmem:[%s0 + $0x118] sm:$0xf]
  %v1036 = vld [vmem:[%s0 + $0x11c] sm:$0xf]
  %v1037 = vld [vmem:[%s0 + $0x120] sm:$0xf]
  %v1038 = vld [vmem:[%s0 + $0x124] sm:$0xf]
  %v1039 = vld [vmem:[%s0 + $0x128] sm:$0xf]
  %v1040 = vld [vmem:[%s0 + $0x12c] sm:$0xf]
  %v1041 = vld [vmem:[%s0 + $0x130] sm:$0xf]
  %v1042 = vld [vmem:[%s0 + $0x134] sm:$0xf]
  %v1043 = vld [vmem:[%s0 + $0x138] sm:$0xf]
  %v1044 = vld [vmem:[%s0 + $0x13c] sm:$0xf]
  %v1045 = vld [vmem:[%s1] sm:$0xf]
  %v1046 = vld [vmem:[%s1 + $0x4] sm:$0xf]
  %v1047 = vld [vmem:[%s1 + $0x8] sm:$0xf]
  %v1048 = vld [vmem:[%s1 + $0xc] sm:$0xf]
  %v1049 = vld [vmem:[%s1 + $0x10] sm:$0xf]
  %v1050 = vld [vmem:[%s1 + $0x14] sm:$0xf]
  %v1051 = vld [vmem:[%s1 + $0x18] sm:$0xf]
  %v1052 = vld [vmem:[%s1 + $0x1c] sm:$0xf]
  %v1053 = vld [vmem:[%s1 + $0x20] sm:$0xf]
  %v1054 = vld [vmem:[%s1 + $0x24] sm:$0xf]
  %v1055 = vld [vmem:[%s1 + $0x28] sm:$0xf]
  %v1056 = vld [vmem:[%s1 + $0x2c] sm:$0xf]
  %v1057 = vld [vmem:[%s1 + $0x30] sm:$0xf]
  %v1058 = vld [vmem:[%s1 + $0x34] sm:$0xf]
  %v1059 = vld [vmem:[%s1 + $0x38] sm:$0xf]
  %v1060 = vld [vmem:[%s1 + $0x3c] sm:$0xf]
  %v1077 = vunpack.c.l.b16 %v1029
  %v1078 = vunpack.c.l.b16 %v1030
  %v1079 = vunpack.c.l.b16 %v1031
  %v1080 = vunpack.c.l.b16 %v1032
  %v1081 = vunpack.c.l.b16 %v1033
  %v1082 = vunpack.c.l.b16 %v1034
  %v1083 = vunpack.c.l.b16 %v1035
  %v1084 = vunpack.c.l.b16 %v1036
  %v1085 = vunpack.c.l.b16 %v1037
  %v1086 = vunpack.c.l.b16 %v1038
  %v1087 = vunpack.c.l.b16 %v1039
  %v1088 = vunpack.c.l.b16 %v1040
  %v1089 = vunpack.c.l.b16 %v1041
  %v1090 = vunpack.c.l.b16 %v1042
  %v1091 = vunpack.c.l.b16 %v1043
  %v1092 = vunpack.c.l.b16 %v1044
  %v1093 = vpack.c.b16 %v1078, %v1077
  %v1094 = vpack.c.b16 %v1080, %v1079
  %v1095 = vpack.c.b16 %v1082, %v1081
  %v1096 = vpack.c.b16 %v1084, %v1083
  %v1097 = vpack.c.b16 %v1086, %v1085
  %v1098 = vpack.c.b16 %v1088, %v1087
  %v1099 = vpack.c.b16 %v1090, %v1089
  %v1100 = vpack.c.b16 %v1092, %v1091
  %v1125 = vunpack.c.l.b16 %v1045
  %v1126 = vunpack.c.l.b16 %v1046
  %v1127 = vunpack.c.l.b16 %v1047
  %v1128 = vunpack.c.l.b16 %v1048
  %v1129 = vunpack.c.l.b16 %v1049
  %v1130 = vunpack.c.l.b16 %v1050
  %v1131 = vunpack.c.l.b16 %v1051
  %v1132 = vunpack.c.l.b16 %v1052
  %v1133 = vunpack.c.l.b16 %v1053
  %v1134 = vunpack.c.l.b16 %v1054
  %v1135 = vunpack.c.l.b16 %v1055
  %v1136 = vunpack.c.l.b16 %v1056
  %v1137 = vunpack.c.l.b16 %v1057
  %v1138 = vunpack.c.l.b16 %v1058
  %v1139 = vunpack.c.l.b16 %v1059
  %v1140 = vunpack.c.l.b16 %v1060
  %v1141 = vpack.c.b16 %v1126, %v1125
  %v1142 = vpack.c.b16 %v1128, %v1127
  %v1143 = vpack.c.b16 %v1130, %v1129
  %v1144 = vpack.c.b16 %v1132, %v1131
  %v1145 = vpack.c.b16 %v1134, %v1133
  %v1146 = vpack.c.b16 %v1136, %v1135
  %v1147 = vpack.c.b16 %v1138, %v1137
  %v1148 = vpack.c.b16 %v1140, %v1139
  %1157 = vmatpush.bf16.msra.mxu0 %v1148
  %1158 = vmatpush.bf16.msra.mxu0 %v1147
  %1159 = vmatpush.bf16.msra.mxu0 %v1146
  %1160 = vmatpush.bf16.msra.mxu0 %v1145
  %1161 = vmatpush.bf16.msra.mxu0 %v1144
  %1162 = vmatpush.bf16.msra.mxu0 %v1143
  %1163 = vmatpush.bf16.msra.mxu0 %v1142
  %1164 = vmatpush.bf16.msra.mxu0 %v1141
  %1165 = vmatmul.bf16.gmra.mxu0 %v1093
  %v1166 = vpop.f32.mrf.mxu0
  %v1167 = vadd.f32 0.0, %v1166
  %v1168 = vpop.f32.mrf.mxu0
  %v1169 = vadd.f32 0.0, %v1168
  %1170 = vmatmul.bf16.gmra.mxu0 %v1094
  %v1171 = vpop.f32.mrf.mxu0
  %v1172 = vadd.f32 0.0, %v1171
  %v1173 = vpop.f32.mrf.mxu0
  %v1174 = vadd.f32 0.0, %v1173
  %1175 = vmatmul.bf16.gmra.mxu0 %v1095
  %v1176 = vpop.f32.mrf.mxu0
  %v1177 = vadd.f32 0.0, %v1176
  %v1178 = vpop.f32.mrf.mxu0
  %v1179 = vadd.f32 0.0, %v1178
  %1180 = vmatmul.bf16.gmra.mxu0 %v1096
  %v1181 = vpop.f32.mrf.mxu0
  %v1182 = vadd.f32 0.0, %v1181
  %v1183 = vpop.f32.mrf.mxu0
  %v1184 = vadd.f32 0.0, %v1183
  %1185 = vmatmul.bf16.gmra.mxu0 %v1097
  %v1186 = vpop.f32.mrf.mxu0
  %v1187 = vadd.f32 0.0, %v1186
  %v1188 = vpop.f32.mrf.mxu0
  %v1189 = vadd.f32 0.0, %v1188
  %1190 = vmatmul.bf16.gmra.mxu0 %v1098
  %v1191 = vpop.f32.mrf.mxu0
  %v1192 = vadd.f32 0.0, %v1191
  %v1193 = vpop.f32.mrf.mxu0
  %v1194 = vadd.f32 0.0, %v1193
  %1195 = vmatmul.bf16.gmra.mxu0 %v1099
  %v1196 = vpop.f32.mrf.mxu0
  %v1197 = vadd.f32 0.0, %v1196
  %v1198 = vpop.f32.mrf.mxu0
  %v1199 = vadd.f32 0.0, %v1198
  %1200 = vmatmul.bf16.gmra.mxu0 %v1100
  %v1201 = vpop.f32.mrf.mxu0
  %v1202 = vadd.f32 0.0, %v1201
  %v1203 = vpop.f32.mrf.mxu0
  %v1204 = vadd.f32 0.0, %v1203
  %1205 = vdwg.mxu0
  %1206 = vst [vmem:[#allocation2 + $0x200] sm:$0xff] %v1167
  %1207 = vst [vmem:[#allocation2 + $0x208] sm:$0xff] %v1169
  %1208 = vst [vmem:[#allocation2 + $0x210] sm:$0xff] %v1172
  %1209 = vst [vmem:[#allocation2 + $0x218] sm:$0xff] %v1174
  %1210 = vst [vmem:[#allocation2 + $0x220] sm:$0xff] %v1177
  %1211 = vst [vmem:[#allocation2 + $0x228] sm:$0xff] %v1179
  %1212 = vst [vmem:[#allocation2 + $0x230] sm:$0xff] %v1182
  %1213 = vst [vmem:[#allocation2 + $0x238] sm:$0xff] %v1184
  %1214 = vst [vmem:[#allocation2 + $0x240] sm:$0xff] %v1187
  %1215 = vst [vmem:[#allocation2 + $0x248] sm:$0xff] %v1189
  %1216 = vst [vmem:[#allocation2 + $0x250] sm:$0xff] %v1192
  %1217 = vst [vmem:[#allocation2 + $0x258] sm:$0xff] %v1194
  %1218 = vst [vmem:[#allocation2 + $0x260] sm:$0xff] %v1197
  %1219 = vst [vmem:[#allocation2 + $0x268] sm:$0xff] %v1199
  %1220 = vst [vmem:[#allocation2 + $0x270] sm:$0xff] %v1202
  %1221 = vst [vmem:[#allocation2 + $0x278] sm:$0xff] %v1204
  %v1222 = vadd.f32 %v1167, %v1169
  %v1223 = vadd.f32 %v1222, %v1172
  %v1224 = vadd.f32 %v1223, %v1174
  %v1225 = vadd.f32 %v1224, %v1177
  %v1226 = vadd.f32 %v1225, %v1179
  %v1227 = vadd.f32 %v1226, %v1182
  %v1228 = vadd.f32 %v1227, %v1184
  %v1229 = vadd.f32 %v1228, %v1187
  %v1230 = vadd.f32 %v1229, %v1189
  %v1231 = vadd.f32 %v1230, %v1192
  %v1232 = vadd.f32 %v1231, %v1194
  %v1233 = vadd.f32 %v1232, %v1197
  %v1234 = vadd.f32 %v1233, %v1199
  %v1235 = vadd.f32 %v1234, %v1202
  %v1236 = vadd.f32 %v1235, %v1204
  %v1237 = vrot.slane %v1236, 4
  %v1238 = vadd.f32 %v1236, %v1237
  %v1239 = vrot.slane %v1238, 2
  %v1240 = vadd.f32 %v1238, %v1239
  %v1241 = vrot.slane %v1240, 1
  %v1242 = vadd.f32 %v1240, %v1241
  %v1243 = vadd.f32 %v990, %v1242
  %v1244 = vmul.f32 %v1167, %v1167
  %v1245 = vmul.f32 %v1169, %v1169
  %v1246 = vmul.f32 %v1172, %v1172
  %v1247 = vmul.f32 %v1174, %v1174
  %v1248 = vmul.f32 %v1177, %v1177
  %v1249 = vmul.f32 %v1179, %v1179
  %v1250 = vmul.f32 %v1182, %v1182
  %v1251 = vmul.f32 %v1184, %v1184
  %v1252 = vmul.f32 %v1187, %v1187
  %v1253 = vmul.f32 %v1189, %v1189
  %v1254 = vmul.f32 %v1192, %v1192
  %v1255 = vmul.f32 %v1194, %v1194
  %v1256 = vmul.f32 %v1197, %v1197
  %v1257 = vmul.f32 %v1199, %v1199
  %v1258 = vmul.f32 %v1202, %v1202
  %v1259 = vmul.f32 %v1204, %v1204
  %v1260 = vadd.f32 %v1244, %v1245
  %v1261 = vadd.f32 %v1260, %v1246
  %v1262 = vadd.f32 %v1261, %v1247
  %v1263 = vadd.f32 %v1262, %v1248
  %v1264 = vadd.f32 %v1263, %v1249
  %v1265 = vadd.f32 %v1264, %v1250
  %v1266 = vadd.f32 %v1265, %v1251
  %v1267 = vadd.f32 %v1266, %v1252
  %v1268 = vadd.f32 %v1267, %v1253
  %v1269 = vadd.f32 %v1268, %v1254
  %v1270 = vadd.f32 %v1269, %v1255
  %v1271 = vadd.f32 %v1270, %v1256
  %v1272 = vadd.f32 %v1271, %v1257
  %v1273 = vadd.f32 %v1272, %v1258
  %v1274 = vadd.f32 %v1273, %v1259
  %v1275 = vrot.slane %v1274, 4
  %v1276 = vadd.f32 %v1274, %v1275
  %v1277 = vrot.slane %v1276, 2
  %v1278 = vadd.f32 %v1276, %v1277
  %v1279 = vrot.slane %v1278, 1
  %v1280 = vadd.f32 %v1278, %v1279
  %v1281 = vadd.f32 %v1028, %v1280
  %v1282 = vmul.f32 %v1243, 0.0017301039
  %v1283 = vmul.f32 %v1281, 0.0017301039
  %v1284 = vmul.f32 %v1282, %v1282
  %v1285 = vsub.f32 %v1283, %v1284
  %v1286 = vmax.f32 %v1285, 0.0
  %v1287 = vld [vmem:[%s2] sm:$0x1]
  %v1288 = vadd.f32 %v1286, 1e-05
  %v1289 = vrsqrt.pop %v1288
  %v1290 = vmul.f32 %v1289, %v1288
  %v1291 = vmul.f32 %v1290, %v1289
  %v1292 = vmul.f32 0.5, %v1291
  %v1293 = vsub.f32 1.5, %v1292
  %v1294 = vmul.f32 %v1289, %v1293
  %vm1295 = vweird.f32 %v1288
  %vm1296 = vweird.f32 %v1289
  %vm1297 = vmor %vm1295, %vm1296
  %v1298 = vsel %vm1297, %v1289, %v1294
  %v1299 = vmul.f32 %v1287, %v1298
  %v1300 = vld [vmem:[%s3] sm:$0x1]
  %v1301 = vmul.f32 %v1282, %v1299
  %v1302 = vsub.f32 %v1300, %v1301
  %v1303 = vld [vmem:[#allocation2] sm:$0xff]
  %v1304 = vld [vmem:[#allocation2 + $0x8] sm:$0xff]
  %v1305 = vld [vmem:[#allocation2 + $0x10] sm:$0xff]
  %v1306 = vld [vmem:[#allocation2 + $0x18] sm:$0xff]
  %v1307 = vld [vmem:[#allocation2 + $0x20] sm:$0xff]
  %v1308 = vld [vmem:[#allocation2 + $0x28] sm:$0xff]
  %v1309 = vld [vmem:[#allocation2 + $0x30] sm:$0xff]
  %v1310 = vld [vmem:[#allocation2 + $0x38] sm:$0xff]
  %v1311 = vld [vmem:[#allocation2 + $0x40] sm:$0xff]
  %v1312 = vld [vmem:[#allocation2 + $0x48] sm:$0xff]
  %v1313 = vld [vmem:[#allocation2 + $0x50] sm:$0xff]
  %v1314 = vld [vmem:[#allocation2 + $0x58] sm:$0xff]
  %v1315 = vld [vmem:[#allocation2 + $0x60] sm:$0xff]
  %v1316 = vld [vmem:[#allocation2 + $0x68] sm:$0xff]
  %v1317 = vld [vmem:[#allocation2 + $0x70] sm:$0xff]
  %v1318 = vld [vmem:[#allocation2 + $0x78] sm:$0xff]
  %v1320 = vperm.slane %v1299, 0
  %v1322 = vmul.f32 %v1303, %v1320
  %v1323 = vmul.f32 %v1304, %v1320
  %v1324 = vmul.f32 %v1305, %v1320
  %v1325 = vmul.f32 %v1306, %v1320
  %v1326 = vmul.f32 %v1307, %v1320
  %v1327 = vmul.f32 %v1308, %v1320
  %v1328 = vmul.f32 %v1309, %v1320
  %v1329 = vmul.f32 %v1310, %v1320
  %v1330 = vmul.f32 %v1311, %v1320
  %v1331 = vmul.f32 %v1312, %v1320
  %v1332 = vmul.f32 %v1313, %v1320
  %v1333 = vmul.f32 %v1314, %v1320
  %v1334 = vmul.f32 %v1315, %v1320
  %v1335 = vmul.f32 %v1316, %v1320
  %v1336 = vmul.f32 %v1317, %v1320
  %v1337 = vmul.f32 %v1318, %v1320
  %v1339 = vperm.slane %v1302, 0
  %v1341 = vadd.f32 %v1322, %v1339
  %v1342 = vadd.f32 %v1323, %v1339
  %v1343 = vadd.f32 %v1324, %v1339
  %v1344 = vadd.f32 %v1325, %v1339
  %v1345 = vadd.f32 %v1326, %v1339
  %v1346 = vadd.f32 %v1327, %v1339
  %v1347 = vadd.f32 %v1328, %v1339
  %v1348 = vadd.f32 %v1329, %v1339
  %v1349 = vadd.f32 %v1330, %v1339
  %v1350 = vadd.f32 %v1331, %v1339
  %v1351 = vadd.f32 %v1332, %v1339
  %v1352 = vadd.f32 %v1333, %v1339
  %v1353 = vadd.f32 %v1334, %v1339
  %v1354 = vadd.f32 %v1335, %v1339
  %v1355 = vadd.f32 %v1336, %v1339
  %v1356 = vadd.f32 %v1337, %v1339
  %v1357 = vmax.f32 %v1341, 0.0
  %v1358 = vmax.f32 %v1342, 0.0
  %v1359 = vmax.f32 %v1343, 0.0
  %v1360 = vmax.f32 %v1344, 0.0
  %v1361 = vmax.f32 %v1345, 0.0
  %v1362 = vmax.f32 %v1346, 0.0
  %v1363 = vmax.f32 %v1347, 0.0
  %v1364 = vmax.f32 %v1348, 0.0
  %v1365 = vmax.f32 %v1349, 0.0
  %v1366 = vmax.f32 %v1350, 0.0
  %v1367 = vmax.f32 %v1351, 0.0
  %v1368 = vmax.f32 %v1352, 0.0
  %v1369 = vmax.f32 %v1353, 0.0
  %v1370 = vmax.f32 %v1354, 0.0
  %v1371 = vmax.f32 %v1355, 0.0
  %v1372 = vmax.f32 %v1356, 0.0
  %v1373 = vpack.c.bf16 %v1357, %v1357
  %v1374 = vpack.c.bf16 %v1358, %v1358
  %v1375 = vpack.c.bf16 %v1359, %v1359
  %v1376 = vpack.c.bf16 %v1360, %v1360
  %v1377 = vpack.c.bf16 %v1361, %v1361
  %v1378 = vpack.c.bf16 %v1362, %v1362
  %v1379 = vpack.c.bf16 %v1363, %v1363
  %v1380 = vpack.c.bf16 %v1364, %v1364
  %v1381 = vpack.c.bf16 %v1365, %v1365
  %v1382 = vpack.c.bf16 %v1366, %v1366
  %v1383 = vpack.c.bf16 %v1367, %v1367
  %v1384 = vpack.c.bf16 %v1368, %v1368
  %v1385 = vpack.c.bf16 %v1369, %v1369
  %v1386 = vpack.c.bf16 %v1370, %v1370
  %v1387 = vpack.c.bf16 %v1371, %v1371
  %v1388 = vpack.c.bf16 %v1372, %v1372
  %1389 = vst [vmem:[%s4] sm:$0xf] %v1373
  %1390 = vst [vmem:[%s4 + $0x4] sm:$0xf] %v1374
  %1391 = vst [vmem:[%s4 + $0x8] sm:$0xf] %v1375
  %1392 = vst [vmem:[%s4 + $0xc] sm:$0xf] %v1376
  %1393 = vst [vmem:[%s4 + $0x10] sm:$0xf] %v1377
  %1394 = vst [vmem:[%s4 + $0x14] sm:$0xf] %v1378
  %1395 = vst [vmem:[%s4 + $0x18] sm:$0xf] %v1379
  %1396 = vst [vmem:[%s4 + $0x1c] sm:$0xf] %v1380
  %1397 = vst [vmem:[%s4 + $0x20] sm:$0xf] %v1381
  %1398 = vst [vmem:[%s4 + $0x24] sm:$0xf] %v1382
  %1399 = vst [vmem:[%s4 + $0x28] sm:$0xf] %v1383
  %1400 = vst [vmem:[%s4 + $0x2c] sm:$0xf] %v1384
  %1401 = vst [vmem:[%s4 + $0x30] sm:$0xf] %v1385
  %1402 = vst [vmem:[%s4 + $0x34] sm:$0xf] %v1386
  %1403 = vst [vmem:[%s4 + $0x38] sm:$0xf] %v1387
  %1404 = vst [vmem:[%s4 + $0x3c] sm:$0xf] %v1388
  %v1405 = vld [vmem:[#allocation2 + $0x80] sm:$0xff]
  %v1406 = vld [vmem:[#allocation2 + $0x88] sm:$0xff]
  %v1407 = vld [vmem:[#allocation2 + $0x90] sm:$0xff]
  %v1408 = vld [vmem:[#allocation2 + $0x98] sm:$0xff]
  %v1409 = vld [vmem:[#allocation2 + $0xa0] sm:$0xff]
  %v1410 = vld [vmem:[#allocation2 + $0xa8] sm:$0xff]
  %v1411 = vld [vmem:[#allocation2 + $0xb0] sm:$0xff]
  %v1412 = vld [vmem:[#allocation2 + $0xb8] sm:$0xff]
  %v1413 = vld [vmem:[#allocation2 + $0xc0] sm:$0xff]
  %v1414 = vld [vmem:[#allocation2 + $0xc8] sm:$0xff]
  %v1415 = vld [vmem:[#allocation2 + $0xd0] sm:$0xff]
  %v1416 = vld [vmem:[#allocation2 + $0xd8] sm:$0xff]
  %v1417 = vld [vmem:[#allocation2 + $0xe0] sm:$0xff]
  %v1418 = vld [vmem:[#allocation2 + $0xe8] sm:$0xff]
  %v1419 = vld [vmem:[#allocation2 + $0xf0] sm:$0xff]
  %v1420 = vld [vmem:[#allocation2 + $0xf8] sm:$0xff]
  %v1421 = vmul.f32 %v1405, %v1320
  %v1422 = vmul.f32 %v1406, %v1320
  %v1423 = vmul.f32 %v1407, %v1320
  %v1424 = vmul.f32 %v1408, %v1320
  %v1425 = vmul.f32 %v1409, %v1320
  %v1426 = vmul.f32 %v1410, %v1320
  %v1427 = vmul.f32 %v1411, %v1320
  %v1428 = vmul.f32 %v1412, %v1320
  %v1429 = vmul.f32 %v1413, %v1320
  %v1430 = vmul.f32 %v1414, %v1320
  %v1431 = vmul.f32 %v1415, %v1320
  %v1432 = vmul.f32 %v1416, %v1320
  %v1433 = vmul.f32 %v1417, %v1320
  %v1434 = vmul.f32 %v1418, %v1320
  %v1435 = vmul.f32 %v1419, %v1320
  %v1436 = vmul.f32 %v1420, %v1320
  %v1437 = vadd.f32 %v1421, %v1339
  %v1438 = vadd.f32 %v1422, %v1339
  %v1439 = vadd.f32 %v1423, %v1339
  %v1440 = vadd.f32 %v1424, %v1339
  %v1441 = vadd.f32 %v1425, %v1339
  %v1442 = vadd.f32 %v1426, %v1339
  %v1443 = vadd.f32 %v1427, %v1339
  %v1444 = vadd.f32 %v1428, %v1339
  %v1445 = vadd.f32 %v1429, %v1339
  %v1446 = vadd.f32 %v1430, %v1339
  %v1447 = vadd.f32 %v1431, %v1339
  %v1448 = vadd.f32 %v1432, %v1339
  %v1449 = vadd.f32 %v1433, %v1339
  %v1450 = vadd.f32 %v1434, %v1339
  %v1451 = vadd.f32 %v1435, %v1339
  %v1452 = vadd.f32 %v1436, %v1339
  %v1453 = vmax.f32 %v1437, 0.0
  %v1454 = vmax.f32 %v1438, 0.0
  %v1455 = vmax.f32 %v1439, 0.0
  %v1456 = vmax.f32 %v1440, 0.0
  %v1457 = vmax.f32 %v1441, 0.0
  %v1458 = vmax.f32 %v1442, 0.0
  %v1459 = vmax.f32 %v1443, 0.0
  %v1460 = vmax.f32 %v1444, 0.0
  %v1461 = vmax.f32 %v1445, 0.0
  %v1462 = vmax.f32 %v1446, 0.0
  %v1463 = vmax.f32 %v1447, 0.0
  %v1464 = vmax.f32 %v1448, 0.0
  %v1465 = vmax.f32 %v1449, 0.0
  %v1466 = vmax.f32 %v1450, 0.0
  %v1467 = vmax.f32 %v1451, 0.0
  %v1468 = vmax.f32 %v1452, 0.0
  %v1469 = vpack.c.bf16 %v1453, %v1453
  %v1470 = vpack.c.bf16 %v1454, %v1454
  %v1471 = vpack.c.bf16 %v1455, %v1455
  %v1472 = vpack.c.bf16 %v1456, %v1456
  %v1473 = vpack.c.bf16 %v1457, %v1457
  %v1474 = vpack.c.bf16 %v1458, %v1458
  %v1475 = vpack.c.bf16 %v1459, %v1459
  %v1476 = vpack.c.bf16 %v1460, %v1460
  %v1477 = vpack.c.bf16 %v1461, %v1461
  %v1478 = vpack.c.bf16 %v1462, %v1462
  %v1479 = vpack.c.bf16 %v1463, %v1463
  %v1480 = vpack.c.bf16 %v1464, %v1464
  %v1481 = vpack.c.bf16 %v1465, %v1465
  %v1482 = vpack.c.bf16 %v1466, %v1466
  %v1483 = vpack.c.bf16 %v1467, %v1467
  %v1484 = vpack.c.bf16 %v1468, %v1468
  %1485 = vst [vmem:[%s4 + $0x40] sm:$0xf] %v1469
  %1486 = vst [vmem:[%s4 + $0x44] sm:$0xf] %v1470
  %1487 = vst [vmem:[%s4 + $0x48] sm:$0xf] %v1471
  %1488 = vst [vmem:[%s4 + $0x4c] sm:$0xf] %v1472
  %1489 = vst [vmem:[%s4 + $0x50] sm:$0xf] %v1473
  %1490 = vst [vmem:[%s4 + $0x54] sm:$0xf] %v1474
  %1491 = vst [vmem:[%s4 + $0x58] sm:$0xf] %v1475
  %1492 = vst [vmem:[%s4 + $0x5c] sm:$0xf] %v1476
  %1493 = vst [vmem:[%s4 + $0x60] sm:$0xf] %v1477
  %1494 = vst [vmem:[%s4 + $0x64] sm:$0xf] %v1478
  %1495 = vst [vmem:[%s4 + $0x68] sm:$0xf] %v1479
  %1496 = vst [vmem:[%s4 + $0x6c] sm:$0xf] %v1480
  %1497 = vst [vmem:[%s4 + $0x70] sm:$0xf] %v1481
  %1498 = vst [vmem:[%s4 + $0x74] sm:$0xf] %v1482
  %1499 = vst [vmem:[%s4 + $0x78] sm:$0xf] %v1483
  %1500 = vst [vmem:[%s4 + $0x7c] sm:$0xf] %v1484
  %v1501 = vld [vmem:[#allocation2 + $0x100] sm:$0xff]
  %v1502 = vld [vmem:[#allocation2 + $0x108] sm:$0xff]
  %v1503 = vld [vmem:[#allocation2 + $0x110] sm:$0xff]
  %v1504 = vld [vmem:[#allocation2 + $0x118] sm:$0xff]
  %v1505 = vld [vmem:[#allocation2 + $0x120] sm:$0xff]
  %v1506 = vld [vmem:[#allocation2 + $0x128] sm:$0xff]
  %v1507 = vld [vmem:[#allocation2 + $0x130] sm:$0xff]
  %v1508 = vld [vmem:[#allocation2 + $0x138] sm:$0xff]
  %v1509 = vld [vmem:[#allocation2 + $0x140] sm:$0xff]
  %v1510 = vld [vmem:[#allocation2 + $0x148] sm:$0xff]
  %v1511 = vld [vmem:[#allocation2 + $0x150] sm:$0xff]
  %v1512 = vld [vmem:[#allocation2 + $0x158] sm:$0xff]
  %v1513 = vld [vmem:[#allocation2 + $0x160] sm:$0xff]
  %v1514 = vld [vmem:[#allocation2 + $0x168] sm:$0xff]
  %v1515 = vld [vmem:[#allocation2 + $0x170] sm:$0xff]
  %v1516 = vld [vmem:[#allocation2 + $0x178] sm:$0xff]
  %v1517 = vmul.f32 %v1501, %v1320
  %v1518 = vmul.f32 %v1502, %v1320
  %v1519 = vmul.f32 %v1503, %v1320
  %v1520 = vmul.f32 %v1504, %v1320
  %v1521 = vmul.f32 %v1505, %v1320
  %v1522 = vmul.f32 %v1506, %v1320
  %v1523 = vmul.f32 %v1507, %v1320
  %v1524 = vmul.f32 %v1508, %v1320
  %v1525 = vmul.f32 %v1509, %v1320
  %v1526 = vmul.f32 %v1510, %v1320
  %v1527 = vmul.f32 %v1511, %v1320
  %v1528 = vmul.f32 %v1512, %v1320
  %v1529 = vmul.f32 %v1513, %v1320
  %v1530 = vmul.f32 %v1514, %v1320
  %v1531 = vmul.f32 %v1515, %v1320
  %v1532 = vmul.f32 %v1516, %v1320
  %v1533 = vadd.f32 %v1517, %v1339
  %v1534 = vadd.f32 %v1518, %v1339
  %v1535 = vadd.f32 %v1519, %v1339
  %v1536 = vadd.f32 %v1520, %v1339
  %v1537 = vadd.f32 %v1521, %v1339
  %v1538 = vadd.f32 %v1522, %v1339
  %v1539 = vadd.f32 %v1523, %v1339
  %v1540 = vadd.f32 %v1524, %v1339
  %v1541 = vadd.f32 %v1525, %v1339
  %v1542 = vadd.f32 %v1526, %v1339
  %v1543 = vadd.f32 %v1527, %v1339
  %v1544 = vadd.f32 %v1528, %v1339
  %v1545 = vadd.f32 %v1529, %v1339
  %v1546 = vadd.f32 %v1530, %v1339
  %v1547 = vadd.f32 %v1531, %v1339
  %v1548 = vadd.f32 %v1532, %v1339
  %v1549 = vmax.f32 %v1533, 0.0
  %v1550 = vmax.f32 %v1534, 0.0
  %v1551 = vmax.f32 %v1535, 0.0
  %v1552 = vmax.f32 %v1536, 0.0
  %v1553 = vmax.f32 %v1537, 0.0
  %v1554 = vmax.f32 %v1538, 0.0
  %v1555 = vmax.f32 %v1539, 0.0
  %v1556 = vmax.f32 %v1540, 0.0
  %v1557 = vmax.f32 %v1541, 0.0
  %v1558 = vmax.f32 %v1542, 0.0
  %v1559 = vmax.f32 %v1543, 0.0
  %v1560 = vmax.f32 %v1544, 0.0
  %v1561 = vmax.f32 %v1545, 0.0
  %v1562 = vmax.f32 %v1546, 0.0
  %v1563 = vmax.f32 %v1547, 0.0
  %v1564 = vmax.f32 %v1548, 0.0
  %v1565 = vpack.c.bf16 %v1549, %v1549
  %v1566 = vpack.c.bf16 %v1550, %v1550
  %v1567 = vpack.c.bf16 %v1551, %v1551
  %v1568 = vpack.c.bf16 %v1552, %v1552
  %v1569 = vpack.c.bf16 %v1553, %v1553
  %v1570 = vpack.c.bf16 %v1554, %v1554
  %v1571 = vpack.c.bf16 %v1555, %v1555
  %v1572 = vpack.c.bf16 %v1556, %v1556
  %v1573 = vpack.c.bf16 %v1557, %v1557
  %v1574 = vpack.c.bf16 %v1558, %v1558
  %v1575 = vpack.c.bf16 %v1559, %v1559
  %v1576 = vpack.c.bf16 %v1560, %v1560
  %v1577 = vpack.c.bf16 %v1561, %v1561
  %v1578 = vpack.c.bf16 %v1562, %v1562
  %v1579 = vpack.c.bf16 %v1563, %v1563
  %v1580 = vpack.c.bf16 %v1564, %v1564
  %1581 = vst [vmem:[%s4 + $0x80] sm:$0xf] %v1565
  %1582 = vst [vmem:[%s4 + $0x84] sm:$0xf] %v1566
  %1583 = vst [vmem:[%s4 + $0x88] sm:$0xf] %v1567
  %1584 = vst [vmem:[%s4 + $0x8c] sm:$0xf] %v1568
  %1585 = vst [vmem:[%s4 + $0x90] sm:$0xf] %v1569
  %1586 = vst [vmem:[%s4 + $0x94] sm:$0xf] %v1570
  %1587 = vst [vmem:[%s4 + $0x98] sm:$0xf] %v1571
  %1588 = vst [vmem:[%s4 + $0x9c] sm:$0xf] %v1572
  %1589 = vst [vmem:[%s4 + $0xa0] sm:$0xf] %v1573
  %1590 = vst [vmem:[%s4 + $0xa4] sm:$0xf] %v1574
  %1591 = vst [vmem:[%s4 + $0xa8] sm:$0xf] %v1575
  %1592 = vst [vmem:[%s4 + $0xac] sm:$0xf] %v1576
  %1593 = vst [vmem:[%s4 + $0xb0] sm:$0xf] %v1577
  %1594 = vst [vmem:[%s4 + $0xb4] sm:$0xf] %v1578
  %1595 = vst [vmem:[%s4 + $0xb8] sm:$0xf] %v1579
  %1596 = vst [vmem:[%s4 + $0xbc] sm:$0xf] %v1580
  %v1597 = vld [vmem:[#allocation2 + $0x180] sm:$0xff]
  %v1598 = vld [vmem:[#allocation2 + $0x188] sm:$0xff]
  %v1599 = vld [vmem:[#allocation2 + $0x190] sm:$0xff]
  %v1600 = vld [vmem:[#allocation2 + $0x198] sm:$0xff]
  %v1601 = vld [vmem:[#allocation2 + $0x1a0] sm:$0xff]
  %v1602 = vld [vmem:[#allocation2 + $0x1a8] sm:$0xff]
  %v1603 = vld [vmem:[#allocation2 + $0x1b0] sm:$0xff]
  %v1604 = vld [vmem:[#allocation2 + $0x1b8] sm:$0xff]
  %v1605 = vld [vmem:[#allocation2 + $0x1c0] sm:$0xff]
  %v1606 = vld [vmem:[#allocation2 + $0x1c8] sm:$0xff]
  %v1607 = vld [vmem:[#allocation2 + $0x1d0] sm:$0xff]
  %v1608 = vld [vmem:[#allocation2 + $0x1d8] sm:$0xff]
  %v1609 = vld [vmem:[#allocation2 + $0x1e0] sm:$0xff]
  %v1610 = vld [vmem:[#allocation2 + $0x1e8] sm:$0xff]
  %v1611 = vld [vmem:[#allocation2 + $0x1f0] sm:$0xff]
  %v1612 = vld [vmem:[#allocation2 + $0x1f8] sm:$0xff]
  %v1613 = vmul.f32 %v1597, %v1320
  %v1614 = vmul.f32 %v1598, %v1320
  %v1615 = vmul.f32 %v1599, %v1320
  %v1616 = vmul.f32 %v1600, %v1320
  %v1617 = vmul.f32 %v1601, %v1320
  %v1618 = vmul.f32 %v1602, %v1320
  %v1619 = vmul.f32 %v1603, %v1320
  %v1620 = vmul.f32 %v1604, %v1320
  %v1621 = vmul.f32 %v1605, %v1320
  %v1622 = vmul.f32 %v1606, %v1320
  %v1623 = vmul.f32 %v1607, %v1320
  %v1624 = vmul.f32 %v1608, %v1320
  %v1625 = vmul.f32 %v1609, %v1320
  %v1626 = vmul.f32 %v1610, %v1320
  %v1627 = vmul.f32 %v1611, %v1320
  %v1628 = vmul.f32 %v1612, %v1320
  %v1629 = vadd.f32 %v1613, %v1339
  %v1630 = vadd.f32 %v1614, %v1339
  %v1631 = vadd.f32 %v1615, %v1339
  %v1632 = vadd.f32 %v1616, %v1339
  %v1633 = vadd.f32 %v1617, %v1339
  %v1634 = vadd.f32 %v1618, %v1339
  %v1635 = vadd.f32 %v1619, %v1339
  %v1636 = vadd.f32 %v1620, %v1339
  %v1637 = vadd.f32 %v1621, %v1339
  %v1638 = vadd.f32 %v1622, %v1339
  %v1639 = vadd.f32 %v1623, %v1339
  %v1640 = vadd.f32 %v1624, %v1339
  %v1641 = vadd.f32 %v1625, %v1339
  %v1642 = vadd.f32 %v1626, %v1339
  %v1643 = vadd.f32 %v1627, %v1339
  %v1644 = vadd.f32 %v1628, %v1339
  %v1645 = vmax.f32 %v1629, 0.0
  %v1646 = vmax.f32 %v1630, 0.0
  %v1647 = vmax.f32 %v1631, 0.0
  %v1648 = vmax.f32 %v1632, 0.0
  %v1649 = vmax.f32 %v1633, 0.0
  %v1650 = vmax.f32 %v1634, 0.0
  %v1651 = vmax.f32 %v1635, 0.0
  %v1652 = vmax.f32 %v1636, 0.0
  %v1653 = vmax.f32 %v1637, 0.0
  %v1654 = vmax.f32 %v1638, 0.0
  %v1655 = vmax.f32 %v1639, 0.0
  %v1656 = vmax.f32 %v1640, 0.0
  %v1657 = vmax.f32 %v1641, 0.0
  %v1658 = vmax.f32 %v1642, 0.0
  %v1659 = vmax.f32 %v1643, 0.0
  %v1660 = vmax.f32 %v1644, 0.0
  %v1661 = vpack.c.bf16 %v1645, %v1645
  %v1662 = vpack.c.bf16 %v1646, %v1646
  %v1663 = vpack.c.bf16 %v1647, %v1647
  %v1664 = vpack.c.bf16 %v1648, %v1648
  %v1665 = vpack.c.bf16 %v1649, %v1649
  %v1666 = vpack.c.bf16 %v1650, %v1650
  %v1667 = vpack.c.bf16 %v1651, %v1651
  %v1668 = vpack.c.bf16 %v1652, %v1652
  %v1669 = vpack.c.bf16 %v1653, %v1653
  %v1670 = vpack.c.bf16 %v1654, %v1654
  %v1671 = vpack.c.bf16 %v1655, %v1655
  %v1672 = vpack.c.bf16 %v1656, %v1656
  %v1673 = vpack.c.bf16 %v1657, %v1657
  %v1674 = vpack.c.bf16 %v1658, %v1658
  %v1675 = vpack.c.bf16 %v1659, %v1659
  %v1676 = vpack.c.bf16 %v1660, %v1660
  %1677 = vst [vmem:[%s4 + $0xc0] sm:$0xf] %v1661
  %1678 = vst [vmem:[%s4 + $0xc4] sm:$0xf] %v1662
  %1679 = vst [vmem:[%s4 + $0xc8] sm:$0xf] %v1663
  %1680 = vst [vmem:[%s4 + $0xcc] sm:$0xf] %v1664
  %1681 = vst [vmem:[%s4 + $0xd0] sm:$0xf] %v1665
  %1682 = vst [vmem:[%s4 + $0xd4] sm:$0xf] %v1666
  %1683 = vst [vmem:[%s4 + $0xd8] sm:$0xf] %v1667
  %1684 = vst [vmem:[%s4 + $0xdc] sm:$0xf] %v1668
  %1685 = vst [vmem:[%s4 + $0xe0] sm:$0xf] %v1669
  %1686 = vst [vmem:[%s4 + $0xe4] sm:$0xf] %v1670
  %1687 = vst [vmem:[%s4 + $0xe8] sm:$0xf] %v1671
  %1688 = vst [vmem:[%s4 + $0xec] sm:$0xf] %v1672
  %1689 = vst [vmem:[%s4 + $0xf0] sm:$0xf] %v1673
  %1690 = vst [vmem:[%s4 + $0xf4] sm:$0xf] %v1674
  %1691 = vst [vmem:[%s4 + $0xf8] sm:$0xf] %v1675
  %1692 = vst [vmem:[%s4 + $0xfc] sm:$0xf] %v1676
  %v1693 = vld [vmem:[#allocation2 + $0x200] sm:$0xff]
  %v1694 = vld [vmem:[#allocation2 + $0x208] sm:$0xff]
  %v1695 = vld [vmem:[#allocation2 + $0x210] sm:$0xff]
  %v1696 = vld [vmem:[#allocation2 + $0x218] sm:$0xff]
  %v1697 = vld [vmem:[#allocation2 + $0x220] sm:$0xff]
  %v1698 = vld [vmem:[#allocation2 + $0x228] sm:$0xff]
  %v1699 = vld [vmem:[#allocation2 + $0x230] sm:$0xff]
  %v1700 = vld [vmem:[#allocation2 + $0x238] sm:$0xff]
  %v1701 = vld [vmem:[#allocation2 + $0x240] sm:$0xff]
  %v1702 = vld [vmem:[#allocation2 + $0x248] sm:$0xff]
  %v1703 = vld [vmem:[#allocation2 + $0x250] sm:$0xff]
  %v1704 = vld [vmem:[#allocation2 + $0x258] sm:$0xff]
  %v1705 = vld [vmem:[#allocation2 + $0x260] sm:$0xff]
  %v1706 = vld [vmem:[#allocation2 + $0x268] sm:$0xff]
  %v1707 = vld [vmem:[#allocation2 + $0x270] sm:$0xff]
  %v1708 = vld [vmem:[#allocation2 + $0x278] sm:$0xff]
  %v1709 = vmul.f32 %v1693, %v1320
  %v1710 = vmul.f32 %v1694, %v1320
  %v1711 = vmul.f32 %v1695, %v1320
  %v1712 = vmul.f32 %v1696, %v1320
  %v1713 = vmul.f32 %v1697, %v1320
  %v1714 = vmul.f32 %v1698, %v1320
  %v1715 = vmul.f32 %v1699, %v1320
  %v1716 = vmul.f32 %v1700, %v1320
  %v1717 = vmul.f32 %v1701, %v1320
  %v1718 = vmul.f32 %v1702, %v1320
  %v1719 = vmul.f32 %v1703, %v1320
  %v1720 = vmul.f32 %v1704, %v1320
  %v1721 = vmul.f32 %v1705, %v1320
  %v1722 = vmul.f32 %v1706, %v1320
  %v1723 = vmul.f32 %v1707, %v1320
  %v1724 = vmul.f32 %v1708, %v1320
  %v1725 = vadd.f32 %v1709, %v1339
  %v1726 = vadd.f32 %v1710, %v1339
  %v1727 = vadd.f32 %v1711, %v1339
  %v1728 = vadd.f32 %v1712, %v1339
  %v1729 = vadd.f32 %v1713, %v1339
  %v1730 = vadd.f32 %v1714, %v1339
  %v1731 = vadd.f32 %v1715, %v1339
  %v1732 = vadd.f32 %v1716, %v1339
  %v1733 = vadd.f32 %v1717, %v1339
  %v1734 = vadd.f32 %v1718, %v1339
  %v1735 = vadd.f32 %v1719, %v1339
  %v1736 = vadd.f32 %v1720, %v1339
  %v1737 = vadd.f32 %v1721, %v1339
  %v1738 = vadd.f32 %v1722, %v1339
  %v1739 = vadd.f32 %v1723, %v1339
  %v1740 = vadd.f32 %v1724, %v1339
  %v1741 = vmax.f32 %v1725, 0.0
  %v1742 = vmax.f32 %v1726, 0.0
  %v1743 = vmax.f32 %v1727, 0.0
  %v1744 = vmax.f32 %v1728, 0.0
  %v1745 = vmax.f32 %v1729, 0.0
  %v1746 = vmax.f32 %v1730, 0.0
  %v1747 = vmax.f32 %v1731, 0.0
  %v1748 = vmax.f32 %v1732, 0.0
  %v1749 = vmax.f32 %v1733, 0.0
  %v1750 = vmax.f32 %v1734, 0.0
  %v1751 = vmax.f32 %v1735, 0.0
  %v1752 = vmax.f32 %v1736, 0.0
  %v1753 = vmax.f32 %v1737, 0.0
  %v1754 = vmax.f32 %v1738, 0.0
  %v1755 = vmax.f32 %v1739, 0.0
  %v1756 = vmax.f32 %v1740, 0.0
  %v1757 = vpack.c.bf16 %v1741, %v1741
  %v1758 = vpack.c.bf16 %v1742, %v1742
  %v1759 = vpack.c.bf16 %v1743, %v1743
  %v1760 = vpack.c.bf16 %v1744, %v1744
  %v1761 = vpack.c.bf16 %v1745, %v1745
  %v1762 = vpack.c.bf16 %v1746, %v1746
  %v1763 = vpack.c.bf16 %v1747, %v1747
  %v1764 = vpack.c.bf16 %v1748, %v1748
  %v1765 = vpack.c.bf16 %v1749, %v1749
  %v1766 = vpack.c.bf16 %v1750, %v1750
  %v1767 = vpack.c.bf16 %v1751, %v1751
  %v1768 = vpack.c.bf16 %v1752, %v1752
  %v1769 = vpack.c.bf16 %v1753, %v1753
  %v1770 = vpack.c.bf16 %v1754, %v1754
  %v1771 = vpack.c.bf16 %v1755, %v1755
  %v1772 = vpack.c.bf16 %v1756, %v1756
  %1773 = vst [vmem:[%s4 + $0x100] sm:$0xf] %v1757
  %1774 = vst [vmem:[%s4 + $0x104] sm:$0xf] %v1758
  %1775 = vst [vmem:[%s4 + $0x108] sm:$0xf] %v1759
  %1776 = vst [vmem:[%s4 + $0x10c] sm:$0xf] %v1760
  %1777 = vst [vmem:[%s4 + $0x110] sm:$0xf] %v1761
  %1778 = vst [vmem:[%s4 + $0x114] sm:$0xf] %v1762
  %1779 = vst [vmem:[%s4 + $0x118] sm:$0xf] %v1763
  %1780 = vst [vmem:[%s4 + $0x11c] sm:$0xf] %v1764
  %1781 = vst [vmem:[%s4 + $0x120] sm:$0xf] %v1765
  %1782 = vst [vmem:[%s4 + $0x124] sm:$0xf] %v1766
  %1783 = vst [vmem:[%s4 + $0x128] sm:$0xf] %v1767
  %1784 = vst [vmem:[%s4 + $0x12c] sm:$0xf] %v1768
  %1785 = vst [vmem:[%s4 + $0x130] sm:$0xf] %v1769
  %1786 = vst [vmem:[%s4 + $0x134] sm:$0xf] %v1770
  %1787 = vst [vmem:[%s4 + $0x138] sm:$0xf] %v1771
  %1788 = vst [vmem:[%s4 + $0x13c] sm:$0xf] %v1772
  // Predicated region
  $region18: #{discriminator_forward.4} parent=0 // pred_check
    _
  $region19: #{discriminator_forward.4} parent=0 // pred_check_branch
    %1790 = sbr.rel (0) target = $region21
  $region20: #{discriminator_forward.4} parent=0 // pred_region
    _
  $region21: #{discriminator_forward.4} parent=0 // pred_fallthru
    _
  // Predicated region
  $region22: #{discriminator_forward.4} parent=0 // pred_check
    _
  $region23: #{discriminator_forward.4} parent=0 // pred_check_branch
    %1792 = sbr.rel (0) target = $region25
  $region24: #{discriminator_forward.4} parent=0 // pred_region
    _
  $region25: #{discriminator_forward.4} parent=0 // pred_fallthru
    _

// kernel: discriminator_forward.5
$region0: #{discriminator_forward.5}
  #allocation0 [shape = 'u32[]', space=smem, size = 0x4, offset = 0x4, fixed_abs, tag = 'smem constant byte address 0x4 - core index']
  #allocation1 [shape = 'u32[72,128]{1,0:T(1,128)}', space=vmem, size = 0x9000, scoped, tag = 'internal scratch']
  #allocation2 [shape = 'f32[128,128]{1,0:T(8,128)}', space=vmem, size = 0x10000, scoped, tag = 'scratch operand']
  %s0 = inlined_call_operand.vmem [shape: bf16[128,1152], index: 0, kind: input, shape index: {}]
  %s1 = inlined_call_operand.vmem [shape: bf16[1152,128], index: 1, kind: input, shape index: {}]
  %s2 = inlined_call_operand.vmem [shape: f32[1,128], index: 2, kind: input, shape index: {}]
  %s3 = inlined_call_operand.vmem [shape: f32[1,128], index: 3, kind: input, shape index: {}]
  %s4 = inlined_call_operand.vmem [shape: bf16[128,128], index: 4, kind: output, shape index: {}]
  %s5 = sld [smem:[#allocation0]]
  $region26: #{discriminator_forward.5} parent=0
    _
  %s7 = ssub.s32 1, %s5
  %s8 = scalar_select 0, %s7, %s5
  // Predicated region
  $region2: #{discriminator_forward.5} parent=0 // pred_check
    _
  $region3: #{discriminator_forward.5} parent=0 // pred_check_branch
    %10 = sbr.rel (0) target = $region5
  $region4: #{discriminator_forward.5} parent=0 // pred_region
    _
  $region5: #{discriminator_forward.5} parent=0 // pred_fallthru
    _
  // Predicated region
  $region6: #{discriminator_forward.5} parent=0 // pred_check
    _
  $region7: #{discriminator_forward.5} parent=0 // pred_check_branch
    %12 = sbr.rel (0) target = $region9
  $region8: #{discriminator_forward.5} parent=0 // pred_region
    _
  $region9: #{discriminator_forward.5} parent=0 // pred_fallthru
    _
  // Predicated region
  $region10: #{discriminator_forward.5} parent=0 // pred_check
    _
  $region11: #{discriminator_forward.5} parent=0 // pred_check_branch
    %14 = sbr.rel (0) target = $region13
  $region12: #{discriminator_forward.5} parent=0 // pred_region
    _
  $region13: #{discriminator_forward.5} parent=0 // pred_fallthru
    _
  // Predicated region
  $region14: #{discriminator_forward.5} parent=0 // pred_check
    _
  $region15: #{discriminator_forward.5} parent=0 // pred_check_branch
    %16 = sbr.rel (0) target = $region17
  $region16: #{discriminator_forward.5} parent=0 // pred_region
    _
  $region17: #{discriminator_forward.5} parent=0 // pred_fallthru
    _
  %v17 = vld [vmem:[%s0] sm:$0xff]
  %v18 = vld [vmem:[%s0 + $0x8] sm:$0xff]
  %v19 = vld [vmem:[%s0 + $0x10] sm:$0xff]
  %v20 = vld [vmem:[%s0 + $0x18] sm:$0xff]
  %v21 = vld [vmem:[%s0 + $0x20] sm:$0xf]
  %v22 = vld [vmem:[%s0 + $0x24] sm:$0xff]
  %v23 = vld [vmem:[%s0 + $0x2c] sm:$0xff]
  %v24 = vld [vmem:[%s0 + $0x34] sm:$0xff]
  %v25 = vld [vmem:[%s0 + $0x3c] sm:$0xff]
  %v26 = vld [vmem:[%s0 + $0x44] sm:$0xf]
  %v27 = vld [vmem:[%s0 + $0x48] sm:$0xff]
  %v28 = vld [vmem:[%s0 + $0x50] sm:$0xff]
  %v29 = vld [vmem:[%s0 + $0x58] sm:$0xff]
  %v30 = vld [vmem:[%s0 + $0x60] sm:$0xff]
  %v31 = vld [vmem:[%s0 + $0x68] sm:$0xf]
  %v32 = vld [vmem:[%s0 + $0x6c] sm:$0xff]
  %v33 = vld [vmem:[%s0 + $0x74] sm:$0xff]
  %v34 = vld [vmem:[%s0 + $0x7c] sm:$0xff]
  %v35 = vld [vmem:[%s0 + $0x84] sm:$0xff]
  %v36 = vld [vmem:[%s0 + $0x8c] sm:$0xf]
  %v37 = vld [vmem:[%s0 + $0x90] sm:$0xff]
  %v38 = vld [vmem:[%s0 + $0x98] sm:$0xff]
  %v39 = vld [vmem:[%s0 + $0xa0] sm:$0xff]
  %v40 = vld [vmem:[%s0 + $0xa8] sm:$0xff]
  %v41 = vld [vmem:[%s0 + $0xb0] sm:$0xf]
  %v42 = vld [vmem:[%s0 + $0xb4] sm:$0xff]
  %v43 = vld [vmem:[%s0 + $0xbc] sm:$0xff]
  %v44 = vld [vmem:[%s0 + $0xc4] sm:$0xff]
  %v45 = vld [vmem:[%s0 + $0xcc] sm:$0xff]
  %v46 = vld [vmem:[%s0 + $0xd4] sm:$0xf]
  %v47 = vld [vmem:[%s0 + $0xd8] sm:$0xff]
  %v48 = vld [vmem:[%s0 + $0xe0] sm:$0xff]
  %v49 = vld [vmem:[%s0 + $0xe8] sm:$0xff]
  %v50 = vld [vmem:[%s0 + $0xf0] sm:$0xff]
  %v51 = vld [vmem:[%s0 + $0xf8] sm:$0xf]
  %v52 = vld [vmem:[%s0 + $0xfc] sm:$0xff]
  %v53 = vld [vmem:[%s0 + $0x104] sm:$0xff]
  %v54 = vld [vmem:[%s0 + $0x10c] sm:$0xff]
  %v55 = vld [vmem:[%s0 + $0x114] sm:$0xff]
  %v56 = vld [vmem:[%s0 + $0x11c] sm:$0xf]
  %v57 = vld [vmem:[%s0 + $0x120] sm:$0xff]
  %v58 = vld [vmem:[%s0 + $0x128] sm:$0xff]
  %v59 = vld [vmem:[%s0 + $0x130] sm:$0xff]
  %v60 = vld [vmem:[%s0 + $0x138] sm:$0xff]
  %v61 = vld [vmem:[%s0 + $0x140] sm:$0xf]
  %v62 = vld [vmem:[%s0 + $0x144] sm:$0xff]
  %v63 = vld [vmem:[%s0 + $0x14c] sm:$0xff]
  %v64 = vld [vmem:[%s0 + $0x154] sm:$0xff]
  %v65 = vld [vmem:[%s0 + $0x15c] sm:$0xff]
  %v66 = vld [vmem:[%s0 + $0x164] sm:$0xf]
  %v67 = vld [vmem:[%s0 + $0x168] sm:$0xff]
  %v68 = vld [vmem:[%s0 + $0x170] sm:$0xff]
  %v69 = vld [vmem:[%s0 + $0x178] sm:$0xff]
  %v70 = vld [vmem:[%s0 + $0x180] sm:$0xff]
  %v71 = vld [vmem:[%s0 + $0x188] sm:$0xf]
  %v72 = vld [vmem:[%s0 + $0x18c] sm:$0xff]
  %v73 = vld [vmem:[%s0 + $0x194] sm:$0xff]
  %v74 = vld [vmem:[%s0 + $0x19c] sm:$0xff]
  %v75 = vld [vmem:[%s0 + $0x1a4] sm:$0xff]
  %v76 = vld [vmem:[%s0 + $0x1ac] sm:$0xf]
  %v77 = vld [vmem:[%s0 + $0x1b0] sm:$0xff]
  %v78 = vld [vmem:[%s0 + $0x1b8] sm:$0xff]
  %v79 = vld [vmem:[%s0 + $0x1c0] sm:$0xff]
  %v80 = vld [vmem:[%s0 + $0x1c8] sm:$0xff]
  %v81 = vld [vmem:[%s0 + $0x1d0] sm:$0xf]
  %v82 = vld [vmem:[%s0 + $0x1d4] sm:$0xff]
  %v83 = vld [vmem:[%s0 + $0x1dc] sm:$0xff]
  %v84 = vld [vmem:[%s0 + $0x1e4] sm:$0xff]
  %v85 = vld [vmem:[%s0 + $0x1ec] sm:$0xff]
  %v86 = vld [vmem:[%s0 + $0x1f4] sm:$0xf]
  %v87 = vld [vmem:[%s0 + $0x1f8] sm:$0xff]
  %v88 = vld [vmem:[%s0 + $0x200] sm:$0xff]
  %v89 = vld [vmem:[%s0 + $0x208] sm:$0xff]
  %v90 = vld [vmem:[%s0 + $0x210] sm:$0xff]
  %v91 = vld [vmem:[%s0 + $0x218] sm:$0xf]
  %v92 = vld [vmem:[%s0 + $0x21c] sm:$0xff]
  %v93 = vld [vmem:[%s0 + $0x224] sm:$0xff]
  %v94 = vld [vmem:[%s0 + $0x22c] sm:$0xff]
  %v95 = vld [vmem:[%s0 + $0x234] sm:$0xff]
  %v96 = vld [vmem:[%s0 + $0x23c] sm:$0xf]
  %v97 = vld [vmem:[%s1] sm:$0xf]
  %v98 = vld [vmem:[%s1 + $0x4] sm:$0xf]
  %v99 = vld [vmem:[%s1 + $0x8] sm:$0xf]
  %v100 = vld [vmem:[%s1 + $0xc] sm:$0xf]
  %v101 = vld [vmem:[%s1 + $0x10] sm:$0xf]
  %v102 = vld [vmem:[%s1 + $0x14] sm:$0xf]
  %v103 = vld [vmem:[%s1 + $0x18] sm:$0xf]
  %v104 = vld [vmem:[%s1 + $0x1c] sm:$0xf]
  %v105 = vld [vmem:[%s1 + $0x20] sm:$0xf]
  %v106 = vld [vmem:[%s1 + $0x24] sm:$0xf]
  %v107 = vld [vmem:[%s1 + $0x28] sm:$0xf]
  %v108 = vld [vmem:[%s1 + $0x2c] sm:$0xf]
  %v109 = vld [vmem:[%s1 + $0x30] sm:$0xf]
  %v110 = vld [vmem:[%s1 + $0x34] sm:$0xf]
  %v111 = vld [vmem:[%s1 + $0x38] sm:$0xf]
  %v112 = vld [vmem:[%s1 + $0x3c] sm:$0xf]
  %v113 = vld [vmem:[%s1 + $0x40] sm:$0xf]
  %v114 = vld [vmem:[%s1 + $0x44] sm:$0xf]
  %v115 = vld [vmem:[%s1 + $0x48] sm:$0xf]
  %v116 = vld [vmem:[%s1 + $0x4c] sm:$0xf]
  %v117 = vld [vmem:[%s1 + $0x50] sm:$0xf]
  %v118 = vld [vmem:[%s1 + $0x54] sm:$0xf]
  %v119 = vld [vmem:[%s1 + $0x58] sm:$0xf]
  %v120 = vld [vmem:[%s1 + $0x5c] sm:$0xf]
  %v121 = vld [vmem:[%s1 + $0x60] sm:$0xf]
  %v122 = vld [vmem:[%s1 + $0x64] sm:$0xf]
  %v123 = vld [vmem:[%s1 + $0x68] sm:$0xf]
  %v124 = vld [vmem:[%s1 + $0x6c] sm:$0xf]
  %v125 = vld [vmem:[%s1 + $0x70] sm:$0xf]
  %v126 = vld [vmem:[%s1 + $0x74] sm:$0xf]
  %v127 = vld [vmem:[%s1 + $0x78] sm:$0xf]
  %v128 = vld [vmem:[%s1 + $0x7c] sm:$0xf]
  %v129 = vld [vmem:[%s1 + $0x80] sm:$0xf]
  %v130 = vld [vmem:[%s1 + $0x84] sm:$0xf]
  %v131 = vld [vmem:[%s1 + $0x88] sm:$0xf]
  %v132 = vld [vmem:[%s1 + $0x8c] sm:$0xf]
  %v133 = vld [vmem:[%s1 + $0x90] sm:$0xf]
  %v134 = vld [vmem:[%s1 + $0x94] sm:$0xf]
  %v135 = vld [vmem:[%s1 + $0x98] sm:$0xf]
  %v136 = vld [vmem:[%s1 + $0x9c] sm:$0xf]
  %v137 = vld [vmem:[%s1 + $0xa0] sm:$0xf]
  %v138 = vld [vmem:[%s1 + $0xa4] sm:$0xf]
  %v139 = vld [vmem:[%s1 + $0xa8] sm:$0xf]
  %v140 = vld [vmem:[%s1 + $0xac] sm:$0xf]
  %v141 = vld [vmem:[%s1 + $0xb0] sm:$0xf]
  %v142 = vld [vmem:[%s1 + $0xb4] sm:$0xf]
  %v143 = vld [vmem:[%s1 + $0xb8] sm:$0xf]
  %v144 = vld [vmem:[%s1 + $0xbc] sm:$0xf]
  %v145 = vld [vmem:[%s1 + $0xc0] sm:$0xf]
  %v146 = vld [vmem:[%s1 + $0xc4] sm:$0xf]
  %v147 = vld [vmem:[%s1 + $0xc8] sm:$0xf]
  %v148 = vld [vmem:[%s1 + $0xcc] sm:$0xf]
  %v149 = vld [vmem:[%s1 + $0xd0] sm:$0xf]
  %v150 = vld [vmem:[%s1 + $0xd4] sm:$0xf]
  %v151 = vld [vmem:[%s1 + $0xd8] sm:$0xf]
  %v152 = vld [vmem:[%s1 + $0xdc] sm:$0xf]
  %v153 = vld [vmem:[%s1 + $0xe0] sm:$0xf]
  %v154 = vld [vmem:[%s1 + $0xe4] sm:$0xf]
  %v155 = vld [vmem:[%s1 + $0xe8] sm:$0xf]
  %v156 = vld [vmem:[%s1 + $0xec] sm:$0xf]
  %v157 = vld [vmem:[%s1 + $0xf0] sm:$0xf]
  %v158 = vld [vmem:[%s1 + $0xf4] sm:$0xf]
  %v159 = vld [vmem:[%s1 + $0xf8] sm:$0xf]
  %v160 = vld [vmem:[%s1 + $0xfc] sm:$0xf]
  %v161 = vld [vmem:[%s1 + $0x100] sm:$0xf]
  %v162 = vld [vmem:[%s1 + $0x104] sm:$0xf]
  %v163 = vld [vmem:[%s1 + $0x108] sm:$0xf]
  %v164 = vld [vmem:[%s1 + $0x10c] sm:$0xf]
  %v165 = vld [vmem:[%s1 + $0x110] sm:$0xf]
  %v166 = vld [vmem:[%s1 + $0x114] sm:$0xf]
  %v167 = vld [vmem:[%s1 + $0x118] sm:$0xf]
  %v168 = vld [vmem:[%s1 + $0x11c] sm:$0xf]
  %v169 = vld [vmem:[%s1 + $0x120] sm:$0xf]
  %v170 = vld [vmem:[%s1 + $0x124] sm:$0xf]
  %v171 = vld [vmem:[%s1 + $0x128] sm:$0xf]
  %v172 = vld [vmem:[%s1 + $0x12c] sm:$0xf]
  %v173 = vld [vmem:[%s1 + $0x130] sm:$0xf]
  %v174 = vld [vmem:[%s1 + $0x134] sm:$0xf]
  %v175 = vld [vmem:[%s1 + $0x138] sm:$0xf]
  %v176 = vld [vmem:[%s1 + $0x13c] sm:$0xf]
  %v177 = vld [vmem:[%s1 + $0x140] sm:$0xf]
  %v178 = vld [vmem:[%s1 + $0x144] sm:$0xf]
  %v179 = vld [vmem:[%s1 + $0x148] sm:$0xf]
  %v180 = vld [vmem:[%s1 + $0x14c] sm:$0xf]
  %v181 = vld [vmem:[%s1 + $0x150] sm:$0xf]
  %v182 = vld [vmem:[%s1 + $0x154] sm:$0xf]
  %v183 = vld [vmem:[%s1 + $0x158] sm:$0xf]
  %v184 = vld [vmem:[%s1 + $0x15c] sm:$0xf]
  %v185 = vld [vmem:[%s1 + $0x160] sm:$0xf]
  %v186 = vld [vmem:[%s1 + $0x164] sm:$0xf]
  %v187 = vld [vmem:[%s1 + $0x168] sm:$0xf]
  %v188 = vld [vmem:[%s1 + $0x16c] sm:$0xf]
  %v189 = vld [vmem:[%s1 + $0x170] sm:$0xf]
  %v190 = vld [vmem:[%s1 + $0x174] sm:$0xf]
  %v191 = vld [vmem:[%s1 + $0x178] sm:$0xf]
  %v192 = vld [vmem:[%s1 + $0x17c] sm:$0xf]
  %v193 = vld [vmem:[%s1 + $0x180] sm:$0xf]
  %v194 = vld [vmem:[%s1 + $0x184] sm:$0xf]
  %v195 = vld [vmem:[%s1 + $0x188] sm:$0xf]
  %v196 = vld [vmem:[%s1 + $0x18c] sm:$0xf]
  %v197 = vld [vmem:[%s1 + $0x190] sm:$0xf]
  %v198 = vld [vmem:[%s1 + $0x194] sm:$0xf]
  %v199 = vld [vmem:[%s1 + $0x198] sm:$0xf]
  %v200 = vld [vmem:[%s1 + $0x19c] sm:$0xf]
  %v201 = vld [vmem:[%s1 + $0x1a0] sm:$0xf]
  %v202 = vld [vmem:[%s1 + $0x1a4] sm:$0xf]
  %v203 = vld [vmem:[%s1 + $0x1a8] sm:$0xf]
  %v204 = vld [vmem:[%s1 + $0x1ac] sm:$0xf]
  %v205 = vld [vmem:[%s1 + $0x1b0] sm:$0xf]
  %v206 = vld [vmem:[%s1 + $0x1b4] sm:$0xf]
  %v207 = vld [vmem:[%s1 + $0x1b8] sm:$0xf]
  %v208 = vld [vmem:[%s1 + $0x1bc] sm:$0xf]
  %v209 = vld [vmem:[%s1 + $0x1c0] sm:$0xf]
  %v210 = vld [vmem:[%s1 + $0x1c4] sm:$0xf]
  %v211 = vld [vmem:[%s1 + $0x1c8] sm:$0xf]
  %v212 = vld [vmem:[%s1 + $0x1cc] sm:$0xf]
  %v213 = vld [vmem:[%s1 + $0x1d0] sm:$0xf]
  %v214 = vld [vmem:[%s1 + $0x1d4] sm:$0xf]
  %v215 = vld [vmem:[%s1 + $0x1d8] sm:$0xf]
  %v216 = vld [vmem:[%s1 + $0x1dc] sm:$0xf]
  %v217 = vld [vmem:[%s1 + $0x1e0] sm:$0xf]
  %v218 = vld [vmem:[%s1 + $0x1e4] sm:$0xf]
  %v219 = vld [vmem:[%s1 + $0x1e8] sm:$0xf]
  %v220 = vld [vmem:[%s1 + $0x1ec] sm:$0xf]
  %v221 = vld [vmem:[%s1 + $0x1f0] sm:$0xf]
  %v222 = vld [vmem:[%s1 + $0x1f4] sm:$0xf]
  %v223 = vld [vmem:[%s1 + $0x1f8] sm:$0xf]
  %v224 = vld [vmem:[%s1 + $0x1fc] sm:$0xf]
  %v225 = vld [vmem:[%s1 + $0x200] sm:$0xf]
  %v226 = vld [vmem:[%s1 + $0x204] sm:$0xf]
  %v227 = vld [vmem:[%s1 + $0x208] sm:$0xf]
  %v228 = vld [vmem:[%s1 + $0x20c] sm:$0xf]
  %v229 = vld [vmem:[%s1 + $0x210] sm:$0xf]
  %v230 = vld [vmem:[%s1 + $0x214] sm:$0xf]
  %v231 = vld [vmem:[%s1 + $0x218] sm:$0xf]
  %v232 = vld [vmem:[%s1 + $0x21c] sm:$0xf]
  %v233 = vld [vmem:[%s1 + $0x220] sm:$0xf]
  %v234 = vld [vmem:[%s1 + $0x224] sm:$0xf]
  %v235 = vld [vmem:[%s1 + $0x228] sm:$0xf]
  %v236 = vld [vmem:[%s1 + $0x22c] sm:$0xf]
  %v237 = vld [vmem:[%s1 + $0x230] sm:$0xf]
  %v238 = vld [vmem:[%s1 + $0x234] sm:$0xf]
  %v239 = vld [vmem:[%s1 + $0x238] sm:$0xf]
  %v240 = vld [vmem:[%s1 + $0x23c] sm:$0xf]
  %v321 = vunpack.c.l.b16 %v17
  %v322 = vunpack.c.h.b16 %v17
  %v323 = vunpack.c.l.b16 %v18
  %v324 = vunpack.c.h.b16 %v18
  %v325 = vunpack.c.l.b16 %v19
  %v326 = vunpack.c.h.b16 %v19
  %v327 = vunpack.c.l.b16 %v20
  %v328 = vunpack.c.h.b16 %v20
  %v329 = vunpack.c.l.b16 %v21
  %v330 = vunpack.c.l.b16 %v22
  %v331 = vunpack.c.h.b16 %v22
  %v332 = vunpack.c.l.b16 %v23
  %v333 = vunpack.c.h.b16 %v23
  %v334 = vunpack.c.l.b16 %v24
  %v335 = vunpack.c.h.b16 %v24
  %v336 = vunpack.c.l.b16 %v25
  %v337 = vunpack.c.h.b16 %v25
  %v338 = vunpack.c.l.b16 %v26
  %v339 = vunpack.c.l.b16 %v27
  %v340 = vunpack.c.h.b16 %v27
  %v341 = vunpack.c.l.b16 %v28
  %v342 = vunpack.c.h.b16 %v28
  %v343 = vunpack.c.l.b16 %v29
  %v344 = vunpack.c.h.b16 %v29
  %v345 = vunpack.c.l.b16 %v30
  %v346 = vunpack.c.h.b16 %v30
  %v347 = vunpack.c.l.b16 %v31
  %v348 = vunpack.c.l.b16 %v32
  %v349 = vunpack.c.h.b16 %v32
  %v350 = vunpack.c.l.b16 %v33
  %v351 = vunpack.c.h.b16 %v33
  %v352 = vunpack.c.l.b16 %v34
  %v353 = vunpack.c.h.b16 %v34
  %v354 = vunpack.c.l.b16 %v35
  %v355 = vunpack.c.h.b16 %v35
  %v356 = vunpack.c.l.b16 %v36
  %v357 = vunpack.c.l.b16 %v37
  %v358 = vunpack.c.h.b16 %v37
  %v359 = vunpack.c.l.b16 %v38
  %v360 = vunpack.c.h.b16 %v38
  %v361 = vunpack.c.l.b16 %v39
  %v362 = vunpack.c.h.b16 %v39
  %v363 = vunpack.c.l.b16 %v40
  %v364 = vunpack.c.h.b16 %v40
  %v365 = vunpack.c.l.b16 %v41
  %v366 = vunpack.c.l.b16 %v42
  %v367 = vunpack.c.h.b16 %v42
  %v368 = vunpack.c.l.b16 %v43
  %v369 = vunpack.c.h.b16 %v43
  %v370 = vunpack.c.l.b16 %v44
  %v371 = vunpack.c.h.b16 %v44
  %v372 = vunpack.c.l.b16 %v45
  %v373 = vunpack.c.h.b16 %v45
  %v374 = vunpack.c.l.b16 %v46
  %v375 = vunpack.c.l.b16 %v47
  %v376 = vunpack.c.h.b16 %v47
  %v377 = vunpack.c.l.b16 %v48
  %v378 = vunpack.c.h.b16 %v48
  %v379 = vunpack.c.l.b16 %v49
  %v380 = vunpack.c.h.b16 %v49
  %v381 = vunpack.c.l.b16 %v50
  %v382 = vunpack.c.h.b16 %v50
  %v383 = vunpack.c.l.b16 %v51
  %v384 = vunpack.c.l.b16 %v52
  %v385 = vunpack.c.h.b16 %v52
  %v386 = vunpack.c.l.b16 %v53
  %v387 = vunpack.c.h.b16 %v53
  %v388 = vunpack.c.l.b16 %v54
  %v389 = vunpack.c.h.b16 %v54
  %v390 = vunpack.c.l.b16 %v55
  %v391 = vunpack.c.h.b16 %v55
  %v392 = vunpack.c.l.b16 %v56
  %v393 = vunpack.c.l.b16 %v57
  %v394 = vunpack.c.h.b16 %v57
  %v395 = vunpack.c.l.b16 %v58
  %v396 = vunpack.c.h.b16 %v58
  %v397 = vunpack.c.l.b16 %v59
  %v398 = vunpack.c.h.b16 %v59
  %v399 = vunpack.c.l.b16 %v60
  %v400 = vunpack.c.h.b16 %v60
  %v401 = vunpack.c.l.b16 %v61
  %v402 = vunpack.c.l.b16 %v62
  %v403 = vunpack.c.h.b16 %v62
  %v404 = vunpack.c.l.b16 %v63
  %v405 = vunpack.c.h.b16 %v63
  %v406 = vunpack.c.l.b16 %v64
  %v407 = vunpack.c.h.b16 %v64
  %v408 = vunpack.c.l.b16 %v65
  %v409 = vunpack.c.h.b16 %v65
  %v410 = vunpack.c.l.b16 %v66
  %v411 = vunpack.c.l.b16 %v67
  %v412 = vunpack.c.h.b16 %v67
  %v413 = vunpack.c.l.b16 %v68
  %v414 = vunpack.c.h.b16 %v68
  %v415 = vunpack.c.l.b16 %v69
  %v416 = vunpack.c.h.b16 %v69
  %v417 = vunpack.c.l.b16 %v70
  %v418 = vunpack.c.h.b16 %v70
  %v419 = vunpack.c.l.b16 %v71
  %v420 = vunpack.c.l.b16 %v72
  %v421 = vunpack.c.h.b16 %v72
  %v422 = vunpack.c.l.b16 %v73
  %v423 = vunpack.c.h.b16 %v73
  %v424 = vunpack.c.l.b16 %v74
  %v425 = vunpack.c.h.b16 %v74
  %v426 = vunpack.c.l.b16 %v75
  %v427 = vunpack.c.h.b16 %v75
  %v428 = vunpack.c.l.b16 %v76
  %v429 = vunpack.c.l.b16 %v77
  %v430 = vunpack.c.h.b16 %v77
  %v431 = vunpack.c.l.b16 %v78
  %v432 = vunpack.c.h.b16 %v78
  %v433 = vunpack.c.l.b16 %v79
  %v434 = vunpack.c.h.b16 %v79
  %v435 = vunpack.c.l.b16 %v80
  %v436 = vunpack.c.h.b16 %v80
  %v437 = vunpack.c.l.b16 %v81
  %v438 = vunpack.c.l.b16 %v82
  %v439 = vunpack.c.h.b16 %v82
  %v440 = vunpack.c.l.b16 %v83
  %v441 = vunpack.c.h.b16 %v83
  %v442 = vunpack.c.l.b16 %v84
  %v443 = vunpack.c.h.b16 %v84
  %v444 = vunpack.c.l.b16 %v85
  %v445 = vunpack.c.h.b16 %v85
  %v446 = vunpack.c.l.b16 %v86
  %v447 = vunpack.c.l.b16 %v87
  %v448 = vunpack.c.h.b16 %v87
  %v449 = vunpack.c.l.b16 %v88
  %v450 = vunpack.c.h.b16 %v88
  %v451 = vunpack.c.l.b16 %v89
  %v452 = vunpack.c.h.b16 %v89
  %v453 = vunpack.c.l.b16 %v90
  %v454 = vunpack.c.h.b16 %v90
  %v455 = vunpack.c.l.b16 %v91
  %v456 = vunpack.c.l.b16 %v92
  %v457 = vunpack.c.h.b16 %v92
  %v458 = vunpack.c.l.b16 %v93
  %v459 = vunpack.c.h.b16 %v93
  %v460 = vunpack.c.l.b16 %v94
  %v461 = vunpack.c.h.b16 %v94
  %v462 = vunpack.c.l.b16 %v95
  %v463 = vunpack.c.h.b16 %v95
  %v464 = vunpack.c.l.b16 %v96
  %v465 = vpack.c.b16 %v330, %v321
  %v466 = vpack.c.b16 %v331, %v322
  %v467 = vpack.c.b16 %v332, %v323
  %v468 = vpack.c.b16 %v333, %v324
  %v469 = vpack.c.b16 %v334, %v325
  %v470 = vpack.c.b16 %v335, %v326
  %v471 = vpack.c.b16 %v336, %v327
  %v472 = vpack.c.b16 %v337, %v328
  %v473 = vpack.c.b16 %v338, %v329
  %v474 = vpack.c.b16 %v348, %v339
  %v475 = vpack.c.b16 %v349, %v340
  %v476 = vpack.c.b16 %v350, %v341
  %v477 = vpack.c.b16 %v351, %v342
  %v478 = vpack.c.b16 %v352, %v343
  %v479 = vpack.c.b16 %v353, %v344
  %v480 = vpack.c.b16 %v354, %v345
  %v481 = vpack.c.b16 %v355, %v346
  %v482 = vpack.c.b16 %v356, %v347
  %v483 = vpack.c.b16 %v366, %v357
  %v484 = vpack.c.b16 %v367, %v358
  %v485 = vpack.c.b16 %v368, %v359
  %v486 = vpack.c.b16 %v369, %v360
  %v487 = vpack.c.b16 %v370, %v361
  %v488 = vpack.c.b16 %v371, %v362
  %v489 = vpack.c.b16 %v372, %v363
  %v490 = vpack.c.b16 %v373, %v364
  %v491 = vpack.c.b16 %v374, %v365
  %v492 = vpack.c.b16 %v384, %v375
  %v493 = vpack.c.b16 %v385, %v376
  %v494 = vpack.c.b16 %v386, %v377
  %v495 = vpack.c.b16 %v387, %v378
  %v496 = vpack.c.b16 %v388, %v379
  %v497 = vpack.c.b16 %v389, %v380
  %v498 = vpack.c.b16 %v390, %v381
  %v499 = vpack.c.b16 %v391, %v382
  %v500 = vpack.c.b16 %v392, %v383
  %v501 = vpack.c.b16 %v402, %v393
  %v502 = vpack.c.b16 %v403, %v394
  %v503 = vpack.c.b16 %v404, %v395
  %v504 = vpack.c.b16 %v405, %v396
  %v505 = vpack.c.b16 %v406, %v397
  %v506 = vpack.c.b16 %v407, %v398
  %v507 = vpack.c.b16 %v408, %v399
  %v508 = vpack.c.b16 %v409, %v400
  %v509 = vpack.c.b16 %v410, %v401
  %v510 = vpack.c.b16 %v420, %v411
  %v511 = vpack.c.b16 %v421, %v412
  %v512 = vpack.c.b16 %v422, %v413
  %v513 = vpack.c.b16 %v423, %v414
  %v514 = vpack.c.b16 %v424, %v415
  %v515 = vpack.c.b16 %v425, %v416
  %v516 = vpack.c.b16 %v426, %v417
  %v517 = vpack.c.b16 %v427, %v418
  %v518 = vpack.c.b16 %v428, %v419
  %v519 = vpack.c.b16 %v438, %v429
  %v520 = vpack.c.b16 %v439, %v430
  %v521 = vpack.c.b16 %v440, %v431
  %v522 = vpack.c.b16 %v441, %v432
  %v523 = vpack.c.b16 %v442, %v433
  %v524 = vpack.c.b16 %v443, %v434
  %v525 = vpack.c.b16 %v444, %v435
  %v526 = vpack.c.b16 %v445, %v436
  %v527 = vpack.c.b16 %v446, %v437
  %v528 = vpack.c.b16 %v456, %v447
  %v529 = vpack.c.b16 %v457, %v448
  %v530 = vpack.c.b16 %v458, %v449
  %v531 = vpack.c.b16 %v459, %v450
  %v532 = vpack.c.b16 %v460, %v451
  %v533 = vpack.c.b16 %v461, %v452
  %v534 = vpack.c.b16 %v462, %v453
  %v535 = vpack.c.b16 %v463, %v454
  %v536 = vpack.c.b16 %v464, %v455
  %v753 = vunpack.c.l.b16 %v97
  %v754 = vunpack.c.l.b16 %v98
  %v755 = vunpack.c.l.b16 %v99
  %v756 = vunpack.c.l.b16 %v100
  %v757 = vunpack.c.l.b16 %v101
  %v758 = vunpack.c.l.b16 %v102
  %v759 = vunpack.c.l.b16 %v103
  %v760 = vunpack.c.l.b16 %v104
  %v761 = vunpack.c.l.b16 %v105
  %v762 = vunpack.c.l.b16 %v106
  %v763 = vunpack.c.l.b16 %v107
  %v764 = vunpack.c.l.b16 %v108
  %v765 = vunpack.c.l.b16 %v109
  %v766 = vunpack.c.l.b16 %v110
  %v767 = vunpack.c.l.b16 %v111
  %v768 = vunpack.c.l.b16 %v112
  %v769 = vunpack.c.l.b16 %v113
  %v770 = vunpack.c.l.b16 %v114
  %v771 = vunpack.c.l.b16 %v115
  %v772 = vunpack.c.l.b16 %v116
  %v773 = vunpack.c.l.b16 %v117
  %v774 = vunpack.c.l.b16 %v118
  %v775 = vunpack.c.l.b16 %v119
  %v776 = vunpack.c.l.b16 %v120
  %v777 = vunpack.c.l.b16 %v121
  %v778 = vunpack.c.l.b16 %v122
  %v779 = vunpack.c.l.b16 %v123
  %v780 = vunpack.c.l.b16 %v124
  %v781 = vunpack.c.l.b16 %v125
  %v782 = vunpack.c.l.b16 %v126
  %v783 = vunpack.c.l.b16 %v127
  %v784 = vunpack.c.l.b16 %v128
  %v785 = vunpack.c.l.b16 %v129
  %v786 = vunpack.c.l.b16 %v130
  %v787 = vunpack.c.l.b16 %v131
  %v788 = vunpack.c.l.b16 %v132
  %v789 = vunpack.c.l.b16 %v133
  %v790 = vunpack.c.l.b16 %v134
  %v791 = vunpack.c.l.b16 %v135
  %v792 = vunpack.c.l.b16 %v136
  %v793 = vunpack.c.l.b16 %v137
  %v794 = vunpack.c.l.b16 %v138
  %v795 = vunpack.c.l.b16 %v139
  %v796 = vunpack.c.l.b16 %v140
  %v797 = vunpack.c.l.b16 %v141
  %v798 = vunpack.c.l.b16 %v142
  %v799 = vunpack.c.l.b16 %v143
  %v800 = vunpack.c.l.b16 %v144
  %v801 = vunpack.c.l.b16 %v145
  %v802 = vunpack.c.l.b16 %v146
  %v803 = vunpack.c.l.b16 %v147
  %v804 = vunpack.c.l.b16 %v148
  %v805 = vunpack.c.l.b16 %v149
  %v806 = vunpack.c.l.b16 %v150
  %v807 = vunpack.c.l.b16 %v151
  %v808 = vunpack.c.l.b16 %v152
  %v809 = vunpack.c.l.b16 %v153
  %v810 = vunpack.c.l.b16 %v154
  %v811 = vunpack.c.l.b16 %v155
  %v812 = vunpack.c.l.b16 %v156
  %v813 = vunpack.c.l.b16 %v157
  %v814 = vunpack.c.l.b16 %v158
  %v815 = vunpack.c.l.b16 %v159
  %v816 = vunpack.c.l.b16 %v160
  %v817 = vunpack.c.l.b16 %v161
  %v818 = vunpack.c.l.b16 %v162
  %v819 = vunpack.c.l.b16 %v163
  %v820 = vunpack.c.l.b16 %v164
  %v821 = vunpack.c.l.b16 %v165
  %v822 = vunpack.c.l.b16 %v166
  %v823 = vunpack.c.l.b16 %v167
  %v824 = vunpack.c.l.b16 %v168
  %v825 = vunpack.c.l.b16 %v169
  %v826 = vunpack.c.l.b16 %v170
  %v827 = vunpack.c.l.b16 %v171
  %v828 = vunpack.c.l.b16 %v172
  %v829 = vunpack.c.l.b16 %v173
  %v830 = vunpack.c.l.b16 %v174
  %v831 = vunpack.c.l.b16 %v175
  %v832 = vunpack.c.l.b16 %v176
  %v833 = vunpack.c.l.b16 %v177
  %v834 = vunpack.c.l.b16 %v178
  %v835 = vunpack.c.l.b16 %v179
  %v836 = vunpack.c.l.b16 %v180
  %v837 = vunpack.c.l.b16 %v181
  %v838 = vunpack.c.l.b16 %v182
  %v839 = vunpack.c.l.b16 %v183
  %v840 = vunpack.c.l.b16 %v184
  %v841 = vunpack.c.l.b16 %v185
  %v842 = vunpack.c.l.b16 %v186
  %v843 = vunpack.c.l.b16 %v187
  %v844 = vunpack.c.l.b16 %v188
  %v845 = vunpack.c.l.b16 %v189
  %v846 = vunpack.c.l.b16 %v190
  %v847 = vunpack.c.l.b16 %v191
  %v848 = vunpack.c.l.b16 %v192
  %v849 = vunpack.c.l.b16 %v193
  %v850 = vunpack.c.l.b16 %v194
  %v851 = vunpack.c.l.b16 %v195
  %v852 = vunpack.c.l.b16 %v196
  %v853 = vunpack.c.l.b16 %v197
  %v854 = vunpack.c.l.b16 %v198
  %v855 = vunpack.c.l.b16 %v199
  %v856 = vunpack.c.l.b16 %v200
  %v857 = vunpack.c.l.b16 %v201
  %v858 = vunpack.c.l.b16 %v202
  %v859 = vunpack.c.l.b16 %v203
  %v860 = vunpack.c.l.b16 %v204
  %v861 = vunpack.c.l.b16 %v205
  %v862 = vunpack.c.l.b16 %v206
  %v863 = vunpack.c.l.b16 %v207
  %v864 = vunpack.c.l.b16 %v208
  %v865 = vunpack.c.l.b16 %v209
  %v866 = vunpack.c.l.b16 %v210
  %v867 = vunpack.c.l.b16 %v211
  %v868 = vunpack.c.l.b16 %v212
  %v869 = vunpack.c.l.b16 %v213
  %v870 = vunpack.c.l.b16 %v214
  %v871 = vunpack.c.l.b16 %v215
  %v872 = vunpack.c.l.b16 %v216
  %v873 = vunpack.c.l.b16 %v217
  %v874 = vunpack.c.l.b16 %v218
  %v875 = vunpack.c.l.b16 %v219
  %v876 = vunpack.c.l.b16 %v220
  %v877 = vunpack.c.l.b16 %v221
  %v878 = vunpack.c.l.b16 %v222
  %v879 = vunpack.c.l.b16 %v223
  %v880 = vunpack.c.l.b16 %v224
  %v881 = vunpack.c.l.b16 %v225
  %v882 = vunpack.c.l.b16 %v226
  %v883 = vunpack.c.l.b16 %v227
  %v884 = vunpack.c.l.b16 %v228
  %v885 = vunpack.c.l.b16 %v229
  %v886 = vunpack.c.l.b16 %v230
  %v887 = vunpack.c.l.b16 %v231
  %v888 = vunpack.c.l.b16 %v232
  %v889 = vunpack.c.l.b16 %v233
  %v890 = vunpack.c.l.b16 %v234
  %v891 = vunpack.c.l.b16 %v235
  %v892 = vunpack.c.l.b16 %v236
  %v893 = vunpack.c.l.b16 %v237
  %v894 = vunpack.c.l.b16 %v238
  %v895 = vunpack.c.l.b16 %v239
  %v896 = vunpack.c.l.b16 %v240
  %v897 = vpack.c.b16 %v754, %v753
  %v898 = vpack.c.b16 %v756, %v755
  %v899 = vpack.c.b16 %v758, %v757
  %v900 = vpack.c.b16 %v760, %v759
  %v901 = vpack.c.b16 %v762, %v761
  %v902 = vpack.c.b16 %v764, %v763
  %v903 = vpack.c.b16 %v766, %v765
  %v904 = vpack.c.b16 %v768, %v767
  %v905 = vpack.c.b16 %v770, %v769
  %v906 = vpack.c.b16 %v772, %v771
  %v907 = vpack.c.b16 %v774, %v773
  %v908 = vpack.c.b16 %v776, %v775
  %v909 = vpack.c.b16 %v778, %v777
  %v910 = vpack.c.b16 %v780, %v779
  %v911 = vpack.c.b16 %v782, %v781
  %v912 = vpack.c.b16 %v784, %v783
  %v913 = vpack.c.b16 %v786, %v785
  %v914 = vpack.c.b16 %v788, %v787
  %v915 = vpack.c.b16 %v790, %v789
  %v916 = vpack.c.b16 %v792, %v791
  %v917 = vpack.c.b16 %v794, %v793
  %v918 = vpack.c.b16 %v796, %v795
  %v919 = vpack.c.b16 %v798, %v797
  %v920 = vpack.c.b16 %v800, %v799
  %v921 = vpack.c.b16 %v802, %v801
  %v922 = vpack.c.b16 %v804, %v803
  %v923 = vpack.c.b16 %v806, %v805
  %v924 = vpack.c.b16 %v808, %v807
  %v925 = vpack.c.b16 %v810, %v809
  %v926 = vpack.c.b16 %v812, %v811
  %v927 = vpack.c.b16 %v814, %v813
  %v928 = vpack.c.b16 %v816, %v815
  %v929 = vpack.c.b16 %v818, %v817
  %v930 = vpack.c.b16 %v820, %v819
  %v931 = vpack.c.b16 %v822, %v821
  %v932 = vpack.c.b16 %v824, %v823
  %v933 = vpack.c.b16 %v826, %v825
  %v934 = vpack.c.b16 %v828, %v827
  %v935 = vpack.c.b16 %v830, %v829
  %v936 = vpack.c.b16 %v832, %v831
  %v937 = vpack.c.b16 %v834, %v833
  %v938 = vpack.c.b16 %v836, %v835
  %v939 = vpack.c.b16 %v838, %v837
  %v940 = vpack.c.b16 %v840, %v839
  %v941 = vpack.c.b16 %v842, %v841
  %v942 = vpack.c.b16 %v844, %v843
  %v943 = vpack.c.b16 %v846, %v845
  %v944 = vpack.c.b16 %v848, %v847
  %v945 = vpack.c.b16 %v850, %v849
  %v946 = vpack.c.b16 %v852, %v851
  %v947 = vpack.c.b16 %v854, %v853
  %v948 = vpack.c.b16 %v856, %v855
  %v949 = vpack.c.b16 %v858, %v857
  %v950 = vpack.c.b16 %v860, %v859
  %v951 = vpack.c.b16 %v862, %v861
  %v952 = vpack.c.b16 %v864, %v863
  %v953 = vpack.c.b16 %v866, %v865
  %v954 = vpack.c.b16 %v868, %v867
  %v955 = vpack.c.b16 %v870, %v869
  %v956 = vpack.c.b16 %v872, %v871
  %v957 = vpack.c.b16 %v874, %v873
  %v958 = vpack.c.b16 %v876, %v875
  %v959 = vpack.c.b16 %v878, %v877
  %v960 = vpack.c.b16 %v880, %v879
  %v961 = vpack.c.b16 %v882, %v881
  %v962 = vpack.c.b16 %v884, %v883
  %v963 = vpack.c.b16 %v886, %v885
  %v964 = vpack.c.b16 %v888, %v887
  %v965 = vpack.c.b16 %v890, %v889
  %v966 = vpack.c.b16 %v892, %v891
  %v967 = vpack.c.b16 %v894, %v893
  %v968 = vpack.c.b16 %v896, %v895
  %1041 = vmatpush.bf16.msra.mxu0 %v904
  %1042 = vmatpush.bf16.msra.mxu0 %v903
  %1043 = vmatpush.bf16.msra.mxu0 %v902
  %1044 = vmatpush.bf16.msra.mxu0 %v901
  %1045 = vmatpush.bf16.msra.mxu0 %v900
  %1046 = vmatpush.bf16.msra.mxu0 %v899
  %1047 = vmatpush.bf16.msra.mxu0 %v898
  %1048 = vmatpush.bf16.msra.mxu0 %v897
  %1049 = vmatmul.bf16.gmra.mxu0 %v465
  %v1050 = vpop.f32.mrf.mxu0
  %v1051 = vadd.f32 0.0, %v1050
  %v1052 = vpop.f32.mrf.mxu0
  %v1053 = vadd.f32 0.0, %v1052
  %1054 = vmatmul.bf16.gmra.mxu0 %v474
  %v1055 = vpop.f32.mrf.mxu0
  %v1056 = vadd.f32 0.0, %v1055
  %v1057 = vpop.f32.mrf.mxu0
  %v1058 = vadd.f32 0.0, %v1057
  %1059 = vmatmul.bf16.gmra.mxu0 %v483
  %v1060 = vpop.f32.mrf.mxu0
  %v1061 = vadd.f32 0.0, %v1060
  %v1062 = vpop.f32.mrf.mxu0
  %v1063 = vadd.f32 0.0, %v1062
  %1064 = vmatmul.bf16.gmra.mxu0 %v492
  %v1065 = vpop.f32.mrf.mxu0
  %v1066 = vadd.f32 0.0, %v1065
  %v1067 = vpop.f32.mrf.mxu0
  %v1068 = vadd.f32 0.0, %v1067
  %1069 = vmatmul.bf16.gmra.mxu0 %v501
  %v1070 = vpop.f32.mrf.mxu0
  %v1071 = vadd.f32 0.0, %v1070
  %v1072 = vpop.f32.mrf.mxu0
  %v1073 = vadd.f32 0.0, %v1072
  %1074 = vmatmul.bf16.gmra.mxu0 %v510
  %v1075 = vpop.f32.mrf.mxu0
  %v1076 = vadd.f32 0.0, %v1075
  %v1077 = vpop.f32.mrf.mxu0
  %v1078 = vadd.f32 0.0, %v1077
  %1079 = vmatmul.bf16.gmra.mxu0 %v519
  %v1080 = vpop.f32.mrf.mxu0
  %v1081 = vadd.f32 0.0, %v1080
  %v1082 = vpop.f32.mrf.mxu0
  %v1083 = vadd.f32 0.0, %v1082
  %1084 = vmatmul.bf16.gmra.mxu0 %v528
  %v1085 = vpop.f32.mrf.mxu0
  %v1086 = vadd.f32 0.0, %v1085
  %v1087 = vpop.f32.mrf.mxu0
  %v1088 = vadd.f32 0.0, %v1087
  %1089 = vdwg.mxu0
  %1090 = vmatpush.bf16.msra.mxu0 %v912
  %1091 = vmatpush.bf16.msra.mxu0 %v911
  %1092 = vmatpush.bf16.msra.mxu0 %v910
  %1093 = vmatpush.bf16.msra.mxu0 %v909
  %1094 = vmatpush.bf16.msra.mxu0 %v908
  %1095 = vmatpush.bf16.msra.mxu0 %v907
  %1096 = vmatpush.bf16.msra.mxu0 %v906
  %1097 = vmatpush.bf16.msra.mxu0 %v905
  %1098 = vmatmul.bf16.gmra.mxu0 %v466
  %v1099 = vpop.f32.mrf.mxu0
  %v1100 = vadd.f32 %v1051, %v1099
  %v1101 = vpop.f32.mrf.mxu0
  %v1102 = vadd.f32 %v1053, %v1101
  %1103 = vmatmul.bf16.gmra.mxu0 %v475
  %v1104 = vpop.f32.mrf.mxu0
  %v1105 = vadd.f32 %v1056, %v1104
  %v1106 = vpop.f32.mrf.mxu0
  %v1107 = vadd.f32 %v1058, %v1106
  %1108 = vmatmul.bf16.gmra.mxu0 %v484
  %v1109 = vpop.f32.mrf.mxu0
  %v1110 = vadd.f32 %v1061, %v1109
  %v1111 = vpop.f32.mrf.mxu0
  %v1112 = vadd.f32 %v1063, %v1111
  %1113 = vmatmul.bf16.gmra.mxu0 %v493
  %v1114 = vpop.f32.mrf.mxu0
  %v1115 = vadd.f32 %v1066, %v1114
  %v1116 = vpop.f32.mrf.mxu0
  %v1117 = vadd.f32 %v1068, %v1116
  %1118 = vmatmul.bf16.gmra.mxu0 %v502
  %v1119 = vpop.f32.mrf.mxu0
  %v1120 = vadd.f32 %v1071, %v1119
  %v1121 = vpop.f32.mrf.mxu0
  %v1122 = vadd.f32 %v1073, %v1121
  %1123 = vmatmul.bf16.gmra.mxu0 %v511
  %v1124 = vpop.f32.mrf.mxu0
  %v1125 = vadd.f32 %v1076, %v1124
  %v1126 = vpop.f32.mrf.mxu0
  %v1127 = vadd.f32 %v1078, %v1126
  %1128 = vmatmul.bf16.gmra.mxu0 %v520
  %v1129 = vpop.f32.mrf.mxu0
  %v1130 = vadd.f32 %v1081, %v1129
  %v1131 = vpop.f32.mrf.mxu0
  %v1132 = vadd.f32 %v1083, %v1131
  %1133 = vmatmul.bf16.gmra.mxu0 %v529
  %v1134 = vpop.f32.mrf.mxu0
  %v1135 = vadd.f32 %v1086, %v1134
  %v1136 = vpop.f32.mrf.mxu0
  %v1137 = vadd.f32 %v1088, %v1136
  %1138 = vdwg.mxu0
  %1139 = vmatpush.bf16.msra.mxu0 %v920
  %1140 = vmatpush.bf16.msra.mxu0 %v919
  %1141 = vmatpush.bf16.msra.mxu0 %v918
  %1142 = vmatpush.bf16.msra.mxu0 %v917
  %1143 = vmatpush.bf16.msra.mxu0 %v916
  %1144 = vmatpush.bf16.msra.mxu0 %v915
  %1145 = vmatpush.bf16.msra.mxu0 %v914
  %1146 = vmatpush.bf16.msra.mxu0 %v913
  %1147 = vmatmul.bf16.gmra.mxu0 %v467
  %v1148 = vpop.f32.mrf.mxu0
  %v1149 = vadd.f32 %v1100, %v1148
  %v1150 = vpop.f32.mrf.mxu0
  %v1151 = vadd.f32 %v1102, %v1150
  %1152 = vmatmul.bf16.gmra.mxu0 %v476
  %v1153 = vpop.f32.mrf.mxu0
  %v1154 = vadd.f32 %v1105, %v1153
  %v1155 = vpop.f32.mrf.mxu0
  %v1156 = vadd.f32 %v1107, %v1155
  %1157 = vmatmul.bf16.gmra.mxu0 %v485
  %v1158 = vpop.f32.mrf.mxu0
  %v1159 = vadd.f32 %v1110, %v1158
  %v1160 = vpop.f32.mrf.mxu0
  %v1161 = vadd.f32 %v1112, %v1160
  %1162 = vmatmul.bf16.gmra.mxu0 %v494
  %v1163 = vpop.f32.mrf.mxu0
  %v1164 = vadd.f32 %v1115, %v1163
  %v1165 = vpop.f32.mrf.mxu0
  %v1166 = vadd.f32 %v1117, %v1165
  %1167 = vmatmul.bf16.gmra.mxu0 %v503
  %v1168 = vpop.f32.mrf.mxu0
  %v1169 = vadd.f32 %v1120, %v1168
  %v1170 = vpop.f32.mrf.mxu0
  %v1171 = vadd.f32 %v1122, %v1170
  %1172 = vmatmul.bf16.gmra.mxu0 %v512
  %v1173 = vpop.f32.mrf.mxu0
  %v1174 = vadd.f32 %v1125, %v1173
  %v1175 = vpop.f32.mrf.mxu0
  %v1176 = vadd.f32 %v1127, %v1175
  %1177 = vmatmul.bf16.gmra.mxu0 %v521
  %v1178 = vpop.f32.mrf.mxu0
  %v1179 = vadd.f32 %v1130, %v1178
  %v1180 = vpop.f32.mrf.mxu0
  %v1181 = vadd.f32 %v1132, %v1180
  %1182 = vmatmul.bf16.gmra.mxu0 %v530
  %v1183 = vpop.f32.mrf.mxu0
  %v1184 = vadd.f32 %v1135, %v1183
  %v1185 = vpop.f32.mrf.mxu0
  %v1186 = vadd.f32 %v1137, %v1185
  %1187 = vdwg.mxu0
  %1188 = vmatpush.bf16.msra.mxu0 %v928
  %1189 = vmatpush.bf16.msra.mxu0 %v927
  %1190 = vmatpush.bf16.msra.mxu0 %v926
  %1191 = vmatpush.bf16.msra.mxu0 %v925
  %1192 = vmatpush.bf16.msra.mxu0 %v924
  %1193 = vmatpush.bf16.msra.mxu0 %v923
  %1194 = vmatpush.bf16.msra.mxu0 %v922
  %1195 = vmatpush.bf16.msra.mxu0 %v921
  %1196 = vmatmul.bf16.gmra.mxu0 %v468
  %v1197 = vpop.f32.mrf.mxu0
  %v1198 = vadd.f32 %v1149, %v1197
  %v1199 = vpop.f32.mrf.mxu0
  %v1200 = vadd.f32 %v1151, %v1199
  %1201 = vmatmul.bf16.gmra.mxu0 %v477
  %v1202 = vpop.f32.mrf.mxu0
  %v1203 = vadd.f32 %v1154, %v1202
  %v1204 = vpop.f32.mrf.mxu0
  %v1205 = vadd.f32 %v1156, %v1204
  %1206 = vmatmul.bf16.gmra.mxu0 %v486
  %v1207 = vpop.f32.mrf.mxu0
  %v1208 = vadd.f32 %v1159, %v1207
  %v1209 = vpop.f32.mrf.mxu0
  %v1210 = vadd.f32 %v1161, %v1209
  %1211 = vmatmul.bf16.gmra.mxu0 %v495
  %v1212 = vpop.f32.mrf.mxu0
  %v1213 = vadd.f32 %v1164, %v1212
  %v1214 = vpop.f32.mrf.mxu0
  %v1215 = vadd.f32 %v1166, %v1214
  %1216 = vmatmul.bf16.gmra.mxu0 %v504
  %v1217 = vpop.f32.mrf.mxu0
  %v1218 = vadd.f32 %v1169, %v1217
  %v1219 = vpop.f32.mrf.mxu0
  %v1220 = vadd.f32 %v1171, %v1219
  %1221 = vmatmul.bf16.gmra.mxu0 %v513
  %v1222 = vpop.f32.mrf.mxu0
  %v1223 = vadd.f32 %v1174, %v1222
  %v1224 = vpop.f32.mrf.mxu0
  %v1225 = vadd.f32 %v1176, %v1224
  %1226 = vmatmul.bf16.gmra.mxu0 %v522
  %v1227 = vpop.f32.mrf.mxu0
  %v1228 = vadd.f32 %v1179, %v1227
  %v1229 = vpop.f32.mrf.mxu0
  %v1230 = vadd.f32 %v1181, %v1229
  %1231 = vmatmul.bf16.gmra.mxu0 %v531
  %v1232 = vpop.f32.mrf.mxu0
  %v1233 = vadd.f32 %v1184, %v1232
  %v1234 = vpop.f32.mrf.mxu0
  %v1235 = vadd.f32 %v1186, %v1234
  %1236 = vdwg.mxu0
  %1237 = vmatpush.bf16.msra.mxu0 %v936
  %1238 = vmatpush.bf16.msra.mxu0 %v935
  %1239 = vmatpush.bf16.msra.mxu0 %v934
  %1240 = vmatpush.bf16.msra.mxu0 %v933
  %1241 = vmatpush.bf16.msra.mxu0 %v932
  %1242 = vmatpush.bf16.msra.mxu0 %v931
  %1243 = vmatpush.bf16.msra.mxu0 %v930
  %1244 = vmatpush.bf16.msra.mxu0 %v929
  %1245 = vmatmul.bf16.gmra.mxu0 %v469
  %v1246 = vpop.f32.mrf.mxu0
  %v1247 = vadd.f32 %v1198, %v1246
  %v1248 = vpop.f32.mrf.mxu0
  %v1249 = vadd.f32 %v1200, %v1248
  %1250 = vmatmul.bf16.gmra.mxu0 %v478
  %v1251 = vpop.f32.mrf.mxu0
  %v1252 = vadd.f32 %v1203, %v1251
  %v1253 = vpop.f32.mrf.mxu0
  %v1254 = vadd.f32 %v1205, %v1253
  %1255 = vmatmul.bf16.gmra.mxu0 %v487
  %v1256 = vpop.f32.mrf.mxu0
  %v1257 = vadd.f32 %v1208, %v1256
  %v1258 = vpop.f32.mrf.mxu0
  %v1259 = vadd.f32 %v1210, %v1258
  %1260 = vmatmul.bf16.gmra.mxu0 %v496
  %v1261 = vpop.f32.mrf.mxu0
  %v1262 = vadd.f32 %v1213, %v1261
  %v1263 = vpop.f32.mrf.mxu0
  %v1264 = vadd.f32 %v1215, %v1263
  %1265 = vmatmul.bf16.gmra.mxu0 %v505
  %v1266 = vpop.f32.mrf.mxu0
  %v1267 = vadd.f32 %v1218, %v1266
  %v1268 = vpop.f32.mrf.mxu0
  %v1269 = vadd.f32 %v1220, %v1268
  %1270 = vmatmul.bf16.gmra.mxu0 %v514
  %v1271 = vpop.f32.mrf.mxu0
  %v1272 = vadd.f32 %v1223, %v1271
  %v1273 = vpop.f32.mrf.mxu0
  %v1274 = vadd.f32 %v1225, %v1273
  %1275 = vmatmul.bf16.gmra.mxu0 %v523
  %v1276 = vpop.f32.mrf.mxu0
  %v1277 = vadd.f32 %v1228, %v1276
  %v1278 = vpop.f32.mrf.mxu0
  %v1279 = vadd.f32 %v1230, %v1278
  %1280 = vmatmul.bf16.gmra.mxu0 %v532
  %v1281 = vpop.f32.mrf.mxu0
  %v1282 = vadd.f32 %v1233, %v1281
  %v1283 = vpop.f32.mrf.mxu0
  %v1284 = vadd.f32 %v1235, %v1283
  %1285 = vdwg.mxu0
  %1286 = vmatpush.bf16.msra.mxu0 %v944
  %1287 = vmatpush.bf16.msra.mxu0 %v943
  %1288 = vmatpush.bf16.msra.mxu0 %v942
  %1289 = vmatpush.bf16.msra.mxu0 %v941
  %1290 = vmatpush.bf16.msra.mxu0 %v940
  %1291 = vmatpush.bf16.msra.mxu0 %v939
  %1292 = vmatpush.bf16.msra.mxu0 %v938
  %1293 = vmatpush.bf16.msra.mxu0 %v937
  %1294 = vmatmul.bf16.gmra.mxu0 %v470
  %v1295 = vpop.f32.mrf.mxu0
  %v1296 = vadd.f32 %v1247, %v1295
  %v1297 = vpop.f32.mrf.mxu0
  %v1298 = vadd.f32 %v1249, %v1297
  %1299 = vmatmul.bf16.gmra.mxu0 %v479
  %v1300 = vpop.f32.mrf.mxu0
  %v1301 = vadd.f32 %v1252, %v1300
  %v1302 = vpop.f32.mrf.mxu0
  %v1303 = vadd.f32 %v1254, %v1302
  %1304 = vmatmul.bf16.gmra.mxu0 %v488
  %v1305 = vpop.f32.mrf.mxu0
  %v1306 = vadd.f32 %v1257, %v1305
  %v1307 = vpop.f32.mrf.mxu0
  %v1308 = vadd.f32 %v1259, %v1307
  %1309 = vmatmul.bf16.gmra.mxu0 %v497
  %v1310 = vpop.f32.mrf.mxu0
  %v1311 = vadd.f32 %v1262, %v1310
  %v1312 = vpop.f32.mrf.mxu0
  %v1313 = vadd.f32 %v1264, %v1312
  %1314 = vmatmul.bf16.gmra.mxu0 %v506
  %v1315 = vpop.f32.mrf.mxu0
  %v1316 = vadd.f32 %v1267, %v1315
  %v1317 = vpop.f32.mrf.mxu0
  %v1318 = vadd.f32 %v1269, %v1317
  %1319 = vmatmul.bf16.gmra.mxu0 %v515
  %v1320 = vpop.f32.mrf.mxu0
  %v1321 = vadd.f32 %v1272, %v1320
  %v1322 = vpop.f32.mrf.mxu0
  %v1323 = vadd.f32 %v1274, %v1322
  %1324 = vmatmul.bf16.gmra.mxu0 %v524
  %v1325 = vpop.f32.mrf.mxu0
  %v1326 = vadd.f32 %v1277, %v1325
  %v1327 = vpop.f32.mrf.mxu0
  %v1328 = vadd.f32 %v1279, %v1327
  %1329 = vmatmul.bf16.gmra.mxu0 %v533
  %v1330 = vpop.f32.mrf.mxu0
  %v1331 = vadd.f32 %v1282, %v1330
  %v1332 = vpop.f32.mrf.mxu0
  %v1333 = vadd.f32 %v1284, %v1332
  %1334 = vdwg.mxu0
  %1335 = vmatpush.bf16.msra.mxu0 %v952
  %1336 = vmatpush.bf16.msra.mxu0 %v951
  %1337 = vmatpush.bf16.msra.mxu0 %v950
  %1338 = vmatpush.bf16.msra.mxu0 %v949
  %1339 = vmatpush.bf16.msra.mxu0 %v948
  %1340 = vmatpush.bf16.msra.mxu0 %v947
  %1341 = vmatpush.bf16.msra.mxu0 %v946
  %1342 = vmatpush.bf16.msra.mxu0 %v945
  %1343 = vmatmul.bf16.gmra.mxu0 %v471
  %v1344 = vpop.f32.mrf.mxu0
  %v1345 = vadd.f32 %v1296, %v1344
  %v1346 = vpop.f32.mrf.mxu0
  %v1347 = vadd.f32 %v1298, %v1346
  %1348 = vmatmul.bf16.gmra.mxu0 %v480
  %v1349 = vpop.f32.mrf.mxu0
  %v1350 = vadd.f32 %v1301, %v1349
  %v1351 = vpop.f32.mrf.mxu0
  %v1352 = vadd.f32 %v1303, %v1351
  %1353 = vmatmul.bf16.gmra.mxu0 %v489
  %v1354 = vpop.f32.mrf.mxu0
  %v1355 = vadd.f32 %v1306, %v1354
  %v1356 = vpop.f32.mrf.mxu0
  %v1357 = vadd.f32 %v1308, %v1356
  %1358 = vmatmul.bf16.gmra.mxu0 %v498
  %v1359 = vpop.f32.mrf.mxu0
  %v1360 = vadd.f32 %v1311, %v1359
  %v1361 = vpop.f32.mrf.mxu0
  %v1362 = vadd.f32 %v1313, %v1361
  %1363 = vmatmul.bf16.gmra.mxu0 %v507
  %v1364 = vpop.f32.mrf.mxu0
  %v1365 = vadd.f32 %v1316, %v1364
  %v1366 = vpop.f32.mrf.mxu0
  %v1367 = vadd.f32 %v1318, %v1366
  %1368 = vmatmul.bf16.gmra.mxu0 %v516
  %v1369 = vpop.f32.mrf.mxu0
  %v1370 = vadd.f32 %v1321, %v1369
  %v1371 = vpop.f32.mrf.mxu0
  %v1372 = vadd.f32 %v1323, %v1371
  %1373 = vmatmul.bf16.gmra.mxu0 %v525
  %v1374 = vpop.f32.mrf.mxu0
  %v1375 = vadd.f32 %v1326, %v1374
  %v1376 = vpop.f32.mrf.mxu0
  %v1377 = vadd.f32 %v1328, %v1376
  %1378 = vmatmul.bf16.gmra.mxu0 %v534
  %v1379 = vpop.f32.mrf.mxu0
  %v1380 = vadd.f32 %v1331, %v1379
  %v1381 = vpop.f32.mrf.mxu0
  %v1382 = vadd.f32 %v1333, %v1381
  %1383 = vdwg.mxu0
  %1384 = vmatpush.bf16.msra.mxu0 %v960
  %1385 = vmatpush.bf16.msra.mxu0 %v959
  %1386 = vmatpush.bf16.msra.mxu0 %v958
  %1387 = vmatpush.bf16.msra.mxu0 %v957
  %1388 = vmatpush.bf16.msra.mxu0 %v956
  %1389 = vmatpush.bf16.msra.mxu0 %v955
  %1390 = vmatpush.bf16.msra.mxu0 %v954
  %1391 = vmatpush.bf16.msra.mxu0 %v953
  %1392 = vmatmul.bf16.gmra.mxu0 %v472
  %v1393 = vpop.f32.mrf.mxu0
  %v1394 = vadd.f32 %v1345, %v1393
  %v1395 = vpop.f32.mrf.mxu0
  %v1396 = vadd.f32 %v1347, %v1395
  %1397 = vmatmul.bf16.gmra.mxu0 %v481
  %v1398 = vpop.f32.mrf.mxu0
  %v1399 = vadd.f32 %v1350, %v1398
  %v1400 = vpop.f32.mrf.mxu0
  %v1401 = vadd.f32 %v1352, %v1400
  %1402 = vmatmul.bf16.gmra.mxu0 %v490
  %v1403 = vpop.f32.mrf.mxu0
  %v1404 = vadd.f32 %v1355, %v1403
  %v1405 = vpop.f32.mrf.mxu0
  %v1406 = vadd.f32 %v1357, %v1405
  %1407 = vmatmul.bf16.gmra.mxu0 %v499
  %v1408 = vpop.f32.mrf.mxu0
  %v1409 = vadd.f32 %v1360, %v1408
  %v1410 = vpop.f32.mrf.mxu0
  %v1411 = vadd.f32 %v1362, %v1410
  %1412 = vmatmul.bf16.gmra.mxu0 %v508
  %v1413 = vpop.f32.mrf.mxu0
  %v1414 = vadd.f32 %v1365, %v1413
  %v1415 = vpop.f32.mrf.mxu0
  %v1416 = vadd.f32 %v1367, %v1415
  %1417 = vmatmul.bf16.gmra.mxu0 %v517
  %v1418 = vpop.f32.mrf.mxu0
  %v1419 = vadd.f32 %v1370, %v1418
  %v1420 = vpop.f32.mrf.mxu0
  %v1421 = vadd.f32 %v1372, %v1420
  %1422 = vmatmul.bf16.gmra.mxu0 %v526
  %v1423 = vpop.f32.mrf.mxu0
  %v1424 = vadd.f32 %v1375, %v1423
  %v1425 = vpop.f32.mrf.mxu0
  %v1426 = vadd.f32 %v1377, %v1425
  %1427 = vmatmul.bf16.gmra.mxu0 %v535
  %v1428 = vpop.f32.mrf.mxu0
  %v1429 = vadd.f32 %v1380, %v1428
  %v1430 = vpop.f32.mrf.mxu0
  %v1431 = vadd.f32 %v1382, %v1430
  %1432 = vdwg.mxu0
  %1433 = vmatpush.bf16.msra.mxu0 %v968
  %1434 = vmatpush.bf16.msra.mxu0 %v967
  %1435 = vmatpush.bf16.msra.mxu0 %v966
  %1436 = vmatpush.bf16.msra.mxu0 %v965
  %1437 = vmatpush.bf16.msra.mxu0 %v964
  %1438 = vmatpush.bf16.msra.mxu0 %v963
  %1439 = vmatpush.bf16.msra.mxu0 %v962
  %1440 = vmatpush.bf16.msra.mxu0 %v961
  %1441 = vmatmul.bf16.gmra.mxu0 %v473
  %v1442 = vpop.f32.mrf.mxu0
  %v1443 = vadd.f32 %v1394, %v1442
  %v1444 = vpop.f32.mrf.mxu0
  %v1445 = vadd.f32 %v1396, %v1444
  %1446 = vmatmul.bf16.gmra.mxu0 %v482
  %v1447 = vpop.f32.mrf.mxu0
  %v1448 = vadd.f32 %v1399, %v1447
  %v1449 = vpop.f32.mrf.mxu0
  %v1450 = vadd.f32 %v1401, %v1449
  %1451 = vmatmul.bf16.gmra.mxu0 %v491
  %v1452 = vpop.f32.mrf.mxu0
  %v1453 = vadd.f32 %v1404, %v1452
  %v1454 = vpop.f32.mrf.mxu0
  %v1455 = vadd.f32 %v1406, %v1454
  %1456 = vmatmul.bf16.gmra.mxu0 %v500
  %v1457 = vpop.f32.mrf.mxu0
  %v1458 = vadd.f32 %v1409, %v1457
  %v1459 = vpop.f32.mrf.mxu0
  %v1460 = vadd.f32 %v1411, %v1459
  %1461 = vmatmul.bf16.gmra.mxu0 %v509
  %v1462 = vpop.f32.mrf.mxu0
  %v1463 = vadd.f32 %v1414, %v1462
  %v1464 = vpop.f32.mrf.mxu0
  %v1465 = vadd.f32 %v1416, %v1464
  %1466 = vmatmul.bf16.gmra.mxu0 %v518
  %v1467 = vpop.f32.mrf.mxu0
  %v1468 = vadd.f32 %v1419, %v1467
  %v1469 = vpop.f32.mrf.mxu0
  %v1470 = vadd.f32 %v1421, %v1469
  %1471 = vmatmul.bf16.gmra.mxu0 %v527
  %v1472 = vpop.f32.mrf.mxu0
  %v1473 = vadd.f32 %v1424, %v1472
  %v1474 = vpop.f32.mrf.mxu0
  %v1475 = vadd.f32 %v1426, %v1474
  %1476 = vmatmul.bf16.gmra.mxu0 %v536
  %v1477 = vpop.f32.mrf.mxu0
  %v1478 = vadd.f32 %v1429, %v1477
  %v1479 = vpop.f32.mrf.mxu0
  %v1480 = vadd.f32 %v1431, %v1479
  %1481 = vdwg.mxu0
  %1482 = vst [vmem:[#allocation2] sm:$0xff] %v1443
  %1483 = vst [vmem:[#allocation2 + $0x8] sm:$0xff] %v1445
  %1484 = vst [vmem:[#allocation2 + $0x10] sm:$0xff] %v1448
  %1485 = vst [vmem:[#allocation2 + $0x18] sm:$0xff] %v1450
  %1486 = vst [vmem:[#allocation2 + $0x20] sm:$0xff] %v1453
  %1487 = vst [vmem:[#allocation2 + $0x28] sm:$0xff] %v1455
  %1488 = vst [vmem:[#allocation2 + $0x30] sm:$0xff] %v1458
  %1489 = vst [vmem:[#allocation2 + $0x38] sm:$0xff] %v1460
  %1490 = vst [vmem:[#allocation2 + $0x40] sm:$0xff] %v1463
  %1491 = vst [vmem:[#allocation2 + $0x48] sm:$0xff] %v1465
  %1492 = vst [vmem:[#allocation2 + $0x50] sm:$0xff] %v1468
  %1493 = vst [vmem:[#allocation2 + $0x58] sm:$0xff] %v1470
  %1494 = vst [vmem:[#allocation2 + $0x60] sm:$0xff] %v1473
  %1495 = vst [vmem:[#allocation2 + $0x68] sm:$0xff] %v1475
  %1496 = vst [vmem:[#allocation2 + $0x70] sm:$0xff] %v1478
  %1497 = vst [vmem:[#allocation2 + $0x78] sm:$0xff] %v1480
  %v1498 = vadd.f32 %v1443, %v1445
  %v1499 = vadd.f32 %v1498, %v1448
  %v1500 = vadd.f32 %v1499, %v1450
  %v1501 = vadd.f32 %v1500, %v1453
  %v1502 = vadd.f32 %v1501, %v1455
  %v1503 = vadd.f32 %v1502, %v1458
  %v1504 = vadd.f32 %v1503, %v1460
  %v1505 = vadd.f32 %v1504, %v1463
  %v1506 = vadd.f32 %v1505, %v1465
  %v1507 = vadd.f32 %v1506, %v1468
  %v1508 = vadd.f32 %v1507, %v1470
  %v1509 = vadd.f32 %v1508, %v1473
  %v1510 = vadd.f32 %v1509, %v1475
  %v1511 = vadd.f32 %v1510, %v1478
  %v1512 = vadd.f32 %v1511, %v1480
  %v1513 = vrot.slane %v1512, 4
  %v1514 = vadd.f32 %v1512, %v1513
  %v1515 = vrot.slane %v1514, 2
  %v1516 = vadd.f32 %v1514, %v1515
  %v1517 = vrot.slane %v1516, 1
  %v1518 = vadd.f32 %v1516, %v1517
  %v1519 = vadd.f32 %v1518, 0.0
  %v1520 = vmul.f32 %v1443, %v1443
  %v1521 = vmul.f32 %v1445, %v1445
  %v1522 = vmul.f32 %v1448, %v1448
  %v1523 = vmul.f32 %v1450, %v1450
  %v1524 = vmul.f32 %v1453, %v1453
  %v1525 = vmul.f32 %v1455, %v1455
  %v1526 = vmul.f32 %v1458, %v1458
  %v1527 = vmul.f32 %v1460, %v1460
  %v1528 = vmul.f32 %v1463, %v1463
  %v1529 = vmul.f32 %v1465, %v1465
  %v1530 = vmul.f32 %v1468, %v1468
  %v1531 = vmul.f32 %v1470, %v1470
  %v1532 = vmul.f32 %v1473, %v1473
  %v1533 = vmul.f32 %v1475, %v1475
  %v1534 = vmul.f32 %v1478, %v1478
  %v1535 = vmul.f32 %v1480, %v1480
  %v1536 = vadd.f32 %v1520, %v1521
  %v1537 = vadd.f32 %v1536, %v1522
  %v1538 = vadd.f32 %v1537, %v1523
  %v1539 = vadd.f32 %v1538, %v1524
  %v1540 = vadd.f32 %v1539, %v1525
  %v1541 = vadd.f32 %v1540, %v1526
  %v1542 = vadd.f32 %v1541, %v1527
  %v1543 = vadd.f32 %v1542, %v1528
  %v1544 = vadd.f32 %v1543, %v1529
  %v1545 = vadd.f32 %v1544, %v1530
  %v1546 = vadd.f32 %v1545, %v1531
  %v1547 = vadd.f32 %v1546, %v1532
  %v1548 = vadd.f32 %v1547, %v1533
  %v1549 = vadd.f32 %v1548, %v1534
  %v1550 = vadd.f32 %v1549, %v1535
  %v1551 = vrot.slane %v1550, 4
  %v1552 = vadd.f32 %v1550, %v1551
  %v1553 = vrot.slane %v1552, 2
  %v1554 = vadd.f32 %v1552, %v1553
  %v1555 = vrot.slane %v1554, 1
  %v1556 = vadd.f32 %v1554, %v1555
  %v1557 = vadd.f32 %v1556, 0.0
  %v1558 = vmul.f32 %v1519, 0.0078125
  %v1559 = vmul.f32 %v1557, 0.0078125
  %v1560 = vmul.f32 %v1558, %v1558
  %v1561 = vsub.f32 %v1559, %v1560
  %v1562 = vmax.f32 %v1561, 0.0
  %v1563 = vld [vmem:[%s2] sm:$0x1]
  %v1564 = vadd.f32 %v1562, 1e-05
  %v1565 = vrsqrt.pop %v1564
  %v1566 = vmul.f32 %v1565, %v1564
  %v1567 = vmul.f32 %v1566, %v1565
  %v1568 = vmul.f32 0.5, %v1567
  %v1569 = vsub.f32 1.5, %v1568
  %v1570 = vmul.f32 %v1565, %v1569
  %vm1571 = vweird.f32 %v1564
  %vm1572 = vweird.f32 %v1565
  %vm1573 = vmor %vm1571, %vm1572
  %v1574 = vsel %vm1573, %v1565, %v1570
  %v1575 = vmul.f32 %v1563, %v1574
  %v1576 = vld [vmem:[%s3] sm:$0x1]
  %v1577 = vmul.f32 %v1558, %v1575
  %v1578 = vsub.f32 %v1576, %v1577
  %v1579 = vld [vmem:[#allocation2] sm:$0xff]
  %v1580 = vld [vmem:[#allocation2 + $0x8] sm:$0xff]
  %v1581 = vld [vmem:[#allocation2 + $0x10] sm:$0xff]
  %v1582 = vld [vmem:[#allocation2 + $0x18] sm:$0xff]
  %v1583 = vld [vmem:[#allocation2 + $0x20] sm:$0xff]
  %v1584 = vld [vmem:[#allocation2 + $0x28] sm:$0xff]
  %v1585 = vld [vmem:[#allocation2 + $0x30] sm:$0xff]
  %v1586 = vld [vmem:[#allocation2 + $0x38] sm:$0xff]
  %v1587 = vld [vmem:[#allocation2 + $0x40] sm:$0xff]
  %v1588 = vld [vmem:[#allocation2 + $0x48] sm:$0xff]
  %v1589 = vld [vmem:[#allocation2 + $0x50] sm:$0xff]
  %v1590 = vld [vmem:[#allocation2 + $0x58] sm:$0xff]
  %v1591 = vld [vmem:[#allocation2 + $0x60] sm:$0xff]
  %v1592 = vld [vmem:[#allocation2 + $0x68] sm:$0xff]
  %v1593 = vld [vmem:[#allocation2 + $0x70] sm:$0xff]
  %v1594 = vld [vmem:[#allocation2 + $0x78] sm:$0xff]
  %v1596 = vperm.slane %v1575, 0
  %v1598 = vmul.f32 %v1579, %v1596
  %v1599 = vmul.f32 %v1580, %v1596
  %v1600 = vmul.f32 %v1581, %v1596
  %v1601 = vmul.f32 %v1582, %v1596
  %v1602 = vmul.f32 %v1583, %v1596
  %v1603 = vmul.f32 %v1584, %v1596
  %v1604 = vmul.f32 %v1585, %v1596
  %v1605 = vmul.f32 %v1586, %v1596
  %v1606 = vmul.f32 %v1587, %v1596
  %v1607 = vmul.f32 %v1588, %v1596
  %v1608 = vmul.f32 %v1589, %v1596
  %v1609 = vmul.f32 %v1590, %v1596
  %v1610 = vmul.f32 %v1591, %v1596
  %v1611 = vmul.f32 %v1592, %v1596
  %v1612 = vmul.f32 %v1593, %v1596
  %v1613 = vmul.f32 %v1594, %v1596
  %v1615 = vperm.slane %v1578, 0
  %v1617 = vadd.f32 %v1598, %v1615
  %v1618 = vadd.f32 %v1599, %v1615
  %v1619 = vadd.f32 %v1600, %v1615
  %v1620 = vadd.f32 %v1601, %v1615
  %v1621 = vadd.f32 %v1602, %v1615
  %v1622 = vadd.f32 %v1603, %v1615
  %v1623 = vadd.f32 %v1604, %v1615
  %v1624 = vadd.f32 %v1605, %v1615
  %v1625 = vadd.f32 %v1606, %v1615
  %v1626 = vadd.f32 %v1607, %v1615
  %v1627 = vadd.f32 %v1608, %v1615
  %v1628 = vadd.f32 %v1609, %v1615
  %v1629 = vadd.f32 %v1610, %v1615
  %v1630 = vadd.f32 %v1611, %v1615
  %v1631 = vadd.f32 %v1612, %v1615
  %v1632 = vadd.f32 %v1613, %v1615
  %v1633 = vmax.f32 %v1617, 0.0
  %v1634 = vmax.f32 %v1618, 0.0
  %v1635 = vmax.f32 %v1619, 0.0
  %v1636 = vmax.f32 %v1620, 0.0
  %v1637 = vmax.f32 %v1621, 0.0
  %v1638 = vmax.f32 %v1622, 0.0
  %v1639 = vmax.f32 %v1623, 0.0
  %v1640 = vmax.f32 %v1624, 0.0
  %v1641 = vmax.f32 %v1625, 0.0
  %v1642 = vmax.f32 %v1626, 0.0
  %v1643 = vmax.f32 %v1627, 0.0
  %v1644 = vmax.f32 %v1628, 0.0
  %v1645 = vmax.f32 %v1629, 0.0
  %v1646 = vmax.f32 %v1630, 0.0
  %v1647 = vmax.f32 %v1631, 0.0
  %v1648 = vmax.f32 %v1632, 0.0
  %v1649 = vpack.c.bf16 %v1633, %v1633
  %v1650 = vpack.c.bf16 %v1634, %v1634
  %v1651 = vpack.c.bf16 %v1635, %v1635
  %v1652 = vpack.c.bf16 %v1636, %v1636
  %v1653 = vpack.c.bf16 %v1637, %v1637
  %v1654 = vpack.c.bf16 %v1638, %v1638
  %v1655 = vpack.c.bf16 %v1639, %v1639
  %v1656 = vpack.c.bf16 %v1640, %v1640
  %v1657 = vpack.c.bf16 %v1641, %v1641
  %v1658 = vpack.c.bf16 %v1642, %v1642
  %v1659 = vpack.c.bf16 %v1643, %v1643
  %v1660 = vpack.c.bf16 %v1644, %v1644
  %v1661 = vpack.c.bf16 %v1645, %v1645
  %v1662 = vpack.c.bf16 %v1646, %v1646
  %v1663 = vpack.c.bf16 %v1647, %v1647
  %v1664 = vpack.c.bf16 %v1648, %v1648
  %1665 = vst [vmem:[%s4] sm:$0xf] %v1649
  %1666 = vst [vmem:[%s4 + $0x4] sm:$0xf] %v1650
  %1667 = vst [vmem:[%s4 + $0x8] sm:$0xf] %v1651
  %1668 = vst [vmem:[%s4 + $0xc] sm:$0xf] %v1652
  %1669 = vst [vmem:[%s4 + $0x10] sm:$0xf] %v1653
  %1670 = vst [vmem:[%s4 + $0x14] sm:$0xf] %v1654
  %1671 = vst [vmem:[%s4 + $0x18] sm:$0xf] %v1655
  %1672 = vst [vmem:[%s4 + $0x1c] sm:$0xf] %v1656
  %1673 = vst [vmem:[%s4 + $0x20] sm:$0xf] %v1657
  %1674 = vst [vmem:[%s4 + $0x24] sm:$0xf] %v1658
  %1675 = vst [vmem:[%s4 + $0x28] sm:$0xf] %v1659
  %1676 = vst [vmem:[%s4 + $0x2c] sm:$0xf] %v1660
  %1677 = vst [vmem:[%s4 + $0x30] sm:$0xf] %v1661
  %1678 = vst [vmem:[%s4 + $0x34] sm:$0xf] %v1662
  %1679 = vst [vmem:[%s4 + $0x38] sm:$0xf] %v1663
  %1680 = vst [vmem:[%s4 + $0x3c] sm:$0xf] %v1664
  // Predicated region
  $region18: #{discriminator_forward.5} parent=0 // pred_check
    _
  $region19: #{discriminator_forward.5} parent=0 // pred_check_branch
    %1682 = sbr.rel (0) target = $region21
  $region20: #{discriminator_forward.5} parent=0 // pred_region
    _
  $region21: #{discriminator_forward.5} parent=0 // pred_fallthru
    _
  // Predicated region
  $region22: #{discriminator_forward.5} parent=0 // pred_check
    _
  $region23: #{discriminator_forward.5} parent=0 // pred_check_branch
    %1684 = sbr.rel (0) target = $region25
  $region24: #{discriminator_forward.5} parent=0 // pred_region
    _
  $region25: #{discriminator_forward.5} parent=0 // pred_fallthru
    _

// kernel: discriminator_forward.6
$region0: #{discriminator_forward.6}
  #allocation0 [shape = 'u32[]', space=smem, size = 0x4, offset = 0x4, fixed_abs, tag = 'smem constant byte address 0x4 - core index']
  #allocation1 [shape = 'u32[72,128]{1,0:T(1,128)}', space=vmem, size = 0x9000, scoped, tag = 'internal scratch']
  #allocation2 [shape = 'f32[32,256]{1,0:T(8,128)}', space=vmem, size = 0x8000, scoped, tag = 'scratch operand']
  %s0 = inlined_call_operand.vmem [shape: bf16[32,512], index: 0, kind: input, shape index: {}]
  %s1 = inlined_call_operand.vmem [shape: bf16[512,256], index: 1, kind: input, shape index: {}]
  %s2 = inlined_call_operand.vmem [shape: f32[1,256], index: 2, kind: input, shape index: {}]
  %s3 = inlined_call_operand.vmem [shape: f32[1,256], index: 3, kind: input, shape index: {}]
  %s4 = inlined_call_operand.vmem [shape: bf16[32,256], index: 4, kind: output, shape index: {}]
  %s5 = sld [smem:[#allocation0]]
  $region26: #{discriminator_forward.6} parent=0
    _
  %s7 = ssub.s32 1, %s5
  %s8 = scalar_select 0, %s7, %s5
  // Predicated region
  $region2: #{discriminator_forward.6} parent=0 // pred_check
    _
  $region3: #{discriminator_forward.6} parent=0 // pred_check_branch
    %10 = sbr.rel (0) target = $region5
  $region4: #{discriminator_forward.6} parent=0 // pred_region
    _
  $region5: #{discriminator_forward.6} parent=0 // pred_fallthru
    _
  // Predicated region
  $region6: #{discriminator_forward.6} parent=0 // pred_check
    _
  $region7: #{discriminator_forward.6} parent=0 // pred_check_branch
    %12 = sbr.rel (0) target = $region9
  $region8: #{discriminator_forward.6} parent=0 // pred_region
    _
  $region9: #{discriminator_forward.6} parent=0 // pred_fallthru
    _
  // Predicated region
  $region10: #{discriminator_forward.6} parent=0 // pred_check
    _
  $region11: #{discriminator_forward.6} parent=0 // pred_check_branch
    %14 = sbr.rel (0) target = $region13
  $region12: #{discriminator_forward.6} parent=0 // pred_region
    _
  $region13: #{discriminator_forward.6} parent=0 // pred_fallthru
    _
  // Predicated region
  $region14: #{discriminator_forward.6} parent=0 // pred_check
    _
  $region15: #{discriminator_forward.6} parent=0 // pred_check_branch
    %16 = sbr.rel (0) target = $region17
  $region16: #{discriminator_forward.6} parent=0 // pred_region
    _
  $region17: #{discriminator_forward.6} parent=0 // pred_fallthru
    _
  %v17 = vld [vmem:[%s0] sm:$0xff]
  %v18 = vld [vmem:[%s0 + $0x8] sm:$0xff]
  %v19 = vld [vmem:[%s0 + $0x10] sm:$0xff]
  %v20 = vld [vmem:[%s0 + $0x18] sm:$0xff]
  %v21 = vld [vmem:[%s0 + $0x20] sm:$0xff]
  %v22 = vld [vmem:[%s0 + $0x28] sm:$0xff]
  %v23 = vld [vmem:[%s0 + $0x30] sm:$0xff]
  %v24 = vld [vmem:[%s0 + $0x38] sm:$0xff]
  %v25 = vld [vmem:[%s1] sm:$0xff]
  %v26 = vld [vmem:[%s1 + $0x8] sm:$0xff]
  %v27 = vld [vmem:[%s1 + $0x10] sm:$0xff]
  %v28 = vld [vmem:[%s1 + $0x18] sm:$0xff]
  %v29 = vld [vmem:[%s1 + $0x20] sm:$0xff]
  %v30 = vld [vmem:[%s1 + $0x28] sm:$0xff]
  %v31 = vld [vmem:[%s1 + $0x30] sm:$0xff]
  %v32 = vld [vmem:[%s1 + $0x38] sm:$0xff]
  %v33 = vld [vmem:[%s1 + $0x40] sm:$0xff]
  %v34 = vld [vmem:[%s1 + $0x48] sm:$0xff]
  %v35 = vld [vmem:[%s1 + $0x50] sm:$0xff]
  %v36 = vld [vmem:[%s1 + $0x58] sm:$0xff]
  %v37 = vld [vmem:[%s1 + $0x60] sm:$0xff]
  %v38 = vld [vmem:[%s1 + $0x68] sm:$0xff]
  %v39 = vld [vmem:[%s1 + $0x70] sm:$0xff]
  %v40 = vld [vmem:[%s1 + $0x78] sm:$0xff]
  %v41 = vld [vmem:[%s1 + $0x80] sm:$0xff]
  %v42 = vld [vmem:[%s1 + $0x88] sm:$0xff]
  %v43 = vld [vmem:[%s1 + $0x90] sm:$0xff]
  %v44 = vld [vmem:[%s1 + $0x98] sm:$0xff]
  %v45 = vld [vmem:[%s1 + $0xa0] sm:$0xff]
  %v46 = vld [vmem:[%s1 + $0xa8] sm:$0xff]
  %v47 = vld [vmem:[%s1 + $0xb0] sm:$0xff]
  %v48 = vld [vmem:[%s1 + $0xb8] sm:$0xff]
  %v49 = vld [vmem:[%s1 + $0xc0] sm:$0xff]
  %v50 = vld [vmem:[%s1 + $0xc8] sm:$0xff]
  %v51 = vld [vmem:[%s1 + $0xd0] sm:$0xff]
  %v52 = vld [vmem:[%s1 + $0xd8] sm:$0xff]
  %v53 = vld [vmem:[%s1 + $0xe0] sm:$0xff]
  %v54 = vld [vmem:[%s1 + $0xe8] sm:$0xff]
  %v55 = vld [vmem:[%s1 + $0xf0] sm:$0xff]
  %v56 = vld [vmem:[%s1 + $0xf8] sm:$0xff]
  %v57 = vld [vmem:[%s1 + $0x100] sm:$0xff]
  %v58 = vld [vmem:[%s1 + $0x108] sm:$0xff]
  %v59 = vld [vmem:[%s1 + $0x110] sm:$0xff]
  %v60 = vld [vmem:[%s1 + $0x118] sm:$0xff]
  %v61 = vld [vmem:[%s1 + $0x120] sm:$0xff]
  %v62 = vld [vmem:[%s1 + $0x128] sm:$0xff]
  %v63 = vld [vmem:[%s1 + $0x130] sm:$0xff]
  %v64 = vld [vmem:[%s1 + $0x138] sm:$0xff]
  %v65 = vld [vmem:[%s1 + $0x140] sm:$0xff]
  %v66 = vld [vmem:[%s1 + $0x148] sm:$0xff]
  %v67 = vld [vmem:[%s1 + $0x150] sm:$0xff]
  %v68 = vld [vmem:[%s1 + $0x158] sm:$0xff]
  %v69 = vld [vmem:[%s1 + $0x160] sm:$0xff]
  %v70 = vld [vmem:[%s1 + $0x168] sm:$0xff]
  %v71 = vld [vmem:[%s1 + $0x170] sm:$0xff]
  %v72 = vld [vmem:[%s1 + $0x178] sm:$0xff]
  %v73 = vld [vmem:[%s1 + $0x180] sm:$0xff]
  %v74 = vld [vmem:[%s1 + $0x188] sm:$0xff]
  %v75 = vld [vmem:[%s1 + $0x190] sm:$0xff]
  %v76 = vld [vmem:[%s1 + $0x198] sm:$0xff]
  %v77 = vld [vmem:[%s1 + $0x1a0] sm:$0xff]
  %v78 = vld [vmem:[%s1 + $0x1a8] sm:$0xff]
  %v79 = vld [vmem:[%s1 + $0x1b0] sm:$0xff]
  %v80 = vld [vmem:[%s1 + $0x1b8] sm:$0xff]
  %v81 = vld [vmem:[%s1 + $0x1c0] sm:$0xff]
  %v82 = vld [vmem:[%s1 + $0x1c8] sm:$0xff]
  %v83 = vld [vmem:[%s1 + $0x1d0] sm:$0xff]
  %v84 = vld [vmem:[%s1 + $0x1d8] sm:$0xff]
  %v85 = vld [vmem:[%s1 + $0x1e0] sm:$0xff]
  %v86 = vld [vmem:[%s1 + $0x1e8] sm:$0xff]
  %v87 = vld [vmem:[%s1 + $0x1f0] sm:$0xff]
  %v88 = vld [vmem:[%s1 + $0x1f8] sm:$0xff]
  %v97 = vunpack.c.l.b16 %v17
  %v98 = vunpack.c.h.b16 %v17
  %v99 = vunpack.c.l.b16 %v18
  %v100 = vunpack.c.h.b16 %v18
  %v101 = vunpack.c.l.b16 %v19
  %v102 = vunpack.c.h.b16 %v19
  %v103 = vunpack.c.l.b16 %v20
  %v104 = vunpack.c.h.b16 %v20
  %v105 = vunpack.c.l.b16 %v21
  %v106 = vunpack.c.h.b16 %v21
  %v107 = vunpack.c.l.b16 %v22
  %v108 = vunpack.c.h.b16 %v22
  %v109 = vunpack.c.l.b16 %v23
  %v110 = vunpack.c.h.b16 %v23
  %v111 = vunpack.c.l.b16 %v24
  %v112 = vunpack.c.h.b16 %v24
  %v113 = vpack.c.b16 %v101, %v97
  %v114 = vpack.c.b16 %v102, %v98
  %v115 = vpack.c.b16 %v103, %v99
  %v116 = vpack.c.b16 %v104, %v100
  %v117 = vpack.c.b16 %v109, %v105
  %v118 = vpack.c.b16 %v110, %v106
  %v119 = vpack.c.b16 %v111, %v107
  %v120 = vpack.c.b16 %v112, %v108
  %v193 = vunpack.c.l.b16 %v25
  %v194 = vunpack.c.h.b16 %v25
  %v195 = vunpack.c.l.b16 %v26
  %v196 = vunpack.c.h.b16 %v26
  %v197 = vunpack.c.l.b16 %v27
  %v198 = vunpack.c.h.b16 %v27
  %v199 = vunpack.c.l.b16 %v28
  %v200 = vunpack.c.h.b16 %v28
  %v201 = vunpack.c.l.b16 %v29
  %v202 = vunpack.c.h.b16 %v29
  %v203 = vunpack.c.l.b16 %v30
  %v204 = vunpack.c.h.b16 %v30
  %v205 = vunpack.c.l.b16 %v31
  %v206 = vunpack.c.h.b16 %v31
  %v207 = vunpack.c.l.b16 %v32
  %v208 = vunpack.c.h.b16 %v32
  %v209 = vunpack.c.l.b16 %v33
  %v210 = vunpack.c.h.b16 %v33
  %v211 = vunpack.c.l.b16 %v34
  %v212 = vunpack.c.h.b16 %v34
  %v213 = vunpack.c.l.b16 %v35
  %v214 = vunpack.c.h.b16 %v35
  %v215 = vunpack.c.l.b16 %v36
  %v216 = vunpack.c.h.b16 %v36
  %v217 = vunpack.c.l.b16 %v37
  %v218 = vunpack.c.h.b16 %v37
  %v219 = vunpack.c.l.b16 %v38
  %v220 = vunpack.c.h.b16 %v38
  %v221 = vunpack.c.l.b16 %v39
  %v222 = vunpack.c.h.b16 %v39
  %v223 = vunpack.c.l.b16 %v40
  %v224 = vunpack.c.h.b16 %v40
  %v225 = vunpack.c.l.b16 %v41
  %v226 = vunpack.c.h.b16 %v41
  %v227 = vunpack.c.l.b16 %v42
  %v228 = vunpack.c.h.b16 %v42
  %v229 = vunpack.c.l.b16 %v43
  %v230 = vunpack.c.h.b16 %v43
  %v231 = vunpack.c.l.b16 %v44
  %v232 = vunpack.c.h.b16 %v44
  %v233 = vunpack.c.l.b16 %v45
  %v234 = vunpack.c.h.b16 %v45
  %v235 = vunpack.c.l.b16 %v46
  %v236 = vunpack.c.h.b16 %v46
  %v237 = vunpack.c.l.b16 %v47
  %v238 = vunpack.c.h.b16 %v47
  %v239 = vunpack.c.l.b16 %v48
  %v240 = vunpack.c.h.b16 %v48
  %v241 = vunpack.c.l.b16 %v49
  %v242 = vunpack.c.h.b16 %v49
  %v243 = vunpack.c.l.b16 %v50
  %v244 = vunpack.c.h.b16 %v50
  %v245 = vunpack.c.l.b16 %v51
  %v246 = vunpack.c.h.b16 %v51
  %v247 = vunpack.c.l.b16 %v52
  %v248 = vunpack.c.h.b16 %v52
  %v249 = vunpack.c.l.b16 %v53
  %v250 = vunpack.c.h.b16 %v53
  %v251 = vunpack.c.l.b16 %v54
  %v252 = vunpack.c.h.b16 %v54
  %v253 = vunpack.c.l.b16 %v55
  %v254 = vunpack.c.h.b16 %v55
  %v255 = vunpack.c.l.b16 %v56
  %v256 = vunpack.c.h.b16 %v56
  %v257 = vunpack.c.l.b16 %v57
  %v258 = vunpack.c.h.b16 %v57
  %v259 = vunpack.c.l.b16 %v58
  %v260 = vunpack.c.h.b16 %v58
  %v261 = vunpack.c.l.b16 %v59
  %v262 = vunpack.c.h.b16 %v59
  %v263 = vunpack.c.l.b16 %v60
  %v264 = vunpack.c.h.b16 %v60
  %v265 = vunpack.c.l.b16 %v61
  %v266 = vunpack.c.h.b16 %v61
  %v267 = vunpack.c.l.b16 %v62
  %v268 = vunpack.c.h.b16 %v62
  %v269 = vunpack.c.l.b16 %v63
  %v270 = vunpack.c.h.b16 %v63
  %v271 = vunpack.c.l.b16 %v64
  %v272 = vunpack.c.h.b16 %v64
  %v273 = vunpack.c.l.b16 %v65
  %v274 = vunpack.c.h.b16 %v65
  %v275 = vunpack.c.l.b16 %v66
  %v276 = vunpack.c.h.b16 %v66
  %v277 = vunpack.c.l.b16 %v67
  %v278 = vunpack.c.h.b16 %v67
  %v279 = vunpack.c.l.b16 %v68
  %v280 = vunpack.c.h.b16 %v68
  %v281 = vunpack.c.l.b16 %v69
  %v282 = vunpack.c.h.b16 %v69
  %v283 = vunpack.c.l.b16 %v70
  %v284 = vunpack.c.h.b16 %v70
  %v285 = vunpack.c.l.b16 %v71
  %v286 = vunpack.c.h.b16 %v71
  %v287 = vunpack.c.l.b16 %v72
  %v288 = vunpack.c.h.b16 %v72
  %v289 = vunpack.c.l.b16 %v73
  %v290 = vunpack.c.h.b16 %v73
  %v291 = vunpack.c.l.b16 %v74
  %v292 = vunpack.c.h.b16 %v74
  %v293 = vunpack.c.l.b16 %v75
  %v294 = vunpack.c.h.b16 %v75
  %v295 = vunpack.c.l.b16 %v76
  %v296 = vunpack.c.h.b16 %v76
  %v297 = vunpack.c.l.b16 %v77
  %v298 = vunpack.c.h.b16 %v77
  %v299 = vunpack.c.l.b16 %v78
  %v300 = vunpack.c.h.b16 %v78
  %v301 = vunpack.c.l.b16 %v79
  %v302 = vunpack.c.h.b16 %v79
  %v303 = vunpack.c.l.b16 %v80
  %v304 = vunpack.c.h.b16 %v80
  %v305 = vunpack.c.l.b16 %v81
  %v306 = vunpack.c.h.b16 %v81
  %v307 = vunpack.c.l.b16 %v82
  %v308 = vunpack.c.h.b16 %v82
  %v309 = vunpack.c.l.b16 %v83
  %v310 = vunpack.c.h.b16 %v83
  %v311 = vunpack.c.l.b16 %v84
  %v312 = vunpack.c.h.b16 %v84
  %v313 = vunpack.c.l.b16 %v85
  %v314 = vunpack.c.h.b16 %v85
  %v315 = vunpack.c.l.b16 %v86
  %v316 = vunpack.c.h.b16 %v86
  %v317 = vunpack.c.l.b16 %v87
  %v318 = vunpack.c.h.b16 %v87
  %v319 = vunpack.c.l.b16 %v88
  %v320 = vunpack.c.h.b16 %v88
  %v321 = vpack.c.b16 %v195, %v193
  %v322 = vpack.c.b16 %v196, %v194
  %v323 = vpack.c.b16 %v199, %v197
  %v324 = vpack.c.b16 %v200, %v198
  %v325 = vpack.c.b16 %v203, %v201
  %v326 = vpack.c.b16 %v204, %v202
  %v327 = vpack.c.b16 %v207, %v205
  %v328 = vpack.c.b16 %v208, %v206
  %v329 = vpack.c.b16 %v211, %v209
  %v330 = vpack.c.b16 %v212, %v210
  %v331 = vpack.c.b16 %v215, %v213
  %v332 = vpack.c.b16 %v216, %v214
  %v333 = vpack.c.b16 %v219, %v217
  %v334 = vpack.c.b16 %v220, %v218
  %v335 = vpack.c.b16 %v223, %v221
  %v336 = vpack.c.b16 %v224, %v222
  %v337 = vpack.c.b16 %v227, %v225
  %v338 = vpack.c.b16 %v228, %v226
  %v339 = vpack.c.b16 %v231, %v229
  %v340 = vpack.c.b16 %v232, %v230
  %v341 = vpack.c.b16 %v235, %v233
  %v342 = vpack.c.b16 %v236, %v234
  %v343 = vpack.c.b16 %v239, %v237
  %v344 = vpack.c.b16 %v240, %v238
  %v345 = vpack.c.b16 %v243, %v241
  %v346 = vpack.c.b16 %v244, %v242
  %v347 = vpack.c.b16 %v247, %v245
  %v348 = vpack.c.b16 %v248, %v246
  %v349 = vpack.c.b16 %v251, %v249
  %v350 = vpack.c.b16 %v252, %v250
  %v351 = vpack.c.b16 %v255, %v253
  %v352 = vpack.c.b16 %v256, %v254
  %v353 = vpack.c.b16 %v259, %v257
  %v354 = vpack.c.b16 %v260, %v258
  %v355 = vpack.c.b16 %v263, %v261
  %v356 = vpack.c.b16 %v264, %v262
  %v357 = vpack.c.b16 %v267, %v265
  %v358 = vpack.c.b16 %v268, %v266
  %v359 = vpack.c.b16 %v271, %v269
  %v360 = vpack.c.b16 %v272, %v270
  %v361 = vpack.c.b16 %v275, %v273
  %v362 = vpack.c.b16 %v276, %v274
  %v363 = vpack.c.b16 %v279, %v277
  %v364 = vpack.c.b16 %v280, %v278
  %v365 = vpack.c.b16 %v283, %v281
  %v366 = vpack.c.b16 %v284, %v282
  %v367 = vpack.c.b16 %v287, %v285
  %v368 = vpack.c.b16 %v288, %v286
  %v369 = vpack.c.b16 %v291, %v289
  %v370 = vpack.c.b16 %v292, %v290
  %v371 = vpack.c.b16 %v295, %v293
  %v372 = vpack.c.b16 %v296, %v294
  %v373 = vpack.c.b16 %v299, %v297
  %v374 = vpack.c.b16 %v300, %v298
  %v375 = vpack.c.b16 %v303, %v301
  %v376 = vpack.c.b16 %v304, %v302
  %v377 = vpack.c.b16 %v307, %v305
  %v378 = vpack.c.b16 %v308, %v306
  %v379 = vpack.c.b16 %v311, %v309
  %v380 = vpack.c.b16 %v312, %v310
  %v381 = vpack.c.b16 %v315, %v313
  %v382 = vpack.c.b16 %v316, %v314
  %v383 = vpack.c.b16 %v319, %v317
  %v384 = vpack.c.b16 %v320, %v318
  %449 = vmatpush.bf16.msra.mxu0 %v335
  %450 = vmatpush.bf16.msra.mxu0 %v333
  %451 = vmatpush.bf16.msra.mxu0 %v331
  %452 = vmatpush.bf16.msra.mxu0 %v329
  %453 = vmatpush.bf16.msra.mxu0 %v327
  %454 = vmatpush.bf16.msra.mxu0 %v325
  %455 = vmatpush.bf16.msra.mxu0 %v323
  %456 = vmatpush.bf16.msra.mxu0 %v321
  %457 = vmatmul.bf16.gmra.mxu0 %v113
  %v458 = vpop.f32.mrf.mxu0
  %v459 = vadd.f32 0.0, %v458
  %v460 = vpop.f32.mrf.mxu0
  %v461 = vadd.f32 0.0, %v460
  %462 = vmatmul.bf16.gmra.mxu0 %v117
  %v463 = vpop.f32.mrf.mxu0
  %v464 = vadd.f32 0.0, %v463
  %v465 = vpop.f32.mrf.mxu0
  %v466 = vadd.f32 0.0, %v465
  %467 = vdwg.mxu0
  %468 = vmatpush.bf16.msra.mxu0 %v351
  %469 = vmatpush.bf16.msra.mxu0 %v349
  %470 = vmatpush.bf16.msra.mxu0 %v347
  %471 = vmatpush.bf16.msra.mxu0 %v345
  %472 = vmatpush.bf16.msra.mxu0 %v343
  %473 = vmatpush.bf16.msra.mxu0 %v341
  %474 = vmatpush.bf16.msra.mxu0 %v339
  %475 = vmatpush.bf16.msra.mxu0 %v337
  %476 = vmatmul.bf16.gmra.mxu0 %v114
  %v477 = vpop.f32.mrf.mxu0
  %v478 = vadd.f32 %v459, %v477
  %v479 = vpop.f32.mrf.mxu0
  %v480 = vadd.f32 %v461, %v479
  %481 = vmatmul.bf16.gmra.mxu0 %v118
  %v482 = vpop.f32.mrf.mxu0
  %v483 = vadd.f32 %v464, %v482
  %v484 = vpop.f32.mrf.mxu0
  %v485 = vadd.f32 %v466, %v484
  %486 = vdwg.mxu0
  %487 = vmatpush.bf16.msra.mxu0 %v367
  %488 = vmatpush.bf16.msra.mxu0 %v365
  %489 = vmatpush.bf16.msra.mxu0 %v363
  %490 = vmatpush.bf16.msra.mxu0 %v361
  %491 = vmatpush.bf16.msra.mxu0 %v359
  %492 = vmatpush.bf16.msra.mxu0 %v357
  %493 = vmatpush.bf16.msra.mxu0 %v355
  %494 = vmatpush.bf16.msra.mxu0 %v353
  %495 = vmatmul.bf16.gmra.mxu0 %v115
  %v496 = vpop.f32.mrf.mxu0
  %v497 = vadd.f32 %v478, %v496
  %v498 = vpop.f32.mrf.mxu0
  %v499 = vadd.f32 %v480, %v498
  %500 = vmatmul.bf16.gmra.mxu0 %v119
  %v501 = vpop.f32.mrf.mxu0
  %v502 = vadd.f32 %v483, %v501
  %v503 = vpop.f32.mrf.mxu0
  %v504 = vadd.f32 %v485, %v503
  %505 = vdwg.mxu0
  %506 = vmatpush.bf16.msra.mxu0 %v383
  %507 = vmatpush.bf16.msra.mxu0 %v381
  %508 = vmatpush.bf16.msra.mxu0 %v379
  %509 = vmatpush.bf16.msra.mxu0 %v377
  %510 = vmatpush.bf16.msra.mxu0 %v375
  %511 = vmatpush.bf16.msra.mxu0 %v373
  %512 = vmatpush.bf16.msra.mxu0 %v371
  %513 = vmatpush.bf16.msra.mxu0 %v369
  %514 = vmatmul.bf16.gmra.mxu0 %v116
  %v515 = vpop.f32.mrf.mxu0
  %v516 = vadd.f32 %v497, %v515
  %v517 = vpop.f32.mrf.mxu0
  %v518 = vadd.f32 %v499, %v517
  %519 = vmatmul.bf16.gmra.mxu0 %v120
  %v520 = vpop.f32.mrf.mxu0
  %v521 = vadd.f32 %v502, %v520
  %v522 = vpop.f32.mrf.mxu0
  %v523 = vadd.f32 %v504, %v522
  %524 = vdwg.mxu0
  %525 = vmatpush.bf16.msra.mxu0 %v336
  %526 = vmatpush.bf16.msra.mxu0 %v334
  %527 = vmatpush.bf16.msra.mxu0 %v332
  %528 = vmatpush.bf16.msra.mxu0 %v330
  %529 = vmatpush.bf16.msra.mxu0 %v328
  %530 = vmatpush.bf16.msra.mxu0 %v326
  %531 = vmatpush.bf16.msra.mxu0 %v324
  %532 = vmatpush.bf16.msra.mxu0 %v322
  %533 = vmatmul.bf16.gmra.mxu0 %v113
  %v534 = vpop.f32.mrf.mxu0
  %v535 = vadd.f32 0.0, %v534
  %v536 = vpop.f32.mrf.mxu0
  %v537 = vadd.f32 0.0, %v536
  %538 = vmatmul.bf16.gmra.mxu0 %v117
  %v539 = vpop.f32.mrf.mxu0
  %v540 = vadd.f32 0.0, %v539
  %v541 = vpop.f32.mrf.mxu0
  %v542 = vadd.f32 0.0, %v541
  %543 = vdwg.mxu0
  %544 = vmatpush.bf16.msra.mxu0 %v352
  %545 = vmatpush.bf16.msra.mxu0 %v350
  %546 = vmatpush.bf16.msra.mxu0 %v348
  %547 = vmatpush.bf16.msra.mxu0 %v346
  %548 = vmatpush.bf16.msra.mxu0 %v344
  %549 = vmatpush.bf16.msra.mxu0 %v342
  %550 = vmatpush.bf16.msra.mxu0 %v340
  %551 = vmatpush.bf16.msra.mxu0 %v338
  %552 = vmatmul.bf16.gmra.mxu0 %v114
  %v553 = vpop.f32.mrf.mxu0
  %v554 = vadd.f32 %v535, %v553
  %v555 = vpop.f32.mrf.mxu0
  %v556 = vadd.f32 %v537, %v555
  %557 = vmatmul.bf16.gmra.mxu0 %v118
  %v558 = vpop.f32.mrf.mxu0
  %v559 = vadd.f32 %v540, %v558
  %v560 = vpop.f32.mrf.mxu0
  %v561 = vadd.f32 %v542, %v560
  %562 = vdwg.mxu0
  %563 = vmatpush.bf16.msra.mxu0 %v368
  %564 = vmatpush.bf16.msra.mxu0 %v366
  %565 = vmatpush.bf16.msra.mxu0 %v364
  %566 = vmatpush.bf16.msra.mxu0 %v362
  %567 = vmatpush.bf16.msra.mxu0 %v360
  %568 = vmatpush.bf16.msra.mxu0 %v358
  %569 = vmatpush.bf16.msra.mxu0 %v356
  %570 = vmatpush.bf16.msra.mxu0 %v354
  %571 = vmatmul.bf16.gmra.mxu0 %v115
  %v572 = vpop.f32.mrf.mxu0
  %v573 = vadd.f32 %v554, %v572
  %v574 = vpop.f32.mrf.mxu0
  %v575 = vadd.f32 %v556, %v574
  %576 = vmatmul.bf16.gmra.mxu0 %v119
  %v577 = vpop.f32.mrf.mxu0
  %v578 = vadd.f32 %v559, %v577
  %v579 = vpop.f32.mrf.mxu0
  %v580 = vadd.f32 %v561, %v579
  %581 = vdwg.mxu0
  %582 = vmatpush.bf16.msra.mxu0 %v384
  %583 = vmatpush.bf16.msra.mxu0 %v382
  %584 = vmatpush.bf16.msra.mxu0 %v380
  %585 = vmatpush.bf16.msra.mxu0 %v378
  %586 = vmatpush.bf16.msra.mxu0 %v376
  %587 = vmatpush.bf16.msra.mxu0 %v374
  %588 = vmatpush.bf16.msra.mxu0 %v372
  %589 = vmatpush.bf16.msra.mxu0 %v370
  %590 = vmatmul.bf16.gmra.mxu0 %v116
  %v591 = vpop.f32.mrf.mxu0
  %v592 = vadd.f32 %v573, %v591
  %v593 = vpop.f32.mrf.mxu0
  %v594 = vadd.f32 %v575, %v593
  %595 = vmatmul.bf16.gmra.mxu0 %v120
  %v596 = vpop.f32.mrf.mxu0
  %v597 = vadd.f32 %v578, %v596
  %v598 = vpop.f32.mrf.mxu0
  %v599 = vadd.f32 %v580, %v598
  %600 = vdwg.mxu0
  %601 = vst [vmem:[#allocation2] sm:$0xff] %v516
  %602 = vst [vmem:[#allocation2 + $0x8] sm:$0xff] %v592
  %603 = vst [vmem:[#allocation2 + $0x10] sm:$0xff] %v518
  %604 = vst [vmem:[#allocation2 + $0x18] sm:$0xff] %v594
  %605 = vst [vmem:[#allocation2 + $0x20] sm:$0xff] %v521
  %606 = vst [vmem:[#allocation2 + $0x28] sm:$0xff] %v597
  %607 = vst [vmem:[#allocation2 + $0x30] sm:$0xff] %v523
  %608 = vst [vmem:[#allocation2 + $0x38] sm:$0xff] %v599
  %v609 = vadd.f32 %v516, %v518
  %v610 = vadd.f32 %v609, %v521
  %v611 = vadd.f32 %v610, %v523
  %v612 = vrot.slane %v611, 4
  %v613 = vadd.f32 %v611, %v612
  %v614 = vrot.slane %v613, 2
  %v615 = vadd.f32 %v613, %v614
  %v616 = vrot.slane %v615, 1
  %v617 = vadd.f32 %v615, %v616
  %v618 = vadd.f32 %v592, %v594
  %v619 = vadd.f32 %v618, %v597
  %v620 = vadd.f32 %v619, %v599
  %v621 = vrot.slane %v620, 4
  %v622 = vadd.f32 %v620, %v621
  %v623 = vrot.slane %v622, 2
  %v624 = vadd.f32 %v622, %v623
  %v625 = vrot.slane %v624, 1
  %v626 = vadd.f32 %v624, %v625
  %v627 = vadd.f32 %v617, 0.0
  %v628 = vadd.f32 %v626, 0.0
  %v629 = vmul.f32 %v516, %v516
  %v630 = vmul.f32 %v592, %v592
  %v631 = vmul.f32 %v518, %v518
  %v632 = vmul.f32 %v594, %v594
  %v633 = vmul.f32 %v521, %v521
  %v634 = vmul.f32 %v597, %v597
  %v635 = vmul.f32 %v523, %v523
  %v636 = vmul.f32 %v599, %v599
  %v637 = vadd.f32 %v629, %v631
  %v638 = vadd.f32 %v637, %v633
  %v639 = vadd.f32 %v638, %v635
  %v640 = vrot.slane %v639, 4
  %v641 = vadd.f32 %v639, %v640
  %v642 = vrot.slane %v641, 2
  %v643 = vadd.f32 %v641, %v642
  %v644 = vrot.slane %v643, 1
  %v645 = vadd.f32 %v643, %v644
  %v646 = vadd.f32 %v630, %v632
  %v647 = vadd.f32 %v646, %v634
  %v648 = vadd.f32 %v647, %v636
  %v649 = vrot.slane %v648, 4
  %v650 = vadd.f32 %v648, %v649
  %v651 = vrot.slane %v650, 2
  %v652 = vadd.f32 %v650, %v651
  %v653 = vrot.slane %v652, 1
  %v654 = vadd.f32 %v652, %v653
  %v655 = vadd.f32 %v645, 0.0
  %v656 = vadd.f32 %v654, 0.0
  %v657 = vmul.f32 %v627, 0.03125
  %v658 = vmul.f32 %v628, 0.03125
  %v659 = vmul.f32 %v655, 0.03125
  %v660 = vmul.f32 %v656, 0.03125
  %v661 = vmul.f32 %v657, %v657
  %v662 = vmul.f32 %v658, %v658
  %v663 = vsub.f32 %v659, %v661
  %v664 = vsub.f32 %v660, %v662
  %v665 = vmax.f32 %v663, 0.0
  %v666 = vmax.f32 %v664, 0.0
  %v667 = vld [vmem:[%s2] sm:$0x3]
  %v668 = vadd.f32 %v665, 1e-05
  %v669 = vadd.f32 %v666, 1e-05
  %v670 = vrsqrt.pop %v668
  %v671 = vmul.f32 %v670, %v668
  %v672 = vmul.f32 %v671, %v670
  %v673 = vmul.f32 0.5, %v672
  %v674 = vsub.f32 1.5, %v673
  %v675 = vmul.f32 %v670, %v674
  %vm676 = vweird.f32 %v668
  %vm677 = vweird.f32 %v670
  %vm678 = vmor %vm676, %vm677
  %v679 = vsel %vm678, %v670, %v675
  %v680 = vrsqrt.pop %v669
  %v681 = vmul.f32 %v680, %v669
  %v682 = vmul.f32 %v681, %v680
  %v683 = vmul.f32 0.5, %v682
  %v684 = vsub.f32 1.5, %v683
  %v685 = vmul.f32 %v680, %v684
  %vm686 = vweird.f32 %v669
  %vm687 = vweird.f32 %v680
  %vm688 = vmor %vm686, %vm687
  %v689 = vsel %vm688, %v680, %v685
  %v692 = vrot.slane %v689, 7
  %vm693 = vcmask 1040384
  %v694 = vsel %vm693, %v679, %v692
  %v696 = vmul.f32 %v667, %v694
  %v697 = vld [vmem:[%s3] sm:$0x3]
  %v699 = vperm.slane %v696, 0
  %v700 = vperm.slane %v696, 1
  %v703 = vmul.f32 %v657, %v699
  %v704 = vmul.f32 %v658, %v700
  %v707 = vrot.slane %v704, 7
  %v708 = vsel %vm693, %v703, %v707
  %v710 = vsub.f32 %v697, %v708
  %v711 = vld [vmem:[#allocation2] sm:$0xff]
  %v712 = vld [vmem:[#allocation2 + $0x8] sm:$0xff]
  %v713 = vld [vmem:[#allocation2 + $0x10] sm:$0xff]
  %v714 = vld [vmem:[#allocation2 + $0x18] sm:$0xff]
  %v715 = vld [vmem:[#allocation2 + $0x20] sm:$0xff]
  %v716 = vld [vmem:[#allocation2 + $0x28] sm:$0xff]
  %v717 = vld [vmem:[#allocation2 + $0x30] sm:$0xff]
  %v718 = vld [vmem:[#allocation2 + $0x38] sm:$0xff]
  %v719 = vmul.f32 %v711, %v699
  %v720 = vmul.f32 %v712, %v700
  %v721 = vmul.f32 %v713, %v699
  %v722 = vmul.f32 %v714, %v700
  %v723 = vmul.f32 %v715, %v699
  %v724 = vmul.f32 %v716, %v700
  %v725 = vmul.f32 %v717, %v699
  %v726 = vmul.f32 %v718, %v700
  %v728 = vperm.slane %v710, 0
  %v729 = vperm.slane %v710, 1
  %v732 = vadd.f32 %v719, %v728
  %v733 = vadd.f32 %v720, %v729
  %v734 = vadd.f32 %v721, %v728
  %v735 = vadd.f32 %v722, %v729
  %v736 = vadd.f32 %v723, %v728
  %v737 = vadd.f32 %v724, %v729
  %v738 = vadd.f32 %v725, %v728
  %v739 = vadd.f32 %v726, %v729
  %v740 = vmax.f32 %v732, 0.0
  %v741 = vmax.f32 %v733, 0.0
  %v742 = vmax.f32 %v734, 0.0
  %v743 = vmax.f32 %v735, 0.0
  %v744 = vmax.f32 %v736, 0.0
  %v745 = vmax.f32 %v737, 0.0
  %v746 = vmax.f32 %v738, 0.0
  %v747 = vmax.f32 %v739, 0.0
  %v748 = vpack.c.bf16 %v741, %v740
  %v749 = vpack.c.bf16 %v743, %v742
  %v750 = vpack.c.bf16 %v745, %v744
  %v751 = vpack.c.bf16 %v747, %v746
  %752 = vst [vmem:[%s4] sm:$0xff] %v748
  %753 = vst [vmem:[%s4 + $0x8] sm:$0xff] %v749
  %754 = vst [vmem:[%s4 + $0x10] sm:$0xff] %v750
  %755 = vst [vmem:[%s4 + $0x18] sm:$0xff] %v751
  // Predicated region
  $region18: #{discriminator_forward.6} parent=0 // pred_check
    _
  $region19: #{discriminator_forward.6} parent=0 // pred_check_branch
    %757 = sbr.rel (0) target = $region21
  $region20: #{discriminator_forward.6} parent=0 // pred_region
    _
  $region21: #{discriminator_forward.6} parent=0 // pred_fallthru
    _
  // Predicated region
  $region22: #{discriminator_forward.6} parent=0 // pred_check
    _
  $region23: #{discriminator_forward.6} parent=0 // pred_check_branch
    %759 = sbr.rel (0) target = $region25
  $region24: #{discriminator_forward.6} parent=0 // pred_region
    _
  $region25: #{discriminator_forward.6} parent=0 // pred_fallthru
    _

// kernel: discriminator_forward.7
$region0: #{discriminator_forward.7}
  #allocation0 [shape = 'u32[]', space=smem, size = 0x4, offset = 0x4, fixed_abs, tag = 'smem constant byte address 0x4 - core index']
  #allocation1 [shape = 'u32[72,128]{1,0:T(1,128)}', space=vmem, size = 0x9000, scoped, tag = 'internal scratch']
  #allocation2 [shape = 'f32[1,1]{1,0:T(1,128)S(1)}', space=vmem, size = 0x200, scoped, tag = 'scoped memory for discriminator_forward.7']
  %s0 = inlined_call_operand.vmem [shape: bf16[16,4096], index: 0, kind: input, shape index: {}]
  %s1 = inlined_call_operand.vmem [shape: bf16[1,4096], index: 1, kind: input, shape index: {}]
  %s2 = inlined_call_operand.<no memory space> [shape: f32[1,1], index: 2, kind: input, shape index: {}]
  %s3 = inlined_call_operand.vmem [shape: f32[16,1], index: 3, kind: output, shape index: {}]
  %s4 = sld [smem:[#allocation0]]
  $region22: #{discriminator_forward.7} parent=0
    _
  %s6 = ssub.s32 1, %s4
  %s7 = scalar_select 0, %s6, %s4
  %v8 = vstv %s2
  %9 = vst [vmem:[#allocation2] sm:$0x1] %v8
  // Predicated region
  $region2: #{discriminator_forward.7} parent=0 // pred_check
    _
  $region3: #{discriminator_forward.7} parent=0 // pred_check_branch
    %11 = sbr.rel (0) target = $region5
  $region4: #{discriminator_forward.7} parent=0 // pred_region
    _
  $region5: #{discriminator_forward.7} parent=0 // pred_fallthru
    _
  // Predicated region
  $region6: #{discriminator_forward.7} parent=0 // pred_check
    _
  $region7: #{discriminator_forward.7} parent=0 // pred_check_branch
    %13 = sbr.rel (0) target = $region9
  $region8: #{discriminator_forward.7} parent=0 // pred_region
    _
  $region9: #{discriminator_forward.7} parent=0 // pred_fallthru
    _
  // Predicated region
  $region10: #{discriminator_forward.7} parent=0 // pred_check
    _
  $region11: #{discriminator_forward.7} parent=0 // pred_check_branch
    %15 = sbr.rel (0) target = $region13
  $region12: #{discriminator_forward.7} parent=0 // pred_region
    _
  $region13: #{discriminator_forward.7} parent=0 // pred_fallthru
    _
  %v16 = vld [vmem:[%s0] sm:$0xff]
  %v17 = vld [vmem:[%s0 + $0x8] sm:$0xff]
  %v18 = vld [vmem:[%s0 + $0x80] sm:$0xff]
  %v19 = vld [vmem:[%s0 + $0x88] sm:$0xff]
  %v20 = vunpack.c.l.bf16 %v16
  %v21 = vunpack.c.h.bf16 %v16
  %v22 = vunpack.c.l.bf16 %v17
  %v23 = vunpack.c.h.bf16 %v17
  %v24 = vunpack.c.l.bf16 %v18
  %v25 = vunpack.c.h.bf16 %v18
  %v26 = vunpack.c.l.bf16 %v19
  %v27 = vunpack.c.h.bf16 %v19
  %v28 = vld [vmem:[%s1] sm:$0xf]
  %v29 = vunpack.c.l.bf16 %v28
  %v31 = vperm.slane %v29, 0
  %v32 = vperm.slane %v29, 2
  %v33 = vperm.slane %v29, 4
  %v34 = vperm.slane %v29, 6
  %v39 = vperm.slane %v31, 0
  %v40 = vperm.slane %v32, 0
  %v41 = vperm.slane %v33, 0
  %v42 = vperm.slane %v34, 0
  %v43 = vmul.f32 %v20, %v39
  %v44 = vmul.f32 %v21, %v40
  %v45 = vmul.f32 %v22, %v41
  %v46 = vmul.f32 %v23, %v42
  %v47 = vmul.f32 %v24, %v39
  %v48 = vmul.f32 %v25, %v40
  %v49 = vmul.f32 %v26, %v41
  %v50 = vmul.f32 %v27, %v42
  %v51 = vadd.f32 %v43, %v44
  %v52 = vadd.f32 %v51, %v45
  %v53 = vadd.f32 %v52, %v46
  %54 = vadd.xlane.f32.xlu0 %v53
  %v55 = vpop.xlane.xlu0 %54
  %v56 = vadd.f32 %v47, %v48
  %v57 = vadd.f32 %v56, %v49
  %v58 = vadd.f32 %v57, %v50
  %59 = vadd.xlane.f32.xlu0 %v58
  %v60 = vpop.xlane.xlu0 %59
  %v61 = vadd.f32 %v55, 0.0
  %v62 = vadd.f32 %v60, 0.0
  %v63 = vld [vmem:[%s0 + $0x10] sm:$0xff]
  %v64 = vld [vmem:[%s0 + $0x18] sm:$0xff]
  %v65 = vld [vmem:[%s0 + $0x90] sm:$0xff]
  %v66 = vld [vmem:[%s0 + $0x98] sm:$0xff]
  %v67 = vunpack.c.l.bf16 %v63
  %v68 = vunpack.c.h.bf16 %v63
  %v69 = vunpack.c.l.bf16 %v64
  %v70 = vunpack.c.h.bf16 %v64
  %v71 = vunpack.c.l.bf16 %v65
  %v72 = vunpack.c.h.bf16 %v65
  %v73 = vunpack.c.l.bf16 %v66
  %v74 = vunpack.c.h.bf16 %v66
  %v75 = vld [vmem:[%s1 + $0x4] sm:$0xf]
  %v76 = vunpack.c.l.bf16 %v75
  %v78 = vperm.slane %v76, 0
  %v79 = vperm.slane %v76, 2
  %v80 = vperm.slane %v76, 4
  %v81 = vperm.slane %v76, 6
  %v86 = vperm.slane %v78, 0
  %v87 = vperm.slane %v79, 0
  %v88 = vperm.slane %v80, 0
  %v89 = vperm.slane %v81, 0
  %v90 = vmul.f32 %v67, %v86
  %v91 = vmul.f32 %v68, %v87
  %v92 = vmul.f32 %v69, %v88
  %v93 = vmul.f32 %v70, %v89
  %v94 = vmul.f32 %v71, %v86
  %v95 = vmul.f32 %v72, %v87
  %v96 = vmul.f32 %v73, %v88
  %v97 = vmul.f32 %v74, %v89
  %v98 = vadd.f32 %v90, %v91
  %v99 = vadd.f32 %v98, %v92
  %v100 = vadd.f32 %v99, %v93
  %101 = vadd.xlane.f32.xlu0 %v100
  %v102 = vpop.xlane.xlu0 %101
  %v103 = vadd.f32 %v94, %v95
  %v104 = vadd.f32 %v103, %v96
  %v105 = vadd.f32 %v104, %v97
  %106 = vadd.xlane.f32.xlu0 %v105
  %v107 = vpop.xlane.xlu0 %106
  %v108 = vadd.f32 %v61, %v102
  %v109 = vadd.f32 %v62, %v107
  %v110 = vld [vmem:[%s0 + $0x20] sm:$0xff]
  %v111 = vld [vmem:[%s0 + $0x28] sm:$0xff]
  %v112 = vld [vmem:[%s0 + $0xa0] sm:$0xff]
  %v113 = vld [vmem:[%s0 + $0xa8] sm:$0xff]
  %v114 = vunpack.c.l.bf16 %v110
  %v115 = vunpack.c.h.bf16 %v110
  %v116 = vunpack.c.l.bf16 %v111
  %v117 = vunpack.c.h.bf16 %v111
  %v118 = vunpack.c.l.bf16 %v112
  %v119 = vunpack.c.h.bf16 %v112
  %v120 = vunpack.c.l.bf16 %v113
  %v121 = vunpack.c.h.bf16 %v113
  %v122 = vld [vmem:[%s1 + $0x8] sm:$0xf]
  %v123 = vunpack.c.l.bf16 %v122
  %v125 = vperm.slane %v123, 0
  %v126 = vperm.slane %v123, 2
  %v127 = vperm.slane %v123, 4
  %v128 = vperm.slane %v123, 6
  %v133 = vperm.slane %v125, 0
  %v134 = vperm.slane %v126, 0
  %v135 = vperm.slane %v127, 0
  %v136 = vperm.slane %v128, 0
  %v137 = vmul.f32 %v114, %v133
  %v138 = vmul.f32 %v115, %v134
  %v139 = vmul.f32 %v116, %v135
  %v140 = vmul.f32 %v117, %v136
  %v141 = vmul.f32 %v118, %v133
  %v142 = vmul.f32 %v119, %v134
  %v143 = vmul.f32 %v120, %v135
  %v144 = vmul.f32 %v121, %v136
  %v145 = vadd.f32 %v137, %v138
  %v146 = vadd.f32 %v145, %v139
  %v147 = vadd.f32 %v146, %v140
  %148 = vadd.xlane.f32.xlu0 %v147
  %v149 = vpop.xlane.xlu0 %148
  %v150 = vadd.f32 %v141, %v142
  %v151 = vadd.f32 %v150, %v143
  %v152 = vadd.f32 %v151, %v144
  %153 = vadd.xlane.f32.xlu0 %v152
  %v154 = vpop.xlane.xlu0 %153
  %v155 = vadd.f32 %v108, %v149
  %v156 = vadd.f32 %v109, %v154
  %v157 = vld [vmem:[%s0 + $0x30] sm:$0xff]
  %v158 = vld [vmem:[%s0 + $0x38] sm:$0xff]
  %v159 = vld [vmem:[%s0 + $0xb0] sm:$0xff]
  %v160 = vld [vmem:[%s0 + $0xb8] sm:$0xff]
  %v161 = vunpack.c.l.bf16 %v157
  %v162 = vunpack.c.h.bf16 %v157
  %v163 = vunpack.c.l.bf16 %v158
  %v164 = vunpack.c.h.bf16 %v158
  %v165 = vunpack.c.l.bf16 %v159
  %v166 = vunpack.c.h.bf16 %v159
  %v167 = vunpack.c.l.bf16 %v160
  %v168 = vunpack.c.h.bf16 %v160
  %v169 = vld [vmem:[%s1 + $0xc] sm:$0xf]
  %v170 = vunpack.c.l.bf16 %v169
  %v172 = vperm.slane %v170, 0
  %v173 = vperm.slane %v170, 2
  %v174 = vperm.slane %v170, 4
  %v175 = vperm.slane %v170, 6
  %v180 = vperm.slane %v172, 0
  %v181 = vperm.slane %v173, 0
  %v182 = vperm.slane %v174, 0
  %v183 = vperm.slane %v175, 0
  %v184 = vmul.f32 %v161, %v180
  %v185 = vmul.f32 %v162, %v181
  %v186 = vmul.f32 %v163, %v182
  %v187 = vmul.f32 %v164, %v183
  %v188 = vmul.f32 %v165, %v180
  %v189 = vmul.f32 %v166, %v181
  %v190 = vmul.f32 %v167, %v182
  %v191 = vmul.f32 %v168, %v183
  %v192 = vadd.f32 %v184, %v185
  %v193 = vadd.f32 %v192, %v186
  %v194 = vadd.f32 %v193, %v187
  %195 = vadd.xlane.f32.xlu0 %v194
  %v196 = vpop.xlane.xlu0 %195
  %v197 = vadd.f32 %v188, %v189
  %v198 = vadd.f32 %v197, %v190
  %v199 = vadd.f32 %v198, %v191
  %200 = vadd.xlane.f32.xlu0 %v199
  %v201 = vpop.xlane.xlu0 %200
  %v202 = vadd.f32 %v155, %v196
  %v203 = vadd.f32 %v156, %v201
  %v204 = vld [vmem:[%s0 + $0x40] sm:$0xff]
  %v205 = vld [vmem:[%s0 + $0x48] sm:$0xff]
  %v206 = vld [vmem:[%s0 + $0xc0] sm:$0xff]
  %v207 = vld [vmem:[%s0 + $0xc8] sm:$0xff]
  %v208 = vunpack.c.l.bf16 %v204
  %v209 = vunpack.c.h.bf16 %v204
  %v210 = vunpack.c.l.bf16 %v205
  %v211 = vunpack.c.h.bf16 %v205
  %v212 = vunpack.c.l.bf16 %v206
  %v213 = vunpack.c.h.bf16 %v206
  %v214 = vunpack.c.l.bf16 %v207
  %v215 = vunpack.c.h.bf16 %v207
  %v216 = vld [vmem:[%s1 + $0x10] sm:$0xf]
  %v217 = vunpack.c.l.bf16 %v216
  %v219 = vperm.slane %v217, 0
  %v220 = vperm.slane %v217, 2
  %v221 = vperm.slane %v217, 4
  %v222 = vperm.slane %v217, 6
  %v227 = vperm.slane %v219, 0
  %v228 = vperm.slane %v220, 0
  %v229 = vperm.slane %v221, 0
  %v230 = vperm.slane %v222, 0
  %v231 = vmul.f32 %v208, %v227
  %v232 = vmul.f32 %v209, %v228
  %v233 = vmul.f32 %v210, %v229
  %v234 = vmul.f32 %v211, %v230
  %v235 = vmul.f32 %v212, %v227
  %v236 = vmul.f32 %v213, %v228
  %v237 = vmul.f32 %v214, %v229
  %v238 = vmul.f32 %v215, %v230
  %v239 = vadd.f32 %v231, %v232
  %v240 = vadd.f32 %v239, %v233
  %v241 = vadd.f32 %v240, %v234
  %242 = vadd.xlane.f32.xlu0 %v241
  %v243 = vpop.xlane.xlu0 %242
  %v244 = vadd.f32 %v235, %v236
  %v245 = vadd.f32 %v244, %v237
  %v246 = vadd.f32 %v245, %v238
  %247 = vadd.xlane.f32.xlu0 %v246
  %v248 = vpop.xlane.xlu0 %247
  %v249 = vadd.f32 %v202, %v243
  %v250 = vadd.f32 %v203, %v248
  %v251 = vld [vmem:[%s0 + $0x50] sm:$0xff]
  %v252 = vld [vmem:[%s0 + $0x58] sm:$0xff]
  %v253 = vld [vmem:[%s0 + $0xd0] sm:$0xff]
  %v254 = vld [vmem:[%s0 + $0xd8] sm:$0xff]
  %v255 = vunpack.c.l.bf16 %v251
  %v256 = vunpack.c.h.bf16 %v251
  %v257 = vunpack.c.l.bf16 %v252
  %v258 = vunpack.c.h.bf16 %v252
  %v259 = vunpack.c.l.bf16 %v253
  %v260 = vunpack.c.h.bf16 %v253
  %v261 = vunpack.c.l.bf16 %v254
  %v262 = vunpack.c.h.bf16 %v254
  %v263 = vld [vmem:[%s1 + $0x14] sm:$0xf]
  %v264 = vunpack.c.l.bf16 %v263
  %v266 = vperm.slane %v264, 0
  %v267 = vperm.slane %v264, 2
  %v268 = vperm.slane %v264, 4
  %v269 = vperm.slane %v264, 6
  %v274 = vperm.slane %v266, 0
  %v275 = vperm.slane %v267, 0
  %v276 = vperm.slane %v268, 0
  %v277 = vperm.slane %v269, 0
  %v278 = vmul.f32 %v255, %v274
  %v279 = vmul.f32 %v256, %v275
  %v280 = vmul.f32 %v257, %v276
  %v281 = vmul.f32 %v258, %v277
  %v282 = vmul.f32 %v259, %v274
  %v283 = vmul.f32 %v260, %v275
  %v284 = vmul.f32 %v261, %v276
  %v285 = vmul.f32 %v262, %v277
  %v286 = vadd.f32 %v278, %v279
  %v287 = vadd.f32 %v286, %v280
  %v288 = vadd.f32 %v287, %v281
  %289 = vadd.xlane.f32.xlu0 %v288
  %v290 = vpop.xlane.xlu0 %289
  %v291 = vadd.f32 %v282, %v283
  %v292 = vadd.f32 %v291, %v284
  %v293 = vadd.f32 %v292, %v285
  %294 = vadd.xlane.f32.xlu0 %v293
  %v295 = vpop.xlane.xlu0 %294
  %v296 = vadd.f32 %v249, %v290
  %v297 = vadd.f32 %v250, %v295
  %v298 = vld [vmem:[%s0 + $0x60] sm:$0xff]
  %v299 = vld [vmem:[%s0 + $0x68] sm:$0xff]
  %v300 = vld [vmem:[%s0 + $0xe0] sm:$0xff]
  %v301 = vld [vmem:[%s0 + $0xe8] sm:$0xff]
  %v302 = vunpack.c.l.bf16 %v298
  %v303 = vunpack.c.h.bf16 %v298
  %v304 = vunpack.c.l.bf16 %v299
  %v305 = vunpack.c.h.bf16 %v299
  %v306 = vunpack.c.l.bf16 %v300
  %v307 = vunpack.c.h.bf16 %v300
  %v308 = vunpack.c.l.bf16 %v301
  %v309 = vunpack.c.h.bf16 %v301
  %v310 = vld [vmem:[%s1 + $0x18] sm:$0xf]
  %v311 = vunpack.c.l.bf16 %v310
  %v313 = vperm.slane %v311, 0
  %v314 = vperm.slane %v311, 2
  %v315 = vperm.slane %v311, 4
  %v316 = vperm.slane %v311, 6
  %v321 = vperm.slane %v313, 0
  %v322 = vperm.slane %v314, 0
  %v323 = vperm.slane %v315, 0
  %v324 = vperm.slane %v316, 0
  %v325 = vmul.f32 %v302, %v321
  %v326 = vmul.f32 %v303, %v322
  %v327 = vmul.f32 %v304, %v323
  %v328 = vmul.f32 %v305, %v324
  %v329 = vmul.f32 %v306, %v321
  %v330 = vmul.f32 %v307, %v322
  %v331 = vmul.f32 %v308, %v323
  %v332 = vmul.f32 %v309, %v324
  %v333 = vadd.f32 %v325, %v326
  %v334 = vadd.f32 %v333, %v327
  %v335 = vadd.f32 %v334, %v328
  %336 = vadd.xlane.f32.xlu0 %v335
  %v337 = vpop.xlane.xlu0 %336
  %v338 = vadd.f32 %v329, %v330
  %v339 = vadd.f32 %v338, %v331
  %v340 = vadd.f32 %v339, %v332
  %341 = vadd.xlane.f32.xlu0 %v340
  %v342 = vpop.xlane.xlu0 %341
  %v343 = vadd.f32 %v296, %v337
  %v344 = vadd.f32 %v297, %v342
  %v345 = vld [vmem:[%s0 + $0x70] sm:$0xff]
  %v346 = vld [vmem:[%s0 + $0x78] sm:$0xff]
  %v347 = vld [vmem:[%s0 + $0xf0] sm:$0xff]
  %v348 = vld [vmem:[%s0 + $0xf8] sm:$0xff]
  %v349 = vunpack.c.l.bf16 %v345
  %v350 = vunpack.c.h.bf16 %v345
  %v351 = vunpack.c.l.bf16 %v346
  %v352 = vunpack.c.h.bf16 %v346
  %v353 = vunpack.c.l.bf16 %v347
  %v354 = vunpack.c.h.bf16 %v347
  %v355 = vunpack.c.l.bf16 %v348
  %v356 = vunpack.c.h.bf16 %v348
  %v357 = vld [vmem:[%s1 + $0x1c] sm:$0xf]
  %v358 = vunpack.c.l.bf16 %v357
  %v360 = vperm.slane %v358, 0
  %v361 = vperm.slane %v358, 2
  %v362 = vperm.slane %v358, 4
  %v363 = vperm.slane %v358, 6
  %v368 = vperm.slane %v360, 0
  %v369 = vperm.slane %v361, 0
  %v370 = vperm.slane %v362, 0
  %v371 = vperm.slane %v363, 0
  %v372 = vmul.f32 %v349, %v368
  %v373 = vmul.f32 %v350, %v369
  %v374 = vmul.f32 %v351, %v370
  %v375 = vmul.f32 %v352, %v371
  %v376 = vmul.f32 %v353, %v368
  %v377 = vmul.f32 %v354, %v369
  %v378 = vmul.f32 %v355, %v370
  %v379 = vmul.f32 %v356, %v371
  %v380 = vadd.f32 %v372, %v373
  %v381 = vadd.f32 %v380, %v374
  %v382 = vadd.f32 %v381, %v375
  %383 = vadd.xlane.f32.xlu0 %v382
  %v384 = vpop.xlane.xlu0 %383
  %v385 = vadd.f32 %v376, %v377
  %v386 = vadd.f32 %v385, %v378
  %v387 = vadd.f32 %v386, %v379
  %388 = vadd.xlane.f32.xlu0 %v387
  %v389 = vpop.xlane.xlu0 %388
  %v390 = vadd.f32 %v343, %v384
  %v391 = vadd.f32 %v344, %v389
  %v392 = vld [vmem:[#allocation2] sm:$0x1]
  %v394 = vperm.slane %v392, 0
  %v396 = vadd.f32 %v390, %v394
  %v397 = vadd.f32 %v391, %v394
  %v398 = vxor.u32 %v396, 2147483648
  %v399 = vxor.u32 %v397, 2147483648
  %v400 = vmul.f32 %v398, 1.442695
  %v401 = vpow.pop %v400
  %v402 = vmul.f32 %v399, 1.442695
  %v403 = vpow.pop %v402
  %v404 = vadd.f32 %v401, 1.0
  %v405 = vadd.f32 %v403, 1.0
  %v406 = vrcp.pop %v404
  %v407 = vmul.f32 %v404, %v406
  %v408 = vsub.f32 1.0, %v407
  %v409 = vmul.f32 %v406, %v408
  %v410 = vadd.f32 %v406, %v409
  %vm411 = vweird.f32 %v404
  %vm412 = vweird.f32 %v406
  %vm413 = vmor %vm411, %vm412
  %v414 = vsel %vm413, %v406, %v410
  %v415 = vand.u32 2147483647, %v404
  %vm416 = vcmp.eq.f32.partialorder %v415, 8.507059e+37
  %v417 = vand.u32 %v404, 2147483648
  %v418 = vor.u32 1.1754944e-38, %v417
  %v419 = vsel %vm416, %v418, %v414
  %v420 = vmul.f32 1.0, %v419
  %v421 = vrcp.pop %v405
  %v422 = vmul.f32 %v405, %v421
  %v423 = vsub.f32 1.0, %v422
  %v424 = vmul.f32 %v421, %v423
  %v425 = vadd.f32 %v421, %v424
  %vm426 = vweird.f32 %v405
  %vm427 = vweird.f32 %v421
  %vm428 = vmor %vm426, %vm427
  %v429 = vsel %vm428, %v421, %v425
  %v430 = vand.u32 2147483647, %v405
  %vm431 = vcmp.eq.f32.partialorder %v430, 8.507059e+37
  %v432 = vand.u32 %v405, 2147483648
  %v433 = vor.u32 1.1754944e-38, %v432
  %v434 = vsel %vm431, %v433, %v429
  %v435 = vmul.f32 1.0, %v434
  %vm436 = vcmask 7168
  %437 = vst.msk [vmem:[%s3] sm:$0xff] %vm436, %v420
  %438 = vst.msk [vmem:[%s3 + $0x8] sm:$0xff] %vm436, %v435
  // Predicated region
  $region14: #{discriminator_forward.7} parent=0 // pred_check
    _
  $region15: #{discriminator_forward.7} parent=0 // pred_check_branch
    %440 = sbr.rel (0) target = $region17
  $region16: #{discriminator_forward.7} parent=0 // pred_region
    _
  $region17: #{discriminator_forward.7} parent=0 // pred_fallthru
    _
  // Predicated region
  $region18: #{discriminator_forward.7} parent=0 // pred_check
    _
  $region19: #{discriminator_forward.7} parent=0 // pred_check_branch
    %442 = sbr.rel (0) target = $region21
  $region20: #{discriminator_forward.7} parent=0 // pred_region
    _
  $region21: #{discriminator_forward.7} parent=0 // pred_fallthru
    _

</llo_original>
